<compile_context>
chip_gen: v7x
topology: tpu7x:2x2x1
jax: 0.10.0
libtpu: 0.0.40
codegen_flags: <defaults>
</compile_context>

<pallas_src>
import functools

import jax
import jax.numpy as jnp
from jax.experimental import pallas as pl
from jax.experimental.pallas import tpu as pltpu


# ------------------------------- Model config -------------------------------- #

class Cfg:
    res = 16          # resize target (224 in real CLIP)
    patch = 8         # patch size (32 in ViT-B/32)
    width = 64        # transformer width (768)
    heads = 2         # heads (12)
    head_dim = 32
    layers = 2        # layers (12)
    embed_dim = 32    # output embedding dim (512)


# ------------------------------ Fused Pallas kernel -------------------------- #

def _clip_encoder_kernel(
    # inputs
    x_ref, mean_ref, istd_ref, convw_ref, cls_ref, pos_ref,
    lnpre_g_ref, lnpre_b_ref,
    ln1_g_ref, ln1_b_ref, qkv_w_ref, qkv_b_ref, out_w_ref, out_b_ref,
    ln2_g_ref, ln2_b_ref, fc_w_ref, fc_b_ref, mproj_w_ref, mproj_b_ref,
    lnpost_g_ref, lnpost_b_ref, proj_ref,
    # output
    o_ref,
    # scratch
    h_ref,
    *, layers, heads, head_dim, width, n_tok,
):
    f32 = jnp.float32
    bf16 = jnp.bfloat16
    W = width
    S = n_tok

    def ln(x, g, b):
        # LayerNorm statistics kept in f32 (important for v5e and accuracy).
        mu = jnp.mean(x, axis=-1, keepdims=True)
        xc = x - mu
        var = jnp.mean(xc * xc, axis=-1, keepdims=True)
        return xc * jax.lax.rsqrt(var + 1e-5) * g + b

    def mm(a, w_bf16):
        # bf16 MXU operands, f32 accumulation.
        return jnp.dot(a.astype(bf16), w_bf16, preferred_element_type=f32)

    # ---- fused CLIP preprocess ((x+1)/2, normalize) + patch embedding ----
    xp = (x_ref[...] + 1.0) * 0.5
    xp = (xp - mean_ref[...]) * istd_ref[...]
    tok = mm(xp, convw_ref[...])                              # (g*g, W) f32

    # ---- assemble [cls ; patch tokens] + positional embedding in VMEM ----
    pos = pos_ref[...]                                        # (S, W)
    h_ref[0:1, :] = pos[0:1, :] + cls_ref[...]
    h_ref[1:, :] = pos[1:, :] + tok
    h = ln(h_ref[...], lnpre_g_ref[...], lnpre_b_ref[...])    # ln_pre

    scale = 1.0 / float(head_dim) ** 0.5

    for l in range(layers):
        # -------- attention block (pre-LN) --------
        a = ln(h, ln1_g_ref[l], ln1_b_ref[l])
        qkv = mm(a, qkv_w_ref[l]) + qkv_b_ref[l]              # (S, 3W) f32
        ow = out_w_ref[l]                                     # (W, W) bf16

        acc = jnp.zeros((S, W), f32)
        for hd in range(heads):
            lo = hd * head_dim
            hi = lo + head_dim
            q = qkv[:, lo:hi]
            k = qkv[:, W + lo:W + hi]
            v = qkv[:, 2 * W + lo:2 * W + hi]
            s = jnp.einsum("qd,kd->qk", q.astype(bf16), k.astype(bf16),
                           preferred_element_type=f32) * scale
            m = jnp.max(s, axis=-1, keepdims=True)
            p = jnp.exp(s - m)                                # f32 softmax
            lsum = jnp.sum(p, axis=-1, keepdims=True)
            o = jnp.einsum("qk,kd->qd", p.astype(bf16), v.astype(bf16),
                           preferred_element_type=f32)
            o = o * pl.reciprocal(lsum, approx=True)          # EUP divide
            # fold this head straight into its slice of the output projection
            acc = acc + jnp.dot(o.astype(bf16), ow[lo:hi, :],
                                preferred_element_type=f32)
        h = h + acc + out_b_ref[l]                            # fused residual add

        # -------- MLP block (pre-LN, QuickGELU) --------
        m2 = ln(h, ln2_g_ref[l], ln2_b_ref[l])
        u = mm(m2, fc_w_ref[l]) + fc_b_ref[l]                 # (S, 4W) f32
        u = u * jax.nn.sigmoid(1.702 * u)                     # QuickGELU (f32)
        d = mm(u, mproj_w_ref[l]) + mproj_b_ref[l]            # (S, W)
        h = h + d                                             # fused residual add

    # ---- ln_post on class token, project; store lane-dense (8,128) block ----
    cls_tok = ln(h[0:1, :], lnpost_g_ref[...], lnpost_b_ref[...])   # (1, W)
    out = mm(cls_tok, proj_ref[...])                                # (1, 128)
    o_ref[...] = jnp.broadcast_to(out, o_ref.shape)                 # dense store


# --------------------------------- Wrapper ----------------------------------- #

def _full_spec(arr):
    """Whole-array block, same block for every grid step (stays VMEM-resident)."""
    nd = arr.ndim

    def idx(b):
        return (0,) * nd

    return pl.BlockSpec(arr.shape, idx)


def clip_image_encode(x_nchw, params, cfg):
    B = x_nchw.shape[0]
    P = cfg.patch
    g = cfg.res // P
    S = g * g + 1
    W = cfg.width
    CPP = 3 * P * P

    # --- preprocess resize (XLA glue) ---
    # TODO(synk): jax.image.resize bicubic differs slightly from PIL/torch BICUBIC weights.
    x = jnp.transpose(x_nchw, (0, 2, 3, 1)).astype(jnp.float32)
    x = jax.image.resize(x, (B, cfg.res, cfg.res, 3), method="bicubic", antialias=False)

    # --- patch extraction (glue): (B, g*g, C*P*P) with (C, pi, pj) feature order ---
    x = x.reshape(B, g, P, g, P, 3)
    x = jnp.transpose(x, (0, 1, 3, 5, 2, 4)).reshape(B, g * g, CPP)

    operands = (
        x, params["mean_vec"], params["istd_vec"], params["conv_w"],
        params["class_emb"], params["pos_emb"],
        params["ln_pre_g"], params["ln_pre_b"],
        params["ln1_g"], params["ln1_b"], params["qkv_w"], params["qkv_b"],
        params["out_w"], params["out_b"], params["ln2_g"], params["ln2_b"],
        params["fc_w"], params["fc_b"], params["mproj_w"], params["mproj_b"],
        params["ln_post_g"], params["ln_post_b"], params["proj_pad"],
    )

    in_specs = [pl.BlockSpec((None, g * g, CPP), lambda b: (b, 0, 0))]
    in_specs += [_full_spec(a) for a in operands[1:]]

    kernel = functools.partial(
        _clip_encoder_kernel,
        layers=cfg.layers, heads=cfg.heads, head_dim=cfg.head_dim,
        width=W, n_tok=S)

    out_pad = pl.pallas_call(
        kernel,
        grid=(B,),
        in_specs=in_specs,
        out_specs=pl.BlockSpec((None, 8, 128), lambda b: (b, 0, 0)),
        out_shape=jax.ShapeDtypeStruct((B, 8, 128), jnp.float32),
        scratch_shapes=[pltpu.VMEM((S, W), jnp.float32)],
        compiler_params=pltpu.CompilerParams(
            dimension_semantics=("parallel",),      # batch across TCs on v7x
            vmem_limit_bytes=32 * 1024 * 1024,
        ),
    )(*operands)

    return out_pad[:, 0, :cfg.embed_dim]            # (B, embed_dim) f32


# ------------------------------- Param init ----------------------------------- #

def init_params(key, cfg):
    C, P, W, L = 3, cfg.patch, cfg.width, cfg.layers
    CPP = C * P * P
    S = (cfg.res // P) ** 2 + 1
    E = cfg.embed_dim
    ks = jax.random.split(key, 12)
    nrm = lambda k, shape: 0.02 * jax.random.normal(k, shape, jnp.float32)

    mean = jnp.array([0.48145466, 0.4578275, 0.40821073], jnp.float32)
    std = jnp.array([0.26862954, 0.26130258, 0.27577711], jnp.float32)

    proj = nrm(ks[6], (W, E))
    proj_pad = jnp.zeros((W, 128), jnp.float32).at[:, :E].set(proj)

    return dict(
        # conv1 weight laid out as (C*P*P, width) matmul matrix (c-major, matches Conv2d)
        mean_vec=jnp.repeat(mean, P * P).reshape(1, CPP),
        istd_vec=jnp.repeat(1.0 / std, P * P).reshape(1, CPP),
        conv_w=nrm(ks[0], (CPP, W)).astype(jnp.bfloat16),
        class_emb=nrm(ks[1], (1, W)),
        pos_emb=nrm(ks[2], (S, W)),
        ln_pre_g=jnp.ones((1, W), jnp.float32), ln_pre_b=jnp.zeros((1, W), jnp.float32),
        ln_post_g=jnp.ones((1, W), jnp.float32), ln_post_b=jnp.zeros((1, W), jnp.float32),
        proj_pad=proj_pad.astype(jnp.bfloat16),     # padded to 128 lanes (zeros)
        # per-layer weights stacked along a leading L axis; MXU weights in bf16
        ln1_g=jnp.ones((L, 1, W), jnp.float32), ln1_b=jnp.zeros((L, 1, W), jnp.float32),
        qkv_w=nrm(ks[3], (L, W, 3 * W)).astype(jnp.bfloat16),
        qkv_b=nrm(ks[7], (L, 1, 3 * W)),
        out_w=nrm(ks[4], (L, W, W)).astype(jnp.bfloat16),
        out_b=nrm(ks[8], (L, 1, W)),
        ln2_g=jnp.ones((L, 1, W), jnp.float32), ln2_b=jnp.zeros((L, 1, W), jnp.float32),
        fc_w=nrm(ks[5], (L, W, 4 * W)).astype(jnp.bfloat16),
        fc_b=nrm(ks[9], (L, 1, 4 * W)),
        mproj_w=nrm(ks[10], (L, 4 * W, W)).astype(jnp.bfloat16),
        mproj_b=nrm(ks[11], (L, 1, W)),
    )


# ---------------------------------- Main --------------------------------------- #

if __name__ == "__main__":
    cfg = Cfg()
    key = jax.random.PRNGKey(0)
    k_img, k_par = jax.random.split(key)

    # input in [-1, 1], NCHW like the PyTorch module
    x = jax.random.uniform(k_img, (2, 3, 32, 32), jnp.float32, minval=-1.0, maxval=1.0)
    params = init_params(k_par, cfg)

    fwd = jax.jit(functools.partial(clip_image_encode, cfg=cfg))
    out = fwd(x, params)
    out = jax.block_until_ready(out)

    assert out.shape == (2, cfg.embed_dim)
    assert out.dtype == jnp.float32
    assert bool(jnp.all(jnp.isfinite(out)))
    print("KERNEL_OK")
</pallas_src>

<mosaic_0001>
module attributes {stable_mosaic.version = 11 : i64} {
  func.func @_clip_encoder_kernel(%arg0: i32, %arg1: memref<1x4x192xf32, #tpu.memory_space<vmem>>, %arg2: memref<1x192xf32, #tpu.memory_space<vmem>>, %arg3: memref<1x192xf32, #tpu.memory_space<vmem>>, %arg4: memref<192x64xbf16, #tpu.memory_space<vmem>>, %arg5: memref<1x64xf32, #tpu.memory_space<vmem>>, %arg6: memref<5x64xf32, #tpu.memory_space<vmem>>, %arg7: memref<1x64xf32, #tpu.memory_space<vmem>>, %arg8: memref<1x64xf32, #tpu.memory_space<vmem>>, %arg9: memref<2x1x64xf32, #tpu.memory_space<vmem>>, %arg10: memref<2x1x64xf32, #tpu.memory_space<vmem>>, %arg11: memref<2x64x192xbf16, #tpu.memory_space<vmem>>, %arg12: memref<2x1x192xf32, #tpu.memory_space<vmem>>, %arg13: memref<2x64x64xbf16, #tpu.memory_space<vmem>>, %arg14: memref<2x1x64xf32, #tpu.memory_space<vmem>>, %arg15: memref<2x1x64xf32, #tpu.memory_space<vmem>>, %arg16: memref<2x1x64xf32, #tpu.memory_space<vmem>>, %arg17: memref<2x64x256xbf16, #tpu.memory_space<vmem>>, %arg18: memref<2x1x256xf32, #tpu.memory_space<vmem>>, %arg19: memref<2x256x64xbf16, #tpu.memory_space<vmem>>, %arg20: memref<2x1x64xf32, #tpu.memory_space<vmem>>, %arg21: memref<1x64xf32, #tpu.memory_space<vmem>>, %arg22: memref<1x64xf32, #tpu.memory_space<vmem>>, %arg23: memref<64x128xbf16, #tpu.memory_space<vmem>>, %arg24: memref<1x8x128xf32, #tpu.memory_space<vmem>>, %arg25: memref<5x64xf32, #tpu.memory_space<vmem>>) attributes {dimension_semantics = [#tpu.dimension_semantics<parallel>], iteration_bounds = array<i64: 2>, scalar_prefetch = 0 : i64, scratch_operands = 1 : i64, tpu.core_type = #tpu.core_type<tc>, window_params = [{transform_indices = @transform_0, window_bounds = array<i64: 1, 4, 192>}, {pipeline_mode = #tpu.pipeline_mode<synchronous>, transform_indices = @transform_1, window_bounds = array<i64: 1, 192>}, {pipeline_mode = #tpu.pipeline_mode<synchronous>, transform_indices = @transform_2, window_bounds = array<i64: 1, 192>}, {pipeline_mode = #tpu.pipeline_mode<synchronous>, transform_indices = @transform_3, window_bounds = array<i64: 192, 64>}, {pipeline_mode = #tpu.pipeline_mode<synchronous>, transform_indices = @transform_4, window_bounds = array<i64: 1, 64>}, {pipeline_mode = #tpu.pipeline_mode<synchronous>, transform_indices = @transform_5, window_bounds = array<i64: 5, 64>}, {pipeline_mode = #tpu.pipeline_mode<synchronous>, transform_indices = @transform_6, window_bounds = array<i64: 1, 64>}, {pipeline_mode = #tpu.pipeline_mode<synchronous>, transform_indices = @transform_7, window_bounds = array<i64: 1, 64>}, {pipeline_mode = #tpu.pipeline_mode<synchronous>, transform_indices = @transform_8, window_bounds = array<i64: 2, 1, 64>}, {pipeline_mode = #tpu.pipeline_mode<synchronous>, transform_indices = @transform_9, window_bounds = array<i64: 2, 1, 64>}, {pipeline_mode = #tpu.pipeline_mode<synchronous>, transform_indices = @transform_10, window_bounds = array<i64: 2, 64, 192>}, {pipeline_mode = #tpu.pipeline_mode<synchronous>, transform_indices = @transform_11, window_bounds = array<i64: 2, 1, 192>}, {pipeline_mode = #tpu.pipeline_mode<synchronous>, transform_indices = @transform_12, window_bounds = array<i64: 2, 64, 64>}, {pipeline_mode = #tpu.pipeline_mode<synchronous>, transform_indices = @transform_13, window_bounds = array<i64: 2, 1, 64>}, {pipeline_mode = #tpu.pipeline_mode<synchronous>, transform_indices = @transform_14, window_bounds = array<i64: 2, 1, 64>}, {pipeline_mode = #tpu.pipeline_mode<synchronous>, transform_indices = @transform_15, window_bounds = array<i64: 2, 1, 64>}, {pipeline_mode = #tpu.pipeline_mode<synchronous>, transform_indices = @transform_16, window_bounds = array<i64: 2, 64, 256>}, {pipeline_mode = #tpu.pipeline_mode<synchronous>, transform_indices = @transform_17, window_bounds = array<i64: 2, 1, 256>}, {pipeline_mode = #tpu.pipeline_mode<synchronous>, transform_indices = @transform_18, window_bounds = array<i64: 2, 256, 64>}, {pipeline_mode = #tpu.pipeline_mode<synchronous>, transform_indices = @transform_19, window_bounds = array<i64: 2, 1, 64>}, {pipeline_mode = #tpu.pipeline_mode<synchronous>, transform_indices = @transform_20, window_bounds = array<i64: 1, 64>}, {pipeline_mode = #tpu.pipeline_mode<synchronous>, transform_indices = @transform_21, window_bounds = array<i64: 1, 64>}, {pipeline_mode = #tpu.pipeline_mode<synchronous>, transform_indices = @transform_22, window_bounds = array<i64: 64, 128>}, {transform_indices = @transform_23, window_bounds = array<i64: 1, 8, 128>}]} {
    %c0 = arith.constant 0 : index
    %c0_0 = arith.constant 0 : index
    %c0_1 = arith.constant 0 : index
    %0 = vector.load %arg1[%c0, %c0_0, %c0_1] : memref<1x4x192xf32, #tpu.memory_space<vmem>>, vector<1x4x192xf32>
    %1 = vector.shape_cast %0 : vector<1x4x192xf32> to vector<4x192xf32>
    %cst = arith.constant 1.000000e+00 : f32
    %2 = vector.broadcast %cst : f32 to vector<4x192xf32>
    %3 = arith.addf %1, %2 : vector<4x192xf32>
    %cst_2 = arith.constant 5.000000e-01 : f32
    %4 = vector.broadcast %cst_2 : f32 to vector<4x192xf32>
    %5 = arith.mulf %3, %4 : vector<4x192xf32>
    %c0_3 = arith.constant 0 : index
    %c0_4 = arith.constant 0 : index
    %6 = vector.load %arg2[%c0_3, %c0_4] : memref<1x192xf32, #tpu.memory_space<vmem>>, vector<1x192xf32>
    %7 = vector.broadcast %6 : vector<1x192xf32> to vector<4x192xf32>
    %8 = arith.subf %5, %7 : vector<4x192xf32>
    %c0_5 = arith.constant 0 : index
    %c0_6 = arith.constant 0 : index
    %9 = vector.load %arg3[%c0_5, %c0_6] : memref<1x192xf32, #tpu.memory_space<vmem>>, vector<1x192xf32>
    %10 = vector.broadcast %9 : vector<1x192xf32> to vector<4x192xf32>
    %11 = arith.mulf %8, %10 : vector<4x192xf32>
    %c0_7 = arith.constant 0 : index
    %c0_8 = arith.constant 0 : index
    %12 = vector.load %arg4[%c0_7, %c0_8] : memref<192x64xbf16, #tpu.memory_space<vmem>>, vector<192x64xbf16>
    %13 = arith.truncf %11 : vector<4x192xf32> to vector<4x192xbf16>
    %cst_9 = arith.constant dense<0.000000e+00> : vector<4x64xf32>
    %14 = tpu.matmul %13, %12, %cst_9 {dimension_numbers = #tpu.dot_dimension_numbers<[1], [0], [0], [1], [0, 0, 1, 1], [], []>} : vector<4x192xbf16>, vector<192x64xbf16>, vector<4x64xf32> -> vector<4x64xf32>
    %c0_10 = arith.constant 0 : index
    %c0_11 = arith.constant 0 : index
    %15 = vector.load %arg6[%c0_10, %c0_11] : memref<5x64xf32, #tpu.memory_space<vmem>>, vector<5x64xf32>
    %16 = vector.extract_strided_slice %15 {offsets = [0, 0], sizes = [1, 64], strides = [1, 1]} : vector<5x64xf32> to vector<1x64xf32>
    %c0_12 = arith.constant 0 : index
    %c0_13 = arith.constant 0 : index
    %17 = vector.load %arg5[%c0_12, %c0_13] : memref<1x64xf32, #tpu.memory_space<vmem>>, vector<1x64xf32>
    %18 = arith.addf %16, %17 : vector<1x64xf32>
    %c0_14 = arith.constant 0 : index
    %c0_15 = arith.constant 0 : index
    %19 = vector.load %arg25[%c0_14, %c0_15] : memref<5x64xf32, #tpu.memory_space<vmem>>, vector<1x64xf32>
    tpu.vector_store %arg25[%c0_14, %c0_15], %18 {strides = array<i32>} : memref<5x64xf32, #tpu.memory_space<vmem>>, vector<1x64xf32>,
    %20 = vector.extract_strided_slice %15 {offsets = [1, 0], sizes = [4, 64], strides = [1, 1]} : vector<5x64xf32> to vector<4x64xf32>
    %21 = arith.addf %20, %14 : vector<4x64xf32>
    %c1 = arith.constant 1 : index
    %c0_16 = arith.constant 0 : index
    %22 = vector.load %arg25[%c1, %c0_16] : memref<5x64xf32, #tpu.memory_space<vmem>>, vector<4x64xf32>
    tpu.vector_store %arg25[%c1, %c0_16], %21 {strides = array<i32>} : memref<5x64xf32, #tpu.memory_space<vmem>>, vector<4x64xf32>,
    %c0_17 = arith.constant 0 : index
    %c0_18 = arith.constant 0 : index
    %23 = vector.load %arg25[%c0_17, %c0_18] : memref<5x64xf32, #tpu.memory_space<vmem>>, vector<5x64xf32>
    %c0_19 = arith.constant 0 : index
    %c0_20 = arith.constant 0 : index
    %24 = vector.load %arg7[%c0_19, %c0_20] : memref<1x64xf32, #tpu.memory_space<vmem>>, vector<1x64xf32>
    %c0_21 = arith.constant 0 : index
    %c0_22 = arith.constant 0 : index
    %25 = vector.load %arg8[%c0_21, %c0_22] : memref<1x64xf32, #tpu.memory_space<vmem>>, vector<1x64xf32>
    %cst_23 = arith.constant dense<0.000000e+00> : vector<5xf32>
    %26 = vector.multi_reduction <add>, %23, %cst_23 [1] : vector<5x64xf32> to vector<5xf32>
    %27 = vector.shape_cast %26 : vector<5xf32> to vector<5x1xf32>
    %cst_24 = arith.constant 6.400000e+01 : f32
    %28 = vector.broadcast %cst_24 : f32 to vector<5x1xf32>
    %29 = arith.divf %27, %28 : vector<5x1xf32>
    %30 = vector.broadcast %29 : vector<5x1xf32> to vector<5x64xf32>
    %31 = arith.subf %23, %30 : vector<5x64xf32>
    %32 = arith.mulf %31, %31 : vector<5x64xf32>
    %cst_25 = arith.constant dense<0.000000e+00> : vector<5xf32>
    %33 = vector.multi_reduction <add>, %32, %cst_25 [1] : vector<5x64xf32> to vector<5xf32>
    %34 = vector.shape_cast %33 : vector<5xf32> to vector<5x1xf32>
    %cst_26 = arith.constant 6.400000e+01 : f32
    %35 = vector.broadcast %cst_26 : f32 to vector<5x1xf32>
    %36 = arith.divf %34, %35 : vector<5x1xf32>
    %cst_27 = arith.constant 9.99999974E-6 : f32
    %37 = vector.broadcast %cst_27 : f32 to vector<5x1xf32>
    %38 = arith.addf %36, %37 : vector<5x1xf32>
    %39 = math.rsqrt %38 : vector<5x1xf32>
    %40 = vector.broadcast %39 : vector<5x1xf32> to vector<5x64xf32>
    %41 = arith.mulf %31, %40 : vector<5x64xf32>
    %42 = vector.broadcast %24 : vector<1x64xf32> to vector<5x64xf32>
    %43 = arith.mulf %41, %42 : vector<5x64xf32>
    %44 = vector.broadcast %25 : vector<1x64xf32> to vector<5x64xf32>
    %45 = arith.addf %43, %44 : vector<5x64xf32>
    %c0_28 = arith.constant 0 : index
    %c0_29 = arith.constant 0 : index
    %c0_30 = arith.constant 0 : index
    %46 = vector.load %arg9[%c0_28, %c0_29, %c0_30] : memref<2x1x64xf32, #tpu.memory_space<vmem>>, vector<1x1x64xf32>
    %47 = vector.shape_cast %46 : vector<1x1x64xf32> to vector<1x64xf32>
    %c0_31 = arith.constant 0 : index
    %c0_32 = arith.constant 0 : index
    %c0_33 = arith.constant 0 : index
    %48 = vector.load %arg10[%c0_31, %c0_32, %c0_33] : memref<2x1x64xf32, #tpu.memory_space<vmem>>, vector<1x1x64xf32>
    %49 = vector.shape_cast %48 : vector<1x1x64xf32> to vector<1x64xf32>
    %cst_34 = arith.constant dense<0.000000e+00> : vector<5xf32>
    %50 = vector.multi_reduction <add>, %45, %cst_34 [1] : vector<5x64xf32> to vector<5xf32>
    %51 = vector.shape_cast %50 : vector<5xf32> to vector<5x1xf32>
    %cst_35 = arith.constant 6.400000e+01 : f32
    %52 = vector.broadcast %cst_35 : f32 to vector<5x1xf32>
    %53 = arith.divf %51, %52 : vector<5x1xf32>
    %54 = vector.broadcast %53 : vector<5x1xf32> to vector<5x64xf32>
    %55 = arith.subf %45, %54 : vector<5x64xf32>
    %56 = arith.mulf %55, %55 : vector<5x64xf32>
    %cst_36 = arith.constant dense<0.000000e+00> : vector<5xf32>
    %57 = vector.multi_reduction <add>, %56, %cst_36 [1] : vector<5x64xf32> to vector<5xf32>
    %58 = vector.shape_cast %57 : vector<5xf32> to vector<5x1xf32>
    %cst_37 = arith.constant 6.400000e+01 : f32
    %59 = vector.broadcast %cst_37 : f32 to vector<5x1xf32>
    %60 = arith.divf %58, %59 : vector<5x1xf32>
    %cst_38 = arith.constant 9.99999974E-6 : f32
    %61 = vector.broadcast %cst_38 : f32 to vector<5x1xf32>
    %62 = arith.addf %60, %61 : vector<5x1xf32>
    %63 = math.rsqrt %62 : vector<5x1xf32>
    %64 = vector.broadcast %63 : vector<5x1xf32> to vector<5x64xf32>
    %65 = arith.mulf %55, %64 : vector<5x64xf32>
    %66 = vector.broadcast %47 : vector<1x64xf32> to vector<5x64xf32>
    %67 = arith.mulf %65, %66 : vector<5x64xf32>
    %68 = vector.broadcast %49 : vector<1x64xf32> to vector<5x64xf32>
    %69 = arith.addf %67, %68 : vector<5x64xf32>
    %c0_39 = arith.constant 0 : index
    %c0_40 = arith.constant 0 : index
    %c0_41 = arith.constant 0 : index
    %70 = vector.load %arg11[%c0_39, %c0_40, %c0_41] : memref<2x64x192xbf16, #tpu.memory_space<vmem>>, vector<1x64x192xbf16>
    %71 = vector.shape_cast %70 : vector<1x64x192xbf16> to vector<64x192xbf16>
    %72 = arith.truncf %69 : vector<5x64xf32> to vector<5x64xbf16>
    %cst_42 = arith.constant dense<0.000000e+00> : vector<5x192xf32>
    %73 = tpu.matmul %72, %71, %cst_42 {dimension_numbers = #tpu.dot_dimension_numbers<[1], [0], [0], [1], [0, 0, 1, 1], [], []>} : vector<5x64xbf16>, vector<64x192xbf16>, vector<5x192xf32> -> vector<5x192xf32>
    %c0_43 = arith.constant 0 : index
    %c0_44 = arith.constant 0 : index
    %c0_45 = arith.constant 0 : index
    %74 = vector.load %arg12[%c0_43, %c0_44, %c0_45] : memref<2x1x192xf32, #tpu.memory_space<vmem>>, vector<1x1x192xf32>
    %75 = vector.shape_cast %74 : vector<1x1x192xf32> to vector<1x192xf32>
    %76 = vector.broadcast %75 : vector<1x192xf32> to vector<5x192xf32>
    %77 = arith.addf %73, %76 : vector<5x192xf32>
    %c0_46 = arith.constant 0 : index
    %c0_47 = arith.constant 0 : index
    %c0_48 = arith.constant 0 : index
    %78 = vector.load %arg13[%c0_46, %c0_47, %c0_48] : memref<2x64x64xbf16, #tpu.memory_space<vmem>>, vector<1x64x64xbf16>
    %79 = vector.shape_cast %78 : vector<1x64x64xbf16> to vector<64x64xbf16>
    %cst_49 = arith.constant 0.000000e+00 : f32
    %80 = vector.broadcast %cst_49 : f32 to vector<5x64xf32>
    %81 = vector.extract_strided_slice %77 {offsets = [0, 0], sizes = [5, 32], strides = [1, 1]} : vector<5x192xf32> to vector<5x32xf32>
    %82 = vector.extract_strided_slice %77 {offsets = [0, 64], sizes = [5, 32], strides = [1, 1]} : vector<5x192xf32> to vector<5x32xf32>
    %83 = vector.extract_strided_slice %77 {offsets = [0, 128], sizes = [5, 32], strides = [1, 1]} : vector<5x192xf32> to vector<5x32xf32>
    %84 = arith.truncf %81 : vector<5x32xf32> to vector<5x32xbf16>
    %85 = arith.truncf %82 : vector<5x32xf32> to vector<5x32xbf16>
    "tpu.trace_start"() <{level = 10 : i32, message = "qd,kd->qk"}> : () -> ()
    %cst_50 = arith.constant dense<0.000000e+00> : vector<5x5xf32>
    %86 = tpu.matmul %84, %85, %cst_50 {dimension_numbers = #tpu.dot_dimension_numbers<[1], [1], [0], [0], [0, 0, 1, 0], [], []>} : vector<5x32xbf16>, vector<5x32xbf16>, vector<5x5xf32> -> vector<5x5xf32>
    "tpu.trace_stop"() : () -> ()
    %cst_51 = arith.constant 0.176776692 : f32
    %87 = vector.broadcast %cst_51 : f32 to vector<5x5xf32>
    %88 = arith.mulf %86, %87 : vector<5x5xf32>
    %cst_52 = arith.constant dense<0xFF800000> : vector<5xf32>
    %89 = vector.multi_reduction <maximumf>, %88, %cst_52 [1] : vector<5x5xf32> to vector<5xf32>
    %90 = vector.shape_cast %89 : vector<5xf32> to vector<5x1xf32>
    %91 = vector.broadcast %90 : vector<5x1xf32> to vector<5x5xf32>
    %92 = arith.subf %88, %91 : vector<5x5xf32>
    %93 = math.exp %92 : vector<5x5xf32>
    %cst_53 = arith.constant dense<0.000000e+00> : vector<5xf32>
    %94 = vector.multi_reduction <add>, %93, %cst_53 [1] : vector<5x5xf32> to vector<5xf32>
    %95 = vector.shape_cast %94 : vector<5xf32> to vector<5x1xf32>
    %96 = arith.truncf %93 : vector<5x5xf32> to vector<5x5xbf16>
    %97 = arith.truncf %83 : vector<5x32xf32> to vector<5x32xbf16>
    "tpu.trace_start"() <{level = 10 : i32, message = "qk,kd->qd"}> : () -> ()
    %cst_54 = arith.constant dense<0.000000e+00> : vector<5x32xf32>
    %98 = tpu.matmul %96, %97, %cst_54 {dimension_numbers = #tpu.dot_dimension_numbers<[1], [0], [0], [1], [0, 0, 1, 1], [], []>} : vector<5x5xbf16>, vector<5x32xbf16>, vector<5x32xf32> -> vector<5x32xf32>
    "tpu.trace_stop"() : () -> ()
    %99 = tpu.reciprocal %95 {approx = true} : vector<5x1xf32> -> vector<5x1xf32>
    %100 = vector.broadcast %99 : vector<5x1xf32> to vector<5x32xf32>
    %101 = arith.mulf %98, %100 : vector<5x32xf32>
    %102 = arith.truncf %101 : vector<5x32xf32> to vector<5x32xbf16>
    %103 = vector.extract_strided_slice %79 {offsets = [0, 0], sizes = [32, 64], strides = [1, 1]} : vector<64x64xbf16> to vector<32x64xbf16>
    %cst_55 = arith.constant dense<0.000000e+00> : vector<5x64xf32>
    %104 = tpu.matmul %102, %103, %cst_55 {dimension_numbers = #tpu.dot_dimension_numbers<[1], [0], [0], [1], [0, 0, 1, 1], [], []>} : vector<5x32xbf16>, vector<32x64xbf16>, vector<5x64xf32> -> vector<5x64xf32>
    %105 = arith.addf %80, %104 : vector<5x64xf32>
    %106 = vector.extract_strided_slice %77 {offsets = [0, 32], sizes = [5, 32], strides = [1, 1]} : vector<5x192xf32> to vector<5x32xf32>
    %107 = vector.extract_strided_slice %77 {offsets = [0, 96], sizes = [5, 32], strides = [1, 1]} : vector<5x192xf32> to vector<5x32xf32>
    %108 = vector.extract_strided_slice %77 {offsets = [0, 160], sizes = [5, 32], strides = [1, 1]} : vector<5x192xf32> to vector<5x32xf32>
    %109 = arith.truncf %106 : vector<5x32xf32> to vector<5x32xbf16>
    %110 = arith.truncf %107 : vector<5x32xf32> to vector<5x32xbf16>
    "tpu.trace_start"() <{level = 10 : i32, message = "qd,kd->qk"}> : () -> ()
    %cst_56 = arith.constant dense<0.000000e+00> : vector<5x5xf32>
    %111 = tpu.matmul %109, %110, %cst_56 {dimension_numbers = #tpu.dot_dimension_numbers<[1], [1], [0], [0], [0, 0, 1, 0], [], []>} : vector<5x32xbf16>, vector<5x32xbf16>, vector<5x5xf32> -> vector<5x5xf32>
    "tpu.trace_stop"() : () -> ()
    %cst_57 = arith.constant 0.176776692 : f32
    %112 = vector.broadcast %cst_57 : f32 to vector<5x5xf32>
    %113 = arith.mulf %111, %112 : vector<5x5xf32>
    %cst_58 = arith.constant dense<0xFF800000> : vector<5xf32>
    %114 = vector.multi_reduction <maximumf>, %113, %cst_58 [1] : vector<5x5xf32> to vector<5xf32>
    %115 = vector.shape_cast %114 : vector<5xf32> to vector<5x1xf32>
    %116 = vector.broadcast %115 : vector<5x1xf32> to vector<5x5xf32>
    %117 = arith.subf %113, %116 : vector<5x5xf32>
    %118 = math.exp %117 : vector<5x5xf32>
    %cst_59 = arith.constant dense<0.000000e+00> : vector<5xf32>
    %119 = vector.multi_reduction <add>, %118, %cst_59 [1] : vector<5x5xf32> to vector<5xf32>
    %120 = vector.shape_cast %119 : vector<5xf32> to vector<5x1xf32>
    %121 = arith.truncf %118 : vector<5x5xf32> to vector<5x5xbf16>
    %122 = arith.truncf %108 : vector<5x32xf32> to vector<5x32xbf16>
    "tpu.trace_start"() <{level = 10 : i32, message = "qk,kd->qd"}> : () -> ()
    %cst_60 = arith.constant dense<0.000000e+00> : vector<5x32xf32>
    %123 = tpu.matmul %121, %122, %cst_60 {dimension_numbers = #tpu.dot_dimension_numbers<[1], [0], [0], [1], [0, 0, 1, 1], [], []>} : vector<5x5xbf16>, vector<5x32xbf16>, vector<5x32xf32> -> vector<5x32xf32>
    "tpu.trace_stop"() : () -> ()
    %124 = tpu.reciprocal %120 {approx = true} : vector<5x1xf32> -> vector<5x1xf32>
    %125 = vector.broadcast %124 : vector<5x1xf32> to vector<5x32xf32>
    %126 = arith.mulf %123, %125 : vector<5x32xf32>
    %127 = arith.truncf %126 : vector<5x32xf32> to vector<5x32xbf16>
    %128 = vector.extract_strided_slice %79 {offsets = [32, 0], sizes = [32, 64], strides = [1, 1]} : vector<64x64xbf16> to vector<32x64xbf16>
    %cst_61 = arith.constant dense<0.000000e+00> : vector<5x64xf32>
    %129 = tpu.matmul %127, %128, %cst_61 {dimension_numbers = #tpu.dot_dimension_numbers<[1], [0], [0], [1], [0, 0, 1, 1], [], []>} : vector<5x32xbf16>, vector<32x64xbf16>, vector<5x64xf32> -> vector<5x64xf32>
    %130 = arith.addf %105, %129 : vector<5x64xf32>
    %131 = arith.addf %45, %130 : vector<5x64xf32>
    %c0_62 = arith.constant 0 : index
    %c0_63 = arith.constant 0 : index
    %c0_64 = arith.constant 0 : index
    %132 = vector.load %arg14[%c0_62, %c0_63, %c0_64] : memref<2x1x64xf32, #tpu.memory_space<vmem>>, vector<1x1x64xf32>
    %133 = vector.shape_cast %132 : vector<1x1x64xf32> to vector<1x64xf32>
    %134 = vector.broadcast %133 : vector<1x64xf32> to vector<5x64xf32>
    %135 = arith.addf %131, %134 : vector<5x64xf32>
    %c0_65 = arith.constant 0 : index
    %c0_66 = arith.constant 0 : index
    %c0_67 = arith.constant 0 : index
    %136 = vector.load %arg15[%c0_65, %c0_66, %c0_67] : memref<2x1x64xf32, #tpu.memory_space<vmem>>, vector<1x1x64xf32>
    %137 = vector.shape_cast %136 : vector<1x1x64xf32> to vector<1x64xf32>
    %c0_68 = arith.constant 0 : index
    %c0_69 = arith.constant 0 : index
    %c0_70 = arith.constant 0 : index
    %138 = vector.load %arg16[%c0_68, %c0_69, %c0_70] : memref<2x1x64xf32, #tpu.memory_space<vmem>>, vector<1x1x64xf32>
    %139 = vector.shape_cast %138 : vector<1x1x64xf32> to vector<1x64xf32>
    %cst_71 = arith.constant dense<0.000000e+00> : vector<5xf32>
    %140 = vector.multi_reduction <add>, %135, %cst_71 [1] : vector<5x64xf32> to vector<5xf32>
    %141 = vector.shape_cast %140 : vector<5xf32> to vector<5x1xf32>
    %cst_72 = arith.constant 6.400000e+01 : f32
    %142 = vector.broadcast %cst_72 : f32 to vector<5x1xf32>
    %143 = arith.divf %141, %142 : vector<5x1xf32>
    %144 = vector.broadcast %143 : vector<5x1xf32> to vector<5x64xf32>
    %145 = arith.subf %135, %144 : vector<5x64xf32>
    %146 = arith.mulf %145, %145 : vector<5x64xf32>
    %cst_73 = arith.constant dense<0.000000e+00> : vector<5xf32>
    %147 = vector.multi_reduction <add>, %146, %cst_73 [1] : vector<5x64xf32> to vector<5xf32>
    %148 = vector.shape_cast %147 : vector<5xf32> to vector<5x1xf32>
    %cst_74 = arith.constant 6.400000e+01 : f32
    %149 = vector.broadcast %cst_74 : f32 to vector<5x1xf32>
    %150 = arith.divf %148, %149 : vector<5x1xf32>
    %cst_75 = arith.constant 9.99999974E-6 : f32
    %151 = vector.broadcast %cst_75 : f32 to vector<5x1xf32>
    %152 = arith.addf %150, %151 : vector<5x1xf32>
    %153 = math.rsqrt %152 : vector<5x1xf32>
    %154 = vector.broadcast %153 : vector<5x1xf32> to vector<5x64xf32>
    %155 = arith.mulf %145, %154 : vector<5x64xf32>
    %156 = vector.broadcast %137 : vector<1x64xf32> to vector<5x64xf32>
    %157 = arith.mulf %155, %156 : vector<5x64xf32>
    %158 = vector.broadcast %139 : vector<1x64xf32> to vector<5x64xf32>
    %159 = arith.addf %157, %158 : vector<5x64xf32>
    %c0_76 = arith.constant 0 : index
    %c0_77 = arith.constant 0 : index
    %c0_78 = arith.constant 0 : index
    %160 = vector.load %arg17[%c0_76, %c0_77, %c0_78] : memref<2x64x256xbf16, #tpu.memory_space<vmem>>, vector<1x64x256xbf16>
    %161 = vector.shape_cast %160 : vector<1x64x256xbf16> to vector<64x256xbf16>
    %162 = arith.truncf %159 : vector<5x64xf32> to vector<5x64xbf16>
    %cst_79 = arith.constant dense<0.000000e+00> : vector<5x256xf32>
    %163 = tpu.matmul %162, %161, %cst_79 {dimension_numbers = #tpu.dot_dimension_numbers<[1], [0], [0], [1], [0, 0, 1, 1], [], []>} : vector<5x64xbf16>, vector<64x256xbf16>, vector<5x256xf32> -> vector<5x256xf32>
    %c0_80 = arith.constant 0 : index
    %c0_81 = arith.constant 0 : index
    %c0_82 = arith.constant 0 : index
    %164 = vector.load %arg18[%c0_80, %c0_81, %c0_82] : memref<2x1x256xf32, #tpu.memory_space<vmem>>, vector<1x1x256xf32>
    %165 = vector.shape_cast %164 : vector<1x1x256xf32> to vector<1x256xf32>
    %166 = vector.broadcast %165 : vector<1x256xf32> to vector<5x256xf32>
    %167 = arith.addf %163, %166 : vector<5x256xf32>
    %cst_83 = arith.constant 1.702000e+00 : f32
    %168 = vector.broadcast %cst_83 : f32 to vector<5x256xf32>
    %169 = arith.mulf %168, %167 : vector<5x256xf32>
    %170 = arith.negf %169 : vector<5x256xf32>
    %171 = math.exp %170 : vector<5x256xf32>
    %cst_84 = arith.constant 1.000000e+00 : f32
    %172 = vector.broadcast %cst_84 : f32 to vector<5x256xf32>
    %173 = arith.addf %172, %171 : vector<5x256xf32>
    %174 = arith.divf %172, %173 : vector<5x256xf32>
    %175 = arith.mulf %167, %174 : vector<5x256xf32>
    %c0_85 = arith.constant 0 : index
    %c0_86 = arith.constant 0 : index
    %c0_87 = arith.constant 0 : index
    %176 = vector.load %arg19[%c0_85, %c0_86, %c0_87] : memref<2x256x64xbf16, #tpu.memory_space<vmem>>, vector<1x256x64xbf16>
    %177 = vector.shape_cast %176 : vector<1x256x64xbf16> to vector<256x64xbf16>
    %178 = arith.truncf %175 : vector<5x256xf32> to vector<5x256xbf16>
    %cst_88 = arith.constant dense<0.000000e+00> : vector<5x64xf32>
    %179 = tpu.matmul %178, %177, %cst_88 {dimension_numbers = #tpu.dot_dimension_numbers<[1], [0], [0], [1], [0, 0, 1, 1], [], []>} : vector<5x256xbf16>, vector<256x64xbf16>, vector<5x64xf32> -> vector<5x64xf32>
    %c0_89 = arith.constant 0 : index
    %c0_90 = arith.constant 0 : index
    %c0_91 = arith.constant 0 : index
    %180 = vector.load %arg20[%c0_89, %c0_90, %c0_91] : memref<2x1x64xf32, #tpu.memory_space<vmem>>, vector<1x1x64xf32>
    %181 = vector.shape_cast %180 : vector<1x1x64xf32> to vector<1x64xf32>
    %182 = vector.broadcast %181 : vector<1x64xf32> to vector<5x64xf32>
    %183 = arith.addf %179, %182 : vector<5x64xf32>
    %184 = arith.addf %135, %183 : vector<5x64xf32>
    %c1_92 = arith.constant 1 : index
    %c0_93 = arith.constant 0 : index
    %c0_94 = arith.constant 0 : index
    %185 = vector.load %arg9[%c1_92, %c0_93, %c0_94] : memref<2x1x64xf32, #tpu.memory_space<vmem>>, vector<1x1x64xf32>
    %186 = vector.shape_cast %185 : vector<1x1x64xf32> to vector<1x64xf32>
    %c1_95 = arith.constant 1 : index
    %c0_96 = arith.constant 0 : index
    %c0_97 = arith.constant 0 : index
    %187 = vector.load %arg10[%c1_95, %c0_96, %c0_97] : memref<2x1x64xf32, #tpu.memory_space<vmem>>, vector<1x1x64xf32>
    %188 = vector.shape_cast %187 : vector<1x1x64xf32> to vector<1x64xf32>
    %cst_98 = arith.constant dense<0.000000e+00> : vector<5xf32>
    %189 = vector.multi_reduction <add>, %184, %cst_98 [1] : vector<5x64xf32> to vector<5xf32>
    %190 = vector.shape_cast %189 : vector<5xf32> to vector<5x1xf32>
    %cst_99 = arith.constant 6.400000e+01 : f32
    %191 = vector.broadcast %cst_99 : f32 to vector<5x1xf32>
    %192 = arith.divf %190, %191 : vector<5x1xf32>
    %193 = vector.broadcast %192 : vector<5x1xf32> to vector<5x64xf32>
    %194 = arith.subf %184, %193 : vector<5x64xf32>
    %195 = arith.mulf %194, %194 : vector<5x64xf32>
    %cst_100 = arith.constant dense<0.000000e+00> : vector<5xf32>
    %196 = vector.multi_reduction <add>, %195, %cst_100 [1] : vector<5x64xf32> to vector<5xf32>
    %197 = vector.shape_cast %196 : vector<5xf32> to vector<5x1xf32>
    %cst_101 = arith.constant 6.400000e+01 : f32
    %198 = vector.broadcast %cst_101 : f32 to vector<5x1xf32>
    %199 = arith.divf %197, %198 : vector<5x1xf32>
    %cst_102 = arith.constant 9.99999974E-6 : f32
    %200 = vector.broadcast %cst_102 : f32 to vector<5x1xf32>
    %201 = arith.addf %199, %200 : vector<5x1xf32>
    %202 = math.rsqrt %201 : vector<5x1xf32>
    %203 = vector.broadcast %202 : vector<5x1xf32> to vector<5x64xf32>
    %204 = arith.mulf %194, %203 : vector<5x64xf32>
    %205 = vector.broadcast %186 : vector<1x64xf32> to vector<5x64xf32>
    %206 = arith.mulf %204, %205 : vector<5x64xf32>
    %207 = vector.broadcast %188 : vector<1x64xf32> to vector<5x64xf32>
    %208 = arith.addf %206, %207 : vector<5x64xf32>
    %c1_103 = arith.constant 1 : index
    %c0_104 = arith.constant 0 : index
    %c0_105 = arith.constant 0 : index
    %209 = vector.load %arg11[%c1_103, %c0_104, %c0_105] : memref<2x64x192xbf16, #tpu.memory_space<vmem>>, vector<1x64x192xbf16>
    %210 = vector.shape_cast %209 : vector<1x64x192xbf16> to vector<64x192xbf16>
    %211 = arith.truncf %208 : vector<5x64xf32> to vector<5x64xbf16>
    %cst_106 = arith.constant dense<0.000000e+00> : vector<5x192xf32>
    %212 = tpu.matmul %211, %210, %cst_106 {dimension_numbers = #tpu.dot_dimension_numbers<[1], [0], [0], [1], [0, 0, 1, 1], [], []>} : vector<5x64xbf16>, vector<64x192xbf16>, vector<5x192xf32> -> vector<5x192xf32>
    %c1_107 = arith.constant 1 : index
    %c0_108 = arith.constant 0 : index
    %c0_109 = arith.constant 0 : index
    %213 = vector.load %arg12[%c1_107, %c0_108, %c0_109] : memref<2x1x192xf32, #tpu.memory_space<vmem>>, vector<1x1x192xf32>
    %214 = vector.shape_cast %213 : vector<1x1x192xf32> to vector<1x192xf32>
    %215 = vector.broadcast %214 : vector<1x192xf32> to vector<5x192xf32>
    %216 = arith.addf %212, %215 : vector<5x192xf32>
    %c1_110 = arith.constant 1 : index
    %c0_111 = arith.constant 0 : index
    %c0_112 = arith.constant 0 : index
    %217 = vector.load %arg13[%c1_110, %c0_111, %c0_112] : memref<2x64x64xbf16, #tpu.memory_space<vmem>>, vector<1x64x64xbf16>
    %218 = vector.shape_cast %217 : vector<1x64x64xbf16> to vector<64x64xbf16>
    %cst_113 = arith.constant 0.000000e+00 : f32
    %219 = vector.broadcast %cst_113 : f32 to vector<5x64xf32>
    %220 = vector.extract_strided_slice %216 {offsets = [0, 0], sizes = [5, 32], strides = [1, 1]} : vector<5x192xf32> to vector<5x32xf32>
    %221 = vector.extract_strided_slice %216 {offsets = [0, 64], sizes = [5, 32], strides = [1, 1]} : vector<5x192xf32> to vector<5x32xf32>
    %222 = vector.extract_strided_slice %216 {offsets = [0, 128], sizes = [5, 32], strides = [1, 1]} : vector<5x192xf32> to vector<5x32xf32>
    %223 = arith.truncf %220 : vector<5x32xf32> to vector<5x32xbf16>
    %224 = arith.truncf %221 : vector<5x32xf32> to vector<5x32xbf16>
    "tpu.trace_start"() <{level = 10 : i32, message = "qd,kd->qk"}> : () -> ()
    %cst_114 = arith.constant dense<0.000000e+00> : vector<5x5xf32>
    %225 = tpu.matmul %223, %224, %cst_114 {dimension_numbers = #tpu.dot_dimension_numbers<[1], [1], [0], [0], [0, 0, 1, 0], [], []>} : vector<5x32xbf16>, vector<5x32xbf16>, vector<5x5xf32> -> vector<5x5xf32>
    "tpu.trace_stop"() : () -> ()
    %cst_115 = arith.constant 0.176776692 : f32
    %226 = vector.broadcast %cst_115 : f32 to vector<5x5xf32>
    %227 = arith.mulf %225, %226 : vector<5x5xf32>
    %cst_116 = arith.constant dense<0xFF800000> : vector<5xf32>
    %228 = vector.multi_reduction <maximumf>, %227, %cst_116 [1] : vector<5x5xf32> to vector<5xf32>
    %229 = vector.shape_cast %228 : vector<5xf32> to vector<5x1xf32>
    %230 = vector.broadcast %229 : vector<5x1xf32> to vector<5x5xf32>
    %231 = arith.subf %227, %230 : vector<5x5xf32>
    %232 = math.exp %231 : vector<5x5xf32>
    %cst_117 = arith.constant dense<0.000000e+00> : vector<5xf32>
    %233 = vector.multi_reduction <add>, %232, %cst_117 [1] : vector<5x5xf32> to vector<5xf32>
    %234 = vector.shape_cast %233 : vector<5xf32> to vector<5x1xf32>
    %235 = arith.truncf %232 : vector<5x5xf32> to vector<5x5xbf16>
    %236 = arith.truncf %222 : vector<5x32xf32> to vector<5x32xbf16>
    "tpu.trace_start"() <{level = 10 : i32, message = "qk,kd->qd"}> : () -> ()
    %cst_118 = arith.constant dense<0.000000e+00> : vector<5x32xf32>
    %237 = tpu.matmul %235, %236, %cst_118 {dimension_numbers = #tpu.dot_dimension_numbers<[1], [0], [0], [1], [0, 0, 1, 1], [], []>} : vector<5x5xbf16>, vector<5x32xbf16>, vector<5x32xf32> -> vector<5x32xf32>
    "tpu.trace_stop"() : () -> ()
    %238 = tpu.reciprocal %234 {approx = true} : vector<5x1xf32> -> vector<5x1xf32>
    %239 = vector.broadcast %238 : vector<5x1xf32> to vector<5x32xf32>
    %240 = arith.mulf %237, %239 : vector<5x32xf32>
    %241 = arith.truncf %240 : vector<5x32xf32> to vector<5x32xbf16>
    %242 = vector.extract_strided_slice %218 {offsets = [0, 0], sizes = [32, 64], strides = [1, 1]} : vector<64x64xbf16> to vector<32x64xbf16>
    %cst_119 = arith.constant dense<0.000000e+00> : vector<5x64xf32>
    %243 = tpu.matmul %241, %242, %cst_119 {dimension_numbers = #tpu.dot_dimension_numbers<[1], [0], [0], [1], [0, 0, 1, 1], [], []>} : vector<5x32xbf16>, vector<32x64xbf16>, vector<5x64xf32> -> vector<5x64xf32>
    %244 = arith.addf %219, %243 : vector<5x64xf32>
    %245 = vector.extract_strided_slice %216 {offsets = [0, 32], sizes = [5, 32], strides = [1, 1]} : vector<5x192xf32> to vector<5x32xf32>
    %246 = vector.extract_strided_slice %216 {offsets = [0, 96], sizes = [5, 32], strides = [1, 1]} : vector<5x192xf32> to vector<5x32xf32>
    %247 = vector.extract_strided_slice %216 {offsets = [0, 160], sizes = [5, 32], strides = [1, 1]} : vector<5x192xf32> to vector<5x32xf32>
    %248 = arith.truncf %245 : vector<5x32xf32> to vector<5x32xbf16>
    %249 = arith.truncf %246 : vector<5x32xf32> to vector<5x32xbf16>
    "tpu.trace_start"() <{level = 10 : i32, message = "qd,kd->qk"}> : () -> ()
    %cst_120 = arith.constant dense<0.000000e+00> : vector<5x5xf32>
    %250 = tpu.matmul %248, %249, %cst_120 {dimension_numbers = #tpu.dot_dimension_numbers<[1], [1], [0], [0], [0, 0, 1, 0], [], []>} : vector<5x32xbf16>, vector<5x32xbf16>, vector<5x5xf32> -> vector<5x5xf32>
    "tpu.trace_stop"() : () -> ()
    %cst_121 = arith.constant 0.176776692 : f32
    %251 = vector.broadcast %cst_121 : f32 to vector<5x5xf32>
    %252 = arith.mulf %250, %251 : vector<5x5xf32>
    %cst_122 = arith.constant dense<0xFF800000> : vector<5xf32>
    %253 = vector.multi_reduction <maximumf>, %252, %cst_122 [1] : vector<5x5xf32> to vector<5xf32>
    %254 = vector.shape_cast %253 : vector<5xf32> to vector<5x1xf32>
    %255 = vector.broadcast %254 : vector<5x1xf32> to vector<5x5xf32>
    %256 = arith.subf %252, %255 : vector<5x5xf32>
    %257 = math.exp %256 : vector<5x5xf32>
    %cst_123 = arith.constant dense<0.000000e+00> : vector<5xf32>
    %258 = vector.multi_reduction <add>, %257, %cst_123 [1] : vector<5x5xf32> to vector<5xf32>
    %259 = vector.shape_cast %258 : vector<5xf32> to vector<5x1xf32>
    %260 = arith.truncf %257 : vector<5x5xf32> to vector<5x5xbf16>
    %261 = arith.truncf %247 : vector<5x32xf32> to vector<5x32xbf16>
    "tpu.trace_start"() <{level = 10 : i32, message = "qk,kd->qd"}> : () -> ()
    %cst_124 = arith.constant dense<0.000000e+00> : vector<5x32xf32>
    %262 = tpu.matmul %260, %261, %cst_124 {dimension_numbers = #tpu.dot_dimension_numbers<[1], [0], [0], [1], [0, 0, 1, 1], [], []>} : vector<5x5xbf16>, vector<5x32xbf16>, vector<5x32xf32> -> vector<5x32xf32>
    "tpu.trace_stop"() : () -> ()
    %263 = tpu.reciprocal %259 {approx = true} : vector<5x1xf32> -> vector<5x1xf32>
    %264 = vector.broadcast %263 : vector<5x1xf32> to vector<5x32xf32>
    %265 = arith.mulf %262, %264 : vector<5x32xf32>
    %266 = arith.truncf %265 : vector<5x32xf32> to vector<5x32xbf16>
    %267 = vector.extract_strided_slice %218 {offsets = [32, 0], sizes = [32, 64], strides = [1, 1]} : vector<64x64xbf16> to vector<32x64xbf16>
    %cst_125 = arith.constant dense<0.000000e+00> : vector<5x64xf32>
    %268 = tpu.matmul %266, %267, %cst_125 {dimension_numbers = #tpu.dot_dimension_numbers<[1], [0], [0], [1], [0, 0, 1, 1], [], []>} : vector<5x32xbf16>, vector<32x64xbf16>, vector<5x64xf32> -> vector<5x64xf32>
    %269 = arith.addf %244, %268 : vector<5x64xf32>
    %270 = arith.addf %184, %269 : vector<5x64xf32>
    %c1_126 = arith.constant 1 : index
    %c0_127 = arith.constant 0 : index
    %c0_128 = arith.constant 0 : index
    %271 = vector.load %arg14[%c1_126, %c0_127, %c0_128] : memref<2x1x64xf32, #tpu.memory_space<vmem>>, vector<1x1x64xf32>
    %272 = vector.shape_cast %271 : vector<1x1x64xf32> to vector<1x64xf32>
    %273 = vector.broadcast %272 : vector<1x64xf32> to vector<5x64xf32>
    %274 = arith.addf %270, %273 : vector<5x64xf32>
    %c1_129 = arith.constant 1 : index
    %c0_130 = arith.constant 0 : index
    %c0_131 = arith.constant 0 : index
    %275 = vector.load %arg15[%c1_129, %c0_130, %c0_131] : memref<2x1x64xf32, #tpu.memory_space<vmem>>, vector<1x1x64xf32>
    %276 = vector.shape_cast %275 : vector<1x1x64xf32> to vector<1x64xf32>
    %c1_132 = arith.constant 1 : index
    %c0_133 = arith.constant 0 : index
    %c0_134 = arith.constant 0 : index
    %277 = vector.load %arg16[%c1_132, %c0_133, %c0_134] : memref<2x1x64xf32, #tpu.memory_space<vmem>>, vector<1x1x64xf32>
    %278 = vector.shape_cast %277 : vector<1x1x64xf32> to vector<1x64xf32>
    %cst_135 = arith.constant dense<0.000000e+00> : vector<5xf32>
    %279 = vector.multi_reduction <add>, %274, %cst_135 [1] : vector<5x64xf32> to vector<5xf32>
    %280 = vector.shape_cast %279 : vector<5xf32> to vector<5x1xf32>
    %cst_136 = arith.constant 6.400000e+01 : f32
    %281 = vector.broadcast %cst_136 : f32 to vector<5x1xf32>
    %282 = arith.divf %280, %281 : vector<5x1xf32>
    %283 = vector.broadcast %282 : vector<5x1xf32> to vector<5x64xf32>
    %284 = arith.subf %274, %283 : vector<5x64xf32>
    %285 = arith.mulf %284, %284 : vector<5x64xf32>
    %cst_137 = arith.constant dense<0.000000e+00> : vector<5xf32>
    %286 = vector.multi_reduction <add>, %285, %cst_137 [1] : vector<5x64xf32> to vector<5xf32>
    %287 = vector.shape_cast %286 : vector<5xf32> to vector<5x1xf32>
    %cst_138 = arith.constant 6.400000e+01 : f32
    %288 = vector.broadcast %cst_138 : f32 to vector<5x1xf32>
    %289 = arith.divf %287, %288 : vector<5x1xf32>
    %cst_139 = arith.constant 9.99999974E-6 : f32
    %290 = vector.broadcast %cst_139 : f32 to vector<5x1xf32>
    %291 = arith.addf %289, %290 : vector<5x1xf32>
    %292 = math.rsqrt %291 : vector<5x1xf32>
    %293 = vector.broadcast %292 : vector<5x1xf32> to vector<5x64xf32>
    %294 = arith.mulf %284, %293 : vector<5x64xf32>
    %295 = vector.broadcast %276 : vector<1x64xf32> to vector<5x64xf32>
    %296 = arith.mulf %294, %295 : vector<5x64xf32>
    %297 = vector.broadcast %278 : vector<1x64xf32> to vector<5x64xf32>
    %298 = arith.addf %296, %297 : vector<5x64xf32>
    %c1_140 = arith.constant 1 : index
    %c0_141 = arith.constant 0 : index
    %c0_142 = arith.constant 0 : index
    %299 = vector.load %arg17[%c1_140, %c0_141, %c0_142] : memref<2x64x256xbf16, #tpu.memory_space<vmem>>, vector<1x64x256xbf16>
    %300 = vector.shape_cast %299 : vector<1x64x256xbf16> to vector<64x256xbf16>
    %301 = arith.truncf %298 : vector<5x64xf32> to vector<5x64xbf16>
    %cst_143 = arith.constant dense<0.000000e+00> : vector<5x256xf32>
    %302 = tpu.matmul %301, %300, %cst_143 {dimension_numbers = #tpu.dot_dimension_numbers<[1], [0], [0], [1], [0, 0, 1, 1], [], []>} : vector<5x64xbf16>, vector<64x256xbf16>, vector<5x256xf32> -> vector<5x256xf32>
    %c1_144 = arith.constant 1 : index
    %c0_145 = arith.constant 0 : index
    %c0_146 = arith.constant 0 : index
    %303 = vector.load %arg18[%c1_144, %c0_145, %c0_146] : memref<2x1x256xf32, #tpu.memory_space<vmem>>, vector<1x1x256xf32>
    %304 = vector.shape_cast %303 : vector<1x1x256xf32> to vector<1x256xf32>
    %305 = vector.broadcast %304 : vector<1x256xf32> to vector<5x256xf32>
    %306 = arith.addf %302, %305 : vector<5x256xf32>
    %cst_147 = arith.constant 1.702000e+00 : f32
    %307 = vector.broadcast %cst_147 : f32 to vector<5x256xf32>
    %308 = arith.mulf %307, %306 : vector<5x256xf32>
    %309 = arith.negf %308 : vector<5x256xf32>
    %310 = math.exp %309 : vector<5x256xf32>
    %cst_148 = arith.constant 1.000000e+00 : f32
    %311 = vector.broadcast %cst_148 : f32 to vector<5x256xf32>
    %312 = arith.addf %311, %310 : vector<5x256xf32>
    %313 = arith.divf %311, %312 : vector<5x256xf32>
    %314 = arith.mulf %306, %313 : vector<5x256xf32>
    %c1_149 = arith.constant 1 : index
    %c0_150 = arith.constant 0 : index
    %c0_151 = arith.constant 0 : index
    %315 = vector.load %arg19[%c1_149, %c0_150, %c0_151] : memref<2x256x64xbf16, #tpu.memory_space<vmem>>, vector<1x256x64xbf16>
    %316 = vector.shape_cast %315 : vector<1x256x64xbf16> to vector<256x64xbf16>
    %317 = arith.truncf %314 : vector<5x256xf32> to vector<5x256xbf16>
    %cst_152 = arith.constant dense<0.000000e+00> : vector<5x64xf32>
    %318 = tpu.matmul %317, %316, %cst_152 {dimension_numbers = #tpu.dot_dimension_numbers<[1], [0], [0], [1], [0, 0, 1, 1], [], []>} : vector<5x256xbf16>, vector<256x64xbf16>, vector<5x64xf32> -> vector<5x64xf32>
    %c1_153 = arith.constant 1 : index
    %c0_154 = arith.constant 0 : index
    %c0_155 = arith.constant 0 : index
    %319 = vector.load %arg20[%c1_153, %c0_154, %c0_155] : memref<2x1x64xf32, #tpu.memory_space<vmem>>, vector<1x1x64xf32>
    %320 = vector.shape_cast %319 : vector<1x1x64xf32> to vector<1x64xf32>
    %321 = vector.broadcast %320 : vector<1x64xf32> to vector<5x64xf32>
    %322 = arith.addf %318, %321 : vector<5x64xf32>
    %323 = arith.addf %274, %322 : vector<5x64xf32>
    %324 = vector.extract_strided_slice %323 {offsets = [0, 0], sizes = [1, 64], strides = [1, 1]} : vector<5x64xf32> to vector<1x64xf32>
    %c0_156 = arith.constant 0 : index
    %c0_157 = arith.constant 0 : index
    %325 = vector.load %arg21[%c0_156, %c0_157] : memref<1x64xf32, #tpu.memory_space<vmem>>, vector<1x64xf32>
    %c0_158 = arith.constant 0 : index
    %c0_159 = arith.constant 0 : index
    %326 = vector.load %arg22[%c0_158, %c0_159] : memref<1x64xf32, #tpu.memory_space<vmem>>, vector<1x64xf32>
    %cst_160 = arith.constant dense<0.000000e+00> : vector<1xf32>
    %327 = vector.multi_reduction <add>, %324, %cst_160 [1] : vector<1x64xf32> to vector<1xf32>
    %328 = vector.shape_cast %327 : vector<1xf32> to vector<1x1xf32>
    %cst_161 = arith.constant 6.400000e+01 : f32
    %329 = vector.broadcast %cst_161 : f32 to vector<1x1xf32>
    %330 = arith.divf %328, %329 : vector<1x1xf32>
    %331 = vector.broadcast %330 : vector<1x1xf32> to vector<1x64xf32>
    %332 = arith.subf %324, %331 : vector<1x64xf32>
    %333 = arith.mulf %332, %332 : vector<1x64xf32>
    %cst_162 = arith.constant dense<0.000000e+00> : vector<1xf32>
    %334 = vector.multi_reduction <add>, %333, %cst_162 [1] : vector<1x64xf32> to vector<1xf32>
    %335 = vector.shape_cast %334 : vector<1xf32> to vector<1x1xf32>
    %cst_163 = arith.constant 6.400000e+01 : f32
    %336 = vector.broadcast %cst_163 : f32 to vector<1x1xf32>
    %337 = arith.divf %335, %336 : vector<1x1xf32>
    %cst_164 = arith.constant 9.99999974E-6 : f32
    %338 = vector.broadcast %cst_164 : f32 to vector<1x1xf32>
    %339 = arith.addf %337, %338 : vector<1x1xf32>
    %340 = math.rsqrt %339 : vector<1x1xf32>
    %341 = vector.broadcast %340 : vector<1x1xf32> to vector<1x64xf32>
    %342 = arith.mulf %332, %341 : vector<1x64xf32>
    %343 = arith.mulf %342, %325 : vector<1x64xf32>
    %344 = arith.addf %343, %326 : vector<1x64xf32>
    %c0_165 = arith.constant 0 : index
    %c0_166 = arith.constant 0 : index
    %345 = vector.load %arg23[%c0_165, %c0_166] : memref<64x128xbf16, #tpu.memory_space<vmem>>, vector<64x128xbf16>
    %346 = arith.truncf %344 : vector<1x64xf32> to vector<1x64xbf16>
    %cst_167 = arith.constant dense<0.000000e+00> : vector<1x128xf32>
    %347 = tpu.matmul %346, %345, %cst_167 {dimension_numbers = #tpu.dot_dimension_numbers<[1], [0], [0], [1], [0, 0, 1, 1], [], []>} : vector<1x64xbf16>, vector<64x128xbf16>, vector<1x128xf32> -> vector<1x128xf32>
    %348 = vector.shape_cast %347 : vector<1x128xf32> to vector<1x128xf32>
    %349 = vector.broadcast %348 : vector<1x128xf32> to vector<8x128xf32>
    %c0_168 = arith.constant 0 : index
    %c0_169 = arith.constant 0 : index
    %c0_170 = arith.constant 0 : index
    %350 = vector.load %arg24[%c0_168, %c0_169, %c0_170] : memref<1x8x128xf32, #tpu.memory_space<vmem>>, vector<1x8x128xf32>
    %351 = vector.shape_cast %350 : vector<1x8x128xf32> to vector<8x128xf32>
    %352 = vector.shape_cast %349 : vector<8x128xf32> to vector<1x8x128xf32>
    tpu.vector_store %arg24[%c0_168, %c0_169, %c0_170], %352 {strides = array<i32>} : memref<1x8x128xf32, #tpu.memory_space<vmem>>, vector<1x8x128xf32>,
    return
  }
  func.func @transform_0(%arg0: i32) -> (i32, i32, i32) {
    %c0_i32 = arith.constant 0 : i32
    %c0_i32_0 = arith.constant 0 : i32
    %c0_i32_1 = arith.constant 0 : i32
    return %arg0, %c0_i32, %c0_i32_0 : i32, i32, i32
  }
  func.func @transform_1(%arg0: i32) -> (i32, i32) {
    %c0_i32 = arith.constant 0 : i32
    %c0_i32_0 = arith.constant 0 : i32
    %c0_i32_1 = arith.constant 0 : i32
    return %c0_i32, %c0_i32_0 : i32, i32
  }
  func.func @transform_2(%arg0: i32) -> (i32, i32) {
    %c0_i32 = arith.constant 0 : i32
    %c0_i32_0 = arith.constant 0 : i32
    %c0_i32_1 = arith.constant 0 : i32
    return %c0_i32, %c0_i32_0 : i32, i32
  }
  func.func @transform_3(%arg0: i32) -> (i32, i32) {
    %c0_i32 = arith.constant 0 : i32
    %c0_i32_0 = arith.constant 0 : i32
    %c0_i32_1 = arith.constant 0 : i32
    return %c0_i32, %c0_i32_0 : i32, i32
  }
  func.func @transform_4(%arg0: i32) -> (i32, i32) {
    %c0_i32 = arith.constant 0 : i32
    %c0_i32_0 = arith.constant 0 : i32
    %c0_i32_1 = arith.constant 0 : i32
    return %c0_i32, %c0_i32_0 : i32, i32
  }
  func.func @transform_5(%arg0: i32) -> (i32, i32) {
    %c0_i32 = arith.constant 0 : i32
    %c0_i32_0 = arith.constant 0 : i32
    %c0_i32_1 = arith.constant 0 : i32
    return %c0_i32, %c0_i32_0 : i32, i32
  }
  func.func @transform_6(%arg0: i32) -> (i32, i32) {
    %c0_i32 = arith.constant 0 : i32
    %c0_i32_0 = arith.constant 0 : i32
    %c0_i32_1 = arith.constant 0 : i32
    return %c0_i32, %c0_i32_0 : i32, i32
  }
  func.func @transform_7(%arg0: i32) -> (i32, i32) {
    %c0_i32 = arith.constant 0 : i32
    %c0_i32_0 = arith.constant 0 : i32
    %c0_i32_1 = arith.constant 0 : i32
    return %c0_i32, %c0_i32_0 : i32, i32
  }
  func.func @transform_8(%arg0: i32) -> (i32, i32, i32) {
    %c0_i32 = arith.constant 0 : i32
    %c0_i32_0 = arith.constant 0 : i32
    %c0_i32_1 = arith.constant 0 : i32
    %c0_i32_2 = arith.constant 0 : i32
    return %c0_i32, %c0_i32_0, %c0_i32_1 : i32, i32, i32
  }
  func.func @transform_9(%arg0: i32) -> (i32, i32, i32) {
    %c0_i32 = arith.constant 0 : i32
    %c0_i32_0 = arith.constant 0 : i32
    %c0_i32_1 = arith.constant 0 : i32
    %c0_i32_2 = arith.constant 0 : i32
    return %c0_i32, %c0_i32_0, %c0_i32_1 : i32, i32, i32
  }
  func.func @transform_10(%arg0: i32) -> (i32, i32, i32) {
    %c0_i32 = arith.constant 0 : i32
    %c0_i32_0 = arith.constant 0 : i32
    %c0_i32_1 = arith.constant 0 : i32
    %c0_i32_2 = arith.constant 0 : i32
    return %c0_i32, %c0_i32_0, %c0_i32_1 : i32, i32, i32
  }
  func.func @transform_11(%arg0: i32) -> (i32, i32, i32) {
    %c0_i32 = arith.constant 0 : i32
    %c0_i32_0 = arith.constant 0 : i32
    %c0_i32_1 = arith.constant 0 : i32
    %c0_i32_2 = arith.constant 0 : i32
    return %c0_i32, %c0_i32_0, %c0_i32_1 : i32, i32, i32
  }
  func.func @transform_12(%arg0: i32) -> (i32, i32, i32) {
    %c0_i32 = arith.constant 0 : i32
    %c0_i32_0 = arith.constant 0 : i32
    %c0_i32_1 = arith.constant 0 : i32
    %c0_i32_2 = arith.constant 0 : i32
    return %c0_i32, %c0_i32_0, %c0_i32_1 : i32, i32, i32
  }
  func.func @transform_13(%arg0: i32) -> (i32, i32, i32) {
    %c0_i32 = arith.constant 0 : i32
    %c0_i32_0 = arith.constant 0 : i32
    %c0_i32_1 = arith.constant 0 : i32
    %c0_i32_2 = arith.constant 0 : i32
    return %c0_i32, %c0_i32_0, %c0_i32_1 : i32, i32, i32
  }
  func.func @transform_14(%arg0: i32) -> (i32, i32, i32) {
    %c0_i32 = arith.constant 0 : i32
    %c0_i32_0 = arith.constant 0 : i32
    %c0_i32_1 = arith.constant 0 : i32
    %c0_i32_2 = arith.constant 0 : i32
    return %c0_i32, %c0_i32_0, %c0_i32_1 : i32, i32, i32
  }
  func.func @transform_15(%arg0: i32) -> (i32, i32, i32) {
    %c0_i32 = arith.constant 0 : i32
    %c0_i32_0 = arith.constant 0 : i32
    %c0_i32_1 = arith.constant 0 : i32
    %c0_i32_2 = arith.constant 0 : i32
    return %c0_i32, %c0_i32_0, %c0_i32_1 : i32, i32, i32
  }
  func.func @transform_16(%arg0: i32) -> (i32, i32, i32) {
    %c0_i32 = arith.constant 0 : i32
    %c0_i32_0 = arith.constant 0 : i32
    %c0_i32_1 = arith.constant 0 : i32
    %c0_i32_2 = arith.constant 0 : i32
    return %c0_i32, %c0_i32_0, %c0_i32_1 : i32, i32, i32
  }
  func.func @transform_17(%arg0: i32) -> (i32, i32, i32) {
    %c0_i32 = arith.constant 0 : i32
    %c0_i32_0 = arith.constant 0 : i32
    %c0_i32_1 = arith.constant 0 : i32
    %c0_i32_2 = arith.constant 0 : i32
    return %c0_i32, %c0_i32_0, %c0_i32_1 : i32, i32, i32
  }
  func.func @transform_18(%arg0: i32) -> (i32, i32, i32) {
    %c0_i32 = arith.constant 0 : i32
    %c0_i32_0 = arith.constant 0 : i32
    %c0_i32_1 = arith.constant 0 : i32
    %c0_i32_2 = arith.constant 0 : i32
    return %c0_i32, %c0_i32_0, %c0_i32_1 : i32, i32, i32
  }
  func.func @transform_19(%arg0: i32) -> (i32, i32, i32) {
    %c0_i32 = arith.constant 0 : i32
    %c0_i32_0 = arith.constant 0 : i32
    %c0_i32_1 = arith.constant 0 : i32
    %c0_i32_2 = arith.constant 0 : i32
    return %c0_i32, %c0_i32_0, %c0_i32_1 : i32, i32, i32
  }
  func.func @transform_20(%arg0: i32) -> (i32, i32) {
    %c0_i32 = arith.constant 0 : i32
    %c0_i32_0 = arith.constant 0 : i32
    %c0_i32_1 = arith.constant 0 : i32
    return %c0_i32, %c0_i32_0 : i32, i32
  }
  func.func @transform_21(%arg0: i32) -> (i32, i32) {
    %c0_i32 = arith.constant 0 : i32
    %c0_i32_0 = arith.constant 0 : i32
    %c0_i32_1 = arith.constant 0 : i32
    return %c0_i32, %c0_i32_0 : i32, i32
  }
  func.func @transform_22(%arg0: i32) -> (i32, i32) {
    %c0_i32 = arith.constant 0 : i32
    %c0_i32_0 = arith.constant 0 : i32
    %c0_i32_1 = arith.constant 0 : i32
    return %c0_i32, %c0_i32_0 : i32, i32
  }
  func.func @transform_23(%arg0: i32) -> (i32, i32, i32) {
    %c0_i32 = arith.constant 0 : i32
    %c0_i32_0 = arith.constant 0 : i32
    %c0_i32_1 = arith.constant 0 : i32
    return %arg0, %c0_i32, %c0_i32_0 : i32, i32, i32
  }
}

</mosaic_0001>

<llo_original>
// kernel: clip_image_encode.1
$region0: #{clip_image_encode.1}
  #allocation0 [shape = 'u32[]', space=smem, size = 0x4, offset = 0x4, fixed_abs, tag = 'smem constant byte address 0x4 - core index']
  #allocation1 [shape = 'u32[144,128]{1,0:T(1,128)}', space=vmem, size = 0x12000, scoped, tag = 'internal scratch']
  #allocation2 [shape = 'f32[5,64]{1,0:T(8,128)}', space=vmem, size = 0x1000, scoped, tag = 'scratch operand']
  %s0 = inlined_call_operand.vmem [shape: f32[2,4,192], index: 0, kind: input, shape index: {}]
  %s1 = inlined_call_operand.vmem [shape: f32[1,192], index: 1, kind: input, shape index: {}]
  %s2 = inlined_call_operand.vmem [shape: f32[1,192], index: 2, kind: input, shape index: {}]
  %s3 = inlined_call_operand.vmem [shape: bf16[192,64], index: 3, kind: input, shape index: {}]
  %s4 = inlined_call_operand.vmem [shape: f32[1,64], index: 4, kind: input, shape index: {}]
  %s5 = inlined_call_operand.vmem [shape: f32[5,64], index: 5, kind: input, shape index: {}]
  %s6 = inlined_call_operand.vmem [shape: f32[1,64], index: 6, kind: input, shape index: {}]
  %s7 = inlined_call_operand.vmem [shape: f32[1,64], index: 7, kind: input, shape index: {}]
  %s8 = inlined_call_operand.vmem [shape: f32[2,1,64], index: 8, kind: input, shape index: {}]
  %s9 = inlined_call_operand.vmem [shape: f32[2,1,64], index: 9, kind: input, shape index: {}]
  %s10 = inlined_call_operand.vmem [shape: bf16[2,64,192], index: 10, kind: input, shape index: {}]
  %s11 = inlined_call_operand.vmem [shape: f32[2,1,192], index: 11, kind: input, shape index: {}]
  %s12 = inlined_call_operand.vmem [shape: bf16[2,64,64], index: 12, kind: input, shape index: {}]
  %s13 = inlined_call_operand.vmem [shape: f32[2,1,64], index: 13, kind: input, shape index: {}]
  %s14 = inlined_call_operand.vmem [shape: f32[2,1,64], index: 14, kind: input, shape index: {}]
  %s15 = inlined_call_operand.vmem [shape: f32[2,1,64], index: 15, kind: input, shape index: {}]
  %s16 = inlined_call_operand.vmem [shape: bf16[2,64,256], index: 16, kind: input, shape index: {}]
  %s17 = inlined_call_operand.vmem [shape: f32[2,1,256], index: 17, kind: input, shape index: {}]
  %s18 = inlined_call_operand.vmem [shape: bf16[2,256,64], index: 18, kind: input, shape index: {}]
  %s19 = inlined_call_operand.vmem [shape: f32[2,1,64], index: 19, kind: input, shape index: {}]
  %s20 = inlined_call_operand.vmem [shape: f32[1,64], index: 20, kind: input, shape index: {}]
  %s21 = inlined_call_operand.vmem [shape: f32[1,64], index: 21, kind: input, shape index: {}]
  %s22 = inlined_call_operand.vmem [shape: bf16[64,128], index: 22, kind: input, shape index: {}]
  %s23 = inlined_call_operand.vmem [shape: f32[2,8,128], index: 23, kind: output, shape index: {}]
  %s24 = sld [smem:[#allocation0]]
  $region125: #{clip_image_encode.1} parent=0
    _
  %s26 = ssub.s32 1, %s24
  %s27 = scalar_select 0, %s26, %s24
  loop: start=0, step=1, limit=4
  $region2: #{clip_image_encode.1} parent=0 // loop_pre_header
    _
  $region3: #{clip_image_encode.1} parent=0 // loop_header
    %s29 = sphi 0, %s33
    %p30 = scmp.ge.s32.totalorder %s29, 4
    %s39 = sphi 0, %s41
    %s42 = sphi 0, %s39
    %s43 = sphi 0, %s42
    %s59 = sphi 0, %s43
    %s63 = sphi 0, %s63
    %s65 = sphi 0, %s63
    %s66 = sphi 0, %s65
    %s80 = sphi 0, %s66
    %s84 = sphi 0, %s84
    %s86 = sphi 0, %s84
    %s87 = sphi 0, %s86
    %s101 = sphi 0, %s87
    %s105 = sphi 0, %s105
    %s107 = sphi 0, %s105
    %s108 = sphi 0, %s107
    %s122 = sphi 0, %s108
    %s126 = sphi 0, %s126
    %s128 = sphi 0, %s126
    %s129 = sphi 0, %s128
    %s143 = sphi 0, %s129
    %s147 = sphi 0, %s147
    %s149 = sphi 0, %s147
    %s150 = sphi 0, %s149
    %s164 = sphi 0, %s150
    %s168 = sphi 0, %s168
    %s170 = sphi 0, %s168
    %s171 = sphi 0, %s170
    %s185 = sphi 0, %s171
    %s189 = sphi 0, %s189
    %s191 = sphi 0, %s189
    %s192 = sphi 0, %s191
    %s206 = sphi 0, %s192
    %s210 = sphi 0, %s210
    %s212 = sphi 0, %s210
    %s213 = sphi 0, %s212
    %s227 = sphi 0, %s213
    %s231 = sphi 0, %s231
    %s233 = sphi 0, %s231
    %s234 = sphi 0, %s233
    %s248 = sphi 0, %s234
    %s252 = sphi 0, %s252
    %s254 = sphi 0, %s252
    %s255 = sphi 0, %s254
    %s269 = sphi 0, %s255
    %s273 = sphi 0, %s273
    %s275 = sphi 0, %s273
    %s276 = sphi 0, %s275
    %s290 = sphi 0, %s276
    %s294 = sphi 0, %s294
    %s296 = sphi 0, %s294
    %s297 = sphi 0, %s296
    %s311 = sphi 0, %s297
    %s315 = sphi 0, %s315
    %s317 = sphi 0, %s315
    %s318 = sphi 0, %s317
    %s332 = sphi 0, %s318
    %s336 = sphi 0, %s336
    %s338 = sphi 0, %s336
    %s339 = sphi 0, %s338
    %s353 = sphi 0, %s339
    %s357 = sphi 0, %s357
    %s359 = sphi 0, %s357
    %s360 = sphi 0, %s359
    %s374 = sphi 0, %s360
    %s378 = sphi 0, %s378
    %s380 = sphi 0, %s378
    %s381 = sphi 0, %s380
    %s395 = sphi 0, %s381
    %s399 = sphi 0, %s399
    %s401 = sphi 0, %s399
    %s402 = sphi 0, %s401
    %s416 = sphi 0, %s402
    %s420 = sphi 0, %s420
    %s422 = sphi 0, %s420
    %s423 = sphi 0, %s422
    %s437 = sphi 0, %s423
    %s441 = sphi 0, %s441
    %s443 = sphi 0, %s441
    %s444 = sphi 0, %s443
    %s458 = sphi 0, %s444
    %s462 = sphi 0, %s462
    %s464 = sphi 0, %s462
    %s465 = sphi 0, %s464
    %s479 = sphi 0, %s465
    %s483 = sphi 0, %s483
    %s485 = sphi 0, %s483
    %s486 = sphi 0, %s485
    %s500 = sphi 0, %s486
    %s504 = sphi 0, %s504
    %s506 = sphi 0, %s504
    %s507 = sphi 0, %s506
    %s521 = sphi 0, %s507
    %s527 = sphi 0, %s529
    %s530 = sphi 0, %s527
    %s531 = sphi 0, %s530
    %s547 = sphi 0, %s531
  $region4: #{clip_image_encode.1} parent=0 // loop_header_branch
    %32 = sbr.rel (%p30) target = $region8
  $region5: #{clip_image_encode.1} parent=0 // loop_body
    %s34 = ssub.s32 %s29, 1
    %s35 = ssub.s32 %s29, 2
    %s36 = sadd.s32 %s29, 1
    %s37 = ssub.s32 %s29, %s36
    %p38 = scmp.eq.s32.totalorder %s37, 0
    %s40 = sadd.s32 %s39, 1
    %s41 = scalar_select %p38, %s39, %s40
    %p44 = pneg %p38
    %p45 = scmp.eq.s32.totalorder %s29, 1
    %p46 = por %p44, %p45
    %p47 = scmp.ne.s32.totalorder %s39, %s42
    %p48 = scmp.eq.s32.totalorder %s29, 0
    %p49 = por %p47, %p48
    %p50 = scmp.ne.s32.totalorder %s39, %s42
    %p51 = scmp.eq.s32.totalorder %s34, 1
    %p52 = por %p50, %p51
    %p53 = scmp.ne.s32.totalorder %s42, %s43
    %p54 = scmp.eq.s32.totalorder %s34, 0
    %p55 = por %p53, %p54
    %p56 = scmp.ne.s32.totalorder %s42, %s43
    %p57 = scmp.eq.s32.totalorder %s35, 1
    %p58 = por %p56, %p57
    %p60 = scmp.ne.s32.totalorder %s43, %s59
    %p61 = scmp.eq.s32.totalorder %s35, 0
    %p62 = por %p60, %p61
    %s64 = sadd.s32 %s63, 1
    %p67 = scmp.eq.s32.totalorder %s29, 1
    %p68 = scmp.ne.s32.totalorder %s63, %s65
    %p69 = scmp.eq.s32.totalorder %s29, 0
    %p70 = por %p68, %p69
    %p71 = scmp.ne.s32.totalorder %s63, %s65
    %p72 = scmp.eq.s32.totalorder %s34, 1
    %p73 = por %p71, %p72
    %p74 = scmp.ne.s32.totalorder %s65, %s66
    %p75 = scmp.eq.s32.totalorder %s34, 0
    %p76 = por %p74, %p75
    %p77 = scmp.ne.s32.totalorder %s65, %s66
    %p78 = scmp.eq.s32.totalorder %s35, 1
    %p79 = por %p77, %p78
    %p81 = scmp.ne.s32.totalorder %s66, %s80
    %p82 = scmp.eq.s32.totalorder %s35, 0
    %p83 = por %p81, %p82
    %s85 = sadd.s32 %s84, 1
    %p88 = scmp.eq.s32.totalorder %s29, 1
    %p89 = scmp.ne.s32.totalorder %s84, %s86
    %p90 = scmp.eq.s32.totalorder %s29, 0
    %p91 = por %p89, %p90
    %p92 = scmp.ne.s32.totalorder %s84, %s86
    %p93 = scmp.eq.s32.totalorder %s34, 1
    %p94 = por %p92, %p93
    %p95 = scmp.ne.s32.totalorder %s86, %s87
    %p96 = scmp.eq.s32.totalorder %s34, 0
    %p97 = por %p95, %p96
    %p98 = scmp.ne.s32.totalorder %s86, %s87
    %p99 = scmp.eq.s32.totalorder %s35, 1
    %p100 = por %p98, %p99
    %p102 = scmp.ne.s32.totalorder %s87, %s101
    %p103 = scmp.eq.s32.totalorder %s35, 0
    %p104 = por %p102, %p103
    %s106 = sadd.s32 %s105, 1
    %p109 = scmp.eq.s32.totalorder %s29, 1
    %p110 = scmp.ne.s32.totalorder %s105, %s107
    %p111 = scmp.eq.s32.totalorder %s29, 0
    %p112 = por %p110, %p111
    %p113 = scmp.ne.s32.totalorder %s105, %s107
    %p114 = scmp.eq.s32.totalorder %s34, 1
    %p115 = por %p113, %p114
    %p116 = scmp.ne.s32.totalorder %s107, %s108
    %p117 = scmp.eq.s32.totalorder %s34, 0
    %p118 = por %p116, %p117
    %p119 = scmp.ne.s32.totalorder %s107, %s108
    %p120 = scmp.eq.s32.totalorder %s35, 1
    %p121 = por %p119, %p120
    %p123 = scmp.ne.s32.totalorder %s108, %s122
    %p124 = scmp.eq.s32.totalorder %s35, 0
    %p125 = por %p123, %p124
    %s127 = sadd.s32 %s126, 1
    %p130 = scmp.eq.s32.totalorder %s29, 1
    %p131 = scmp.ne.s32.totalorder %s126, %s128
    %p132 = scmp.eq.s32.totalorder %s29, 0
    %p133 = por %p131, %p132
    %p134 = scmp.ne.s32.totalorder %s126, %s128
    %p135 = scmp.eq.s32.totalorder %s34, 1
    %p136 = por %p134, %p135
    %p137 = scmp.ne.s32.totalorder %s128, %s129
    %p138 = scmp.eq.s32.totalorder %s34, 0
    %p139 = por %p137, %p138
    %p140 = scmp.ne.s32.totalorder %s128, %s129
    %p141 = scmp.eq.s32.totalorder %s35, 1
    %p142 = por %p140, %p141
    %p144 = scmp.ne.s32.totalorder %s129, %s143
    %p145 = scmp.eq.s32.totalorder %s35, 0
    %p146 = por %p144, %p145
    %s148 = sadd.s32 %s147, 1
    %p151 = scmp.eq.s32.totalorder %s29, 1
    %p152 = scmp.ne.s32.totalorder %s147, %s149
    %p153 = scmp.eq.s32.totalorder %s29, 0
    %p154 = por %p152, %p153
    %p155 = scmp.ne.s32.totalorder %s147, %s149
    %p156 = scmp.eq.s32.totalorder %s34, 1
    %p157 = por %p155, %p156
    %p158 = scmp.ne.s32.totalorder %s149, %s150
    %p159 = scmp.eq.s32.totalorder %s34, 0
    %p160 = por %p158, %p159
    %p161 = scmp.ne.s32.totalorder %s149, %s150
    %p162 = scmp.eq.s32.totalorder %s35, 1
    %p163 = por %p161, %p162
    %p165 = scmp.ne.s32.totalorder %s150, %s164
    %p166 = scmp.eq.s32.totalorder %s35, 0
    %p167 = por %p165, %p166
    %s169 = sadd.s32 %s168, 1
    %p172 = scmp.eq.s32.totalorder %s29, 1
    %p173 = scmp.ne.s32.totalorder %s168, %s170
    %p174 = scmp.eq.s32.totalorder %s29, 0
    %p175 = por %p173, %p174
    %p176 = scmp.ne.s32.totalorder %s168, %s170
    %p177 = scmp.eq.s32.totalorder %s34, 1
    %p178 = por %p176, %p177
    %p179 = scmp.ne.s32.totalorder %s170, %s171
    %p180 = scmp.eq.s32.totalorder %s34, 0
    %p181 = por %p179, %p180
    %p182 = scmp.ne.s32.totalorder %s170, %s171
    %p183 = scmp.eq.s32.totalorder %s35, 1
    %p184 = por %p182, %p183
    %p186 = scmp.ne.s32.totalorder %s171, %s185
    %p187 = scmp.eq.s32.totalorder %s35, 0
    %p188 = por %p186, %p187
    %s190 = sadd.s32 %s189, 1
    %p193 = scmp.eq.s32.totalorder %s29, 1
    %p194 = scmp.ne.s32.totalorder %s189, %s191
    %p195 = scmp.eq.s32.totalorder %s29, 0
    %p196 = por %p194, %p195
    %p197 = scmp.ne.s32.totalorder %s189, %s191
    %p198 = scmp.eq.s32.totalorder %s34, 1
    %p199 = por %p197, %p198
    %p200 = scmp.ne.s32.totalorder %s191, %s192
    %p201 = scmp.eq.s32.totalorder %s34, 0
    %p202 = por %p200, %p201
    %p203 = scmp.ne.s32.totalorder %s191, %s192
    %p204 = scmp.eq.s32.totalorder %s35, 1
    %p205 = por %p203, %p204
    %p207 = scmp.ne.s32.totalorder %s192, %s206
    %p208 = scmp.eq.s32.totalorder %s35, 0
    %p209 = por %p207, %p208
    %s211 = sadd.s32 %s210, 1
    %p214 = scmp.eq.s32.totalorder %s29, 1
    %p215 = scmp.ne.s32.totalorder %s210, %s212
    %p216 = scmp.eq.s32.totalorder %s29, 0
    %p217 = por %p215, %p216
    %p218 = scmp.ne.s32.totalorder %s210, %s212
    %p219 = scmp.eq.s32.totalorder %s34, 1
    %p220 = por %p218, %p219
    %p221 = scmp.ne.s32.totalorder %s212, %s213
    %p222 = scmp.eq.s32.totalorder %s34, 0
    %p223 = por %p221, %p222
    %p224 = scmp.ne.s32.totalorder %s212, %s213
    %p225 = scmp.eq.s32.totalorder %s35, 1
    %p226 = por %p224, %p225
    %p228 = scmp.ne.s32.totalorder %s213, %s227
    %p229 = scmp.eq.s32.totalorder %s35, 0
    %p230 = por %p228, %p229
    %s232 = sadd.s32 %s231, 1
    %p235 = scmp.eq.s32.totalorder %s29, 1
    %p236 = scmp.ne.s32.totalorder %s231, %s233
    %p237 = scmp.eq.s32.totalorder %s29, 0
    %p238 = por %p236, %p237
    %p239 = scmp.ne.s32.totalorder %s231, %s233
    %p240 = scmp.eq.s32.totalorder %s34, 1
    %p241 = por %p239, %p240
    %p242 = scmp.ne.s32.totalorder %s233, %s234
    %p243 = scmp.eq.s32.totalorder %s34, 0
    %p244 = por %p242, %p243
    %p245 = scmp.ne.s32.totalorder %s233, %s234
    %p246 = scmp.eq.s32.totalorder %s35, 1
    %p247 = por %p245, %p246
    %p249 = scmp.ne.s32.totalorder %s234, %s248
    %p250 = scmp.eq.s32.totalorder %s35, 0
    %p251 = por %p249, %p250
    %s253 = sadd.s32 %s252, 1
    %p256 = scmp.eq.s32.totalorder %s29, 1
    %p257 = scmp.ne.s32.totalorder %s252, %s254
    %p258 = scmp.eq.s32.totalorder %s29, 0
    %p259 = por %p257, %p258
    %p260 = scmp.ne.s32.totalorder %s252, %s254
    %p261 = scmp.eq.s32.totalorder %s34, 1
    %p262 = por %p260, %p261
    %p263 = scmp.ne.s32.totalorder %s254, %s255
    %p264 = scmp.eq.s32.totalorder %s34, 0
    %p265 = por %p263, %p264
    %p266 = scmp.ne.s32.totalorder %s254, %s255
    %p267 = scmp.eq.s32.totalorder %s35, 1
    %p268 = por %p266, %p267
    %p270 = scmp.ne.s32.totalorder %s255, %s269
    %p271 = scmp.eq.s32.totalorder %s35, 0
    %p272 = por %p270, %p271
    %s274 = sadd.s32 %s273, 1
    %p277 = scmp.eq.s32.totalorder %s29, 1
    %p278 = scmp.ne.s32.totalorder %s273, %s275
    %p279 = scmp.eq.s32.totalorder %s29, 0
    %p280 = por %p278, %p279
    %p281 = scmp.ne.s32.totalorder %s273, %s275
    %p282 = scmp.eq.s32.totalorder %s34, 1
    %p283 = por %p281, %p282
    %p284 = scmp.ne.s32.totalorder %s275, %s276
    %p285 = scmp.eq.s32.totalorder %s34, 0
    %p286 = por %p284, %p285
    %p287 = scmp.ne.s32.totalorder %s275, %s276
    %p288 = scmp.eq.s32.totalorder %s35, 1
    %p289 = por %p287, %p288
    %p291 = scmp.ne.s32.totalorder %s276, %s290
    %p292 = scmp.eq.s32.totalorder %s35, 0
    %p293 = por %p291, %p292
    %s295 = sadd.s32 %s294, 1
    %p298 = scmp.eq.s32.totalorder %s29, 1
    %p299 = scmp.ne.s32.totalorder %s294, %s296
    %p300 = scmp.eq.s32.totalorder %s29, 0
    %p301 = por %p299, %p300
    %p302 = scmp.ne.s32.totalorder %s294, %s296
    %p303 = scmp.eq.s32.totalorder %s34, 1
    %p304 = por %p302, %p303
    %p305 = scmp.ne.s32.totalorder %s296, %s297
    %p306 = scmp.eq.s32.totalorder %s34, 0
    %p307 = por %p305, %p306
    %p308 = scmp.ne.s32.totalorder %s296, %s297
    %p309 = scmp.eq.s32.totalorder %s35, 1
    %p310 = por %p308, %p309
    %p312 = scmp.ne.s32.totalorder %s297, %s311
    %p313 = scmp.eq.s32.totalorder %s35, 0
    %p314 = por %p312, %p313
    %s316 = sadd.s32 %s315, 1
    %p319 = scmp.eq.s32.totalorder %s29, 1
    %p320 = scmp.ne.s32.totalorder %s315, %s317
    %p321 = scmp.eq.s32.totalorder %s29, 0
    %p322 = por %p320, %p321
    %p323 = scmp.ne.s32.totalorder %s315, %s317
    %p324 = scmp.eq.s32.totalorder %s34, 1
    %p325 = por %p323, %p324
    %p326 = scmp.ne.s32.totalorder %s317, %s318
    %p327 = scmp.eq.s32.totalorder %s34, 0
    %p328 = por %p326, %p327
    %p329 = scmp.ne.s32.totalorder %s317, %s318
    %p330 = scmp.eq.s32.totalorder %s35, 1
    %p331 = por %p329, %p330
    %p333 = scmp.ne.s32.totalorder %s318, %s332
    %p334 = scmp.eq.s32.totalorder %s35, 0
    %p335 = por %p333, %p334
    %s337 = sadd.s32 %s336, 1
    %p340 = scmp.eq.s32.totalorder %s29, 1
    %p341 = scmp.ne.s32.totalorder %s336, %s338
    %p342 = scmp.eq.s32.totalorder %s29, 0
    %p343 = por %p341, %p342
    %p344 = scmp.ne.s32.totalorder %s336, %s338
    %p345 = scmp.eq.s32.totalorder %s34, 1
    %p346 = por %p344, %p345
    %p347 = scmp.ne.s32.totalorder %s338, %s339
    %p348 = scmp.eq.s32.totalorder %s34, 0
    %p349 = por %p347, %p348
    %p350 = scmp.ne.s32.totalorder %s338, %s339
    %p351 = scmp.eq.s32.totalorder %s35, 1
    %p352 = por %p350, %p351
    %p354 = scmp.ne.s32.totalorder %s339, %s353
    %p355 = scmp.eq.s32.totalorder %s35, 0
    %p356 = por %p354, %p355
    %s358 = sadd.s32 %s357, 1
    %p361 = scmp.eq.s32.totalorder %s29, 1
    %p362 = scmp.ne.s32.totalorder %s357, %s359
    %p363 = scmp.eq.s32.totalorder %s29, 0
    %p364 = por %p362, %p363
    %p365 = scmp.ne.s32.totalorder %s357, %s359
    %p366 = scmp.eq.s32.totalorder %s34, 1
    %p367 = por %p365, %p366
    %p368 = scmp.ne.s32.totalorder %s359, %s360
    %p369 = scmp.eq.s32.totalorder %s34, 0
    %p370 = por %p368, %p369
    %p371 = scmp.ne.s32.totalorder %s359, %s360
    %p372 = scmp.eq.s32.totalorder %s35, 1
    %p373 = por %p371, %p372
    %p375 = scmp.ne.s32.totalorder %s360, %s374
    %p376 = scmp.eq.s32.totalorder %s35, 0
    %p377 = por %p375, %p376
    %s379 = sadd.s32 %s378, 1
    %p382 = scmp.eq.s32.totalorder %s29, 1
    %p383 = scmp.ne.s32.totalorder %s378, %s380
    %p384 = scmp.eq.s32.totalorder %s29, 0
    %p385 = por %p383, %p384
    %p386 = scmp.ne.s32.totalorder %s378, %s380
    %p387 = scmp.eq.s32.totalorder %s34, 1
    %p388 = por %p386, %p387
    %p389 = scmp.ne.s32.totalorder %s380, %s381
    %p390 = scmp.eq.s32.totalorder %s34, 0
    %p391 = por %p389, %p390
    %p392 = scmp.ne.s32.totalorder %s380, %s381
    %p393 = scmp.eq.s32.totalorder %s35, 1
    %p394 = por %p392, %p393
    %p396 = scmp.ne.s32.totalorder %s381, %s395
    %p397 = scmp.eq.s32.totalorder %s35, 0
    %p398 = por %p396, %p397
    %s400 = sadd.s32 %s399, 1
    %p403 = scmp.eq.s32.totalorder %s29, 1
    %p404 = scmp.ne.s32.totalorder %s399, %s401
    %p405 = scmp.eq.s32.totalorder %s29, 0
    %p406 = por %p404, %p405
    %p407 = scmp.ne.s32.totalorder %s399, %s401
    %p408 = scmp.eq.s32.totalorder %s34, 1
    %p409 = por %p407, %p408
    %p410 = scmp.ne.s32.totalorder %s401, %s402
    %p411 = scmp.eq.s32.totalorder %s34, 0
    %p412 = por %p410, %p411
    %p413 = scmp.ne.s32.totalorder %s401, %s402
    %p414 = scmp.eq.s32.totalorder %s35, 1
    %p415 = por %p413, %p414
    %p417 = scmp.ne.s32.totalorder %s402, %s416
    %p418 = scmp.eq.s32.totalorder %s35, 0
    %p419 = por %p417, %p418
    %s421 = sadd.s32 %s420, 1
    %p424 = scmp.eq.s32.totalorder %s29, 1
    %p425 = scmp.ne.s32.totalorder %s420, %s422
    %p426 = scmp.eq.s32.totalorder %s29, 0
    %p427 = por %p425, %p426
    %p428 = scmp.ne.s32.totalorder %s420, %s422
    %p429 = scmp.eq.s32.totalorder %s34, 1
    %p430 = por %p428, %p429
    %p431 = scmp.ne.s32.totalorder %s422, %s423
    %p432 = scmp.eq.s32.totalorder %s34, 0
    %p433 = por %p431, %p432
    %p434 = scmp.ne.s32.totalorder %s422, %s423
    %p435 = scmp.eq.s32.totalorder %s35, 1
    %p436 = por %p434, %p435
    %p438 = scmp.ne.s32.totalorder %s423, %s437
    %p439 = scmp.eq.s32.totalorder %s35, 0
    %p440 = por %p438, %p439
    %s442 = sadd.s32 %s441, 1
    %p445 = scmp.eq.s32.totalorder %s29, 1
    %p446 = scmp.ne.s32.totalorder %s441, %s443
    %p447 = scmp.eq.s32.totalorder %s29, 0
    %p448 = por %p446, %p447
    %p449 = scmp.ne.s32.totalorder %s441, %s443
    %p450 = scmp.eq.s32.totalorder %s34, 1
    %p451 = por %p449, %p450
    %p452 = scmp.ne.s32.totalorder %s443, %s444
    %p453 = scmp.eq.s32.totalorder %s34, 0
    %p454 = por %p452, %p453
    %p455 = scmp.ne.s32.totalorder %s443, %s444
    %p456 = scmp.eq.s32.totalorder %s35, 1
    %p457 = por %p455, %p456
    %p459 = scmp.ne.s32.totalorder %s444, %s458
    %p460 = scmp.eq.s32.totalorder %s35, 0
    %p461 = por %p459, %p460
    %s463 = sadd.s32 %s462, 1
    %p466 = scmp.eq.s32.totalorder %s29, 1
    %p467 = scmp.ne.s32.totalorder %s462, %s464
    %p468 = scmp.eq.s32.totalorder %s29, 0
    %p469 = por %p467, %p468
    %p470 = scmp.ne.s32.totalorder %s462, %s464
    %p471 = scmp.eq.s32.totalorder %s34, 1
    %p472 = por %p470, %p471
    %p473 = scmp.ne.s32.totalorder %s464, %s465
    %p474 = scmp.eq.s32.totalorder %s34, 0
    %p475 = por %p473, %p474
    %p476 = scmp.ne.s32.totalorder %s464, %s465
    %p477 = scmp.eq.s32.totalorder %s35, 1
    %p478 = por %p476, %p477
    %p480 = scmp.ne.s32.totalorder %s465, %s479
    %p481 = scmp.eq.s32.totalorder %s35, 0
    %p482 = por %p480, %p481
    %s484 = sadd.s32 %s483, 1
    %p487 = scmp.eq.s32.totalorder %s29, 1
    %p488 = scmp.ne.s32.totalorder %s483, %s485
    %p489 = scmp.eq.s32.totalorder %s29, 0
    %p490 = por %p488, %p489
    %p491 = scmp.ne.s32.totalorder %s483, %s485
    %p492 = scmp.eq.s32.totalorder %s34, 1
    %p493 = por %p491, %p492
    %p494 = scmp.ne.s32.totalorder %s485, %s486
    %p495 = scmp.eq.s32.totalorder %s34, 0
    %p496 = por %p494, %p495
    %p497 = scmp.ne.s32.totalorder %s485, %s486
    %p498 = scmp.eq.s32.totalorder %s35, 1
    %p499 = por %p497, %p498
    %p501 = scmp.ne.s32.totalorder %s486, %s500
    %p502 = scmp.eq.s32.totalorder %s35, 0
    %p503 = por %p501, %p502
    %s505 = sadd.s32 %s504, 1
    %p508 = scmp.eq.s32.totalorder %s29, 1
    %p509 = scmp.ne.s32.totalorder %s504, %s506
    %p510 = scmp.eq.s32.totalorder %s29, 0
    %p511 = por %p509, %p510
    %p512 = scmp.ne.s32.totalorder %s504, %s506
    %p513 = scmp.eq.s32.totalorder %s34, 1
    %p514 = por %p512, %p513
    %p515 = scmp.ne.s32.totalorder %s506, %s507
    %p516 = scmp.eq.s32.totalorder %s34, 0
    %p517 = por %p515, %p516
    %p518 = scmp.ne.s32.totalorder %s506, %s507
    %p519 = scmp.eq.s32.totalorder %s35, 1
    %p520 = por %p518, %p519
    %p522 = scmp.ne.s32.totalorder %s507, %s521
    %p523 = scmp.eq.s32.totalorder %s35, 0
    %p524 = por %p522, %p523
    %s525 = ssub.s32 %s29, %s36
    %p526 = scmp.eq.s32.totalorder %s525, 0
    %s528 = sadd.s32 %s527, 1
    %s529 = scalar_select %p526, %s527, %s528
    %p532 = pneg %p526
    %p533 = scmp.eq.s32.totalorder %s29, 1
    %p534 = por %p532, %p533
    %p535 = scmp.ne.s32.totalorder %s527, %s530
    %p536 = scmp.eq.s32.totalorder %s29, 0
    %p537 = por %p535, %p536
    %p538 = scmp.ne.s32.totalorder %s527, %s530
    %p539 = scmp.eq.s32.totalorder %s34, 1
    %p540 = por %p538, %p539
    %p541 = scmp.ne.s32.totalorder %s530, %s531
    %p542 = scmp.eq.s32.totalorder %s34, 0
    %p543 = por %p541, %p542
    %p544 = scmp.ne.s32.totalorder %s530, %s531
    %p545 = scmp.eq.s32.totalorder %s35, 1
    %p546 = por %p544, %p545
    %p548 = scmp.ne.s32.totalorder %s531, %s547
    %p549 = scmp.eq.s32.totalorder %s35, 0
    %p550 = por %p548, %p549
    %p551 = scmp.le.s32.totalorder 1, %s29
    %p552 = scmp.lt.s32.totalorder %s29, 3
    %p553 = pnand %p551, %p552
    %p554 = pneg %p553
    // Predicated region
    $region9: #{clip_image_encode.1} parent=5 // pred_check
      _
    $region10: #{clip_image_encode.1} parent=5 // pred_check_branch
      %556 = sbr.rel (%p553) target = $region12
    $region11: #{clip_image_encode.1} parent=5 // pred_region
      %s557 = ssub.s32 %s29, 1
      // Predicated region
      $region13: #{clip_image_encode.1} parent=11 // pred_check
        %p558 = pneg %p76
      $region14: #{clip_image_encode.1} parent=11 // pred_check_branch
        %560 = sbr.rel (%p558) target = $region16
      $region15: #{clip_image_encode.1} parent=11 // pred_region
        _
      $region16: #{clip_image_encode.1} parent=11 // pred_fallthru
        _
      // Predicated region
      $region17: #{clip_image_encode.1} parent=11 // pred_check
        %p561 = pneg %p97
      $region18: #{clip_image_encode.1} parent=11 // pred_check_branch
        %563 = sbr.rel (%p561) target = $region20
      $region19: #{clip_image_encode.1} parent=11 // pred_region
        _
      $region20: #{clip_image_encode.1} parent=11 // pred_fallthru
        _
      // Predicated region
      $region21: #{clip_image_encode.1} parent=11 // pred_check
        %p564 = pneg %p118
      $region22: #{clip_image_encode.1} parent=11 // pred_check_branch
        %566 = sbr.rel (%p564) target = $region24
      $region23: #{clip_image_encode.1} parent=11 // pred_region
        _
      $region24: #{clip_image_encode.1} parent=11 // pred_fallthru
        _
      // Predicated region
      $region25: #{clip_image_encode.1} parent=11 // pred_check
        %p567 = pneg %p139
      $region26: #{clip_image_encode.1} parent=11 // pred_check_branch
        %569 = sbr.rel (%p567) target = $region28
      $region27: #{clip_image_encode.1} parent=11 // pred_region
        _
      $region28: #{clip_image_encode.1} parent=11 // pred_fallthru
        _
      // Predicated region
      $region29: #{clip_image_encode.1} parent=11 // pred_check
        %p570 = pneg %p160
      $region30: #{clip_image_encode.1} parent=11 // pred_check_branch
        %572 = sbr.rel (%p570) target = $region32
      $region31: #{clip_image_encode.1} parent=11 // pred_region
        _
      $region32: #{clip_image_encode.1} parent=11 // pred_fallthru
        _
      // Predicated region
      $region33: #{clip_image_encode.1} parent=11 // pred_check
        %p573 = pneg %p181
      $region34: #{clip_image_encode.1} parent=11 // pred_check_branch
        %575 = sbr.rel (%p573) target = $region36
      $region35: #{clip_image_encode.1} parent=11 // pred_region
        _
      $region36: #{clip_image_encode.1} parent=11 // pred_fallthru
        _
      // Predicated region
      $region37: #{clip_image_encode.1} parent=11 // pred_check
        %p576 = pneg %p202
      $region38: #{clip_image_encode.1} parent=11 // pred_check_branch
        %578 = sbr.rel (%p576) target = $region40
      $region39: #{clip_image_encode.1} parent=11 // pred_region
        _
      $region40: #{clip_image_encode.1} parent=11 // pred_fallthru
        _
      // Predicated region
      $region41: #{clip_image_encode.1} parent=11 // pred_check
        %p579 = pneg %p223
      $region42: #{clip_image_encode.1} parent=11 // pred_check_branch
        %581 = sbr.rel (%p579) target = $region44
      $region43: #{clip_image_encode.1} parent=11 // pred_region
        _
      $region44: #{clip_image_encode.1} parent=11 // pred_fallthru
        _
      // Predicated region
      $region45: #{clip_image_encode.1} parent=11 // pred_check
        %p582 = pneg %p244
      $region46: #{clip_image_encode.1} parent=11 // pred_check_branch
        %584 = sbr.rel (%p582) target = $region48
      $region47: #{clip_image_encode.1} parent=11 // pred_region
        _
      $region48: #{clip_image_encode.1} parent=11 // pred_fallthru
        _
      // Predicated region
      $region49: #{clip_image_encode.1} parent=11 // pred_check
        %p585 = pneg %p265
      $region50: #{clip_image_encode.1} parent=11 // pred_check_branch
        %587 = sbr.rel (%p585) target = $region52
      $region51: #{clip_image_encode.1} parent=11 // pred_region
        _
      $region52: #{clip_image_encode.1} parent=11 // pred_fallthru
        _
      // Predicated region
      $region53: #{clip_image_encode.1} parent=11 // pred_check
        %p588 = pneg %p286
      $region54: #{clip_image_encode.1} parent=11 // pred_check_branch
        %590 = sbr.rel (%p588) target = $region56
      $region55: #{clip_image_encode.1} parent=11 // pred_region
        _
      $region56: #{clip_image_encode.1} parent=11 // pred_fallthru
        _
      // Predicated region
      $region57: #{clip_image_encode.1} parent=11 // pred_check
        %p591 = pneg %p307
      $region58: #{clip_image_encode.1} parent=11 // pred_check_branch
        %593 = sbr.rel (%p591) target = $region60
      $region59: #{clip_image_encode.1} parent=11 // pred_region
        _
      $region60: #{clip_image_encode.1} parent=11 // pred_fallthru
        _
      // Predicated region
      $region61: #{clip_image_encode.1} parent=11 // pred_check
        %p594 = pneg %p328
      $region62: #{clip_image_encode.1} parent=11 // pred_check_branch
        %596 = sbr.rel (%p594) target = $region64
      $region63: #{clip_image_encode.1} parent=11 // pred_region
        _
      $region64: #{clip_image_encode.1} parent=11 // pred_fallthru
        _
      // Predicated region
      $region65: #{clip_image_encode.1} parent=11 // pred_check
        %p597 = pneg %p349
      $region66: #{clip_image_encode.1} parent=11 // pred_check_branch
        %599 = sbr.rel (%p597) target = $region68
      $region67: #{clip_image_encode.1} parent=11 // pred_region
        _
      $region68: #{clip_image_encode.1} parent=11 // pred_fallthru
        _
      // Predicated region
      $region69: #{clip_image_encode.1} parent=11 // pred_check
        %p600 = pneg %p370
      $region70: #{clip_image_encode.1} parent=11 // pred_check_branch
        %602 = sbr.rel (%p600) target = $region72
      $region71: #{clip_image_encode.1} parent=11 // pred_region
        _
      $region72: #{clip_image_encode.1} parent=11 // pred_fallthru
        _
      // Predicated region
      $region73: #{clip_image_encode.1} parent=11 // pred_check
        %p603 = pneg %p391
      $region74: #{clip_image_encode.1} parent=11 // pred_check_branch
        %605 = sbr.rel (%p603) target = $region76
      $region75: #{clip_image_encode.1} parent=11 // pred_region
        _
      $region76: #{clip_image_encode.1} parent=11 // pred_fallthru
        _
      // Predicated region
      $region77: #{clip_image_encode.1} parent=11 // pred_check
        %p606 = pneg %p412
      $region78: #{clip_image_encode.1} parent=11 // pred_check_branch
        %608 = sbr.rel (%p606) target = $region80
      $region79: #{clip_image_encode.1} parent=11 // pred_region
        _
      $region80: #{clip_image_encode.1} parent=11 // pred_fallthru
        _
      // Predicated region
      $region81: #{clip_image_encode.1} parent=11 // pred_check
        %p609 = pneg %p433
      $region82: #{clip_image_encode.1} parent=11 // pred_check_branch
        %611 = sbr.rel (%p609) target = $region84
      $region83: #{clip_image_encode.1} parent=11 // pred_region
        _
      $region84: #{clip_image_encode.1} parent=11 // pred_fallthru
        _
      // Predicated region
      $region85: #{clip_image_encode.1} parent=11 // pred_check
        %p612 = pneg %p454
      $region86: #{clip_image_encode.1} parent=11 // pred_check_branch
        %614 = sbr.rel (%p612) target = $region88
      $region87: #{clip_image_encode.1} parent=11 // pred_region
        _
      $region88: #{clip_image_encode.1} parent=11 // pred_fallthru
        _
      // Predicated region
      $region89: #{clip_image_encode.1} parent=11 // pred_check
        %p615 = pneg %p475
      $region90: #{clip_image_encode.1} parent=11 // pred_check_branch
        %617 = sbr.rel (%p615) target = $region92
      $region91: #{clip_image_encode.1} parent=11 // pred_region
        _
      $region92: #{clip_image_encode.1} parent=11 // pred_fallthru
        _
      // Predicated region
      $region93: #{clip_image_encode.1} parent=11 // pred_check
        %p618 = pneg %p496
      $region94: #{clip_image_encode.1} parent=11 // pred_check_branch
        %620 = sbr.rel (%p618) target = $region96
      $region95: #{clip_image_encode.1} parent=11 // pred_region
        _
      $region96: #{clip_image_encode.1} parent=11 // pred_fallthru
        _
      // Predicated region
      $region97: #{clip_image_encode.1} parent=11 // pred_check
        %p621 = pneg %p517
      $region98: #{clip_image_encode.1} parent=11 // pred_check_branch
        %623 = sbr.rel (%p621) target = $region100
      $region99: #{clip_image_encode.1} parent=11 // pred_region
        _
      $region100: #{clip_image_encode.1} parent=11 // pred_fallthru
        _
    $region12: #{clip_image_encode.1} parent=5 // pred_fallthru
      _
    %p624 = scmp.lt.s32.totalorder %s29, 2
    // Predicated region
    $region101: #{clip_image_encode.1} parent=5 // pred_check
      %p625 = pneg %p624
    $region102: #{clip_image_encode.1} parent=5 // pred_check_branch
      %627 = sbr.rel (%p625) target = $region104
    $region103: #{clip_image_encode.1} parent=5 // pred_region
      // Predicated region
      $region105: #{clip_image_encode.1} parent=103 // pred_check
        %p628 = pneg %p49
      $region106: #{clip_image_encode.1} parent=103 // pred_check_branch
        %630 = sbr.rel (%p628) target = $region108
      $region107: #{clip_image_encode.1} parent=103 // pred_region
        %p631 = scmp.lt.s32.totalorder %s29, 1
        %s632 = scalar_select %p631, %s29, 1
        %s633 = smul.addr %s632, 2
        %s634 = smul.addr %s633, 4
        %s635 = scalar_lea.vmem %s0, %s634
      $region108: #{clip_image_encode.1} parent=103 // pred_fallthru
        _
    $region104: #{clip_image_encode.1} parent=5 // pred_fallthru
      _
    %p636 = scmp.le.s32.totalorder 1, %s29
    %p637 = scmp.lt.s32.totalorder %s29, 3
    %p638 = pnand %p636, %p637
    %p639 = pneg %p638
    // Predicated region
    $region109: #{clip_image_encode.1} parent=5 // pred_check
      _
    $region110: #{clip_image_encode.1} parent=5 // pred_check_branch
      %641 = sbr.rel (%p638) target = $region112
    $region111: #{clip_image_encode.1} parent=5 // pred_region
      %s642 = ssub.s32 %s29, 1
      %p643 = scmp.lt.s32.totalorder %s34, 1
      %s644 = scalar_select %p643, %s34, 1
      %s645 = smul.addr %s644, 2
      %s646 = smul.addr %s645, 4
      %s647 = scalar_lea.vmem %s0, %s646
      %p648 = pneg %p55
      %p649 = pneg %p52
      %p650 = pneg %p76
      %p651 = pneg %p73
      %p652 = pneg %p97
      %p653 = pneg %p94
      %p654 = pneg %p118
      %p655 = pneg %p115
      %p656 = pneg %p139
      %p657 = pneg %p136
      %p658 = pneg %p160
      %p659 = pneg %p157
      %p660 = pneg %p181
      %p661 = pneg %p178
      %p662 = pneg %p202
      %p663 = pneg %p199
      %p664 = pneg %p223
      %p665 = pneg %p220
      %p666 = pneg %p244
      %p667 = pneg %p241
      %p668 = pneg %p265
      %p669 = pneg %p262
      %p670 = pneg %p286
      %p671 = pneg %p283
      %p672 = pneg %p307
      %p673 = pneg %p304
      %p674 = pneg %p328
      %p675 = pneg %p325
      %p676 = pneg %p349
      %p677 = pneg %p346
      %p678 = pneg %p370
      %p679 = pneg %p367
      %p680 = pneg %p391
      %p681 = pneg %p388
      %p682 = pneg %p412
      %p683 = pneg %p409
      %p684 = pneg %p433
      %p685 = pneg %p430
      %p686 = pneg %p454
      %p687 = pneg %p451
      %p688 = pneg %p475
      %p689 = pneg %p472
      %p690 = pneg %p496
      %p691 = pneg %p493
      %p692 = pneg %p517
      %p693 = pneg %p514
      %p694 = pneg %p543
      %p695 = pneg %p540
      %p696 = scmp.lt.s32.totalorder %s34, 1
      %s697 = scalar_select %p696, %s34, 1
      %s698 = smul.addr %s697, 8
      %s699 = scalar_lea.vmem %s23, %s698
      %p700 = scmp.lt.s32.totalorder %s34, 1
      %s701 = scalar_select %p700, %s34, 1
      %s702 = smul.addr %s701, 2
      %s703 = smul.addr %s702, 4
      %s704 = scalar_lea.vmem %s0, %s703
      %p705 = scmp.lt.s32.totalorder %s34, 1
      %s706 = scalar_select %p705, %s34, 1
      %s707 = smul.addr %s706, 8
      %s708 = scalar_lea.vmem %s23, %s707
      %v710 = vld [vmem:[%s704] sm:$0xff]
      %v711 = vadd.f32 %v710, 1.0
      %v712 = vmul.f32 %v711, 0.5
      %v713 = vld [vmem:[%s1] sm:$0x3]
      %v715 = vlaneseq
      %v716 = vshrl.u32 %v715, 7
      %v717 = vsub.s32 0, %v716
      %v718 = vrot.slane %v713, %v717
      %v719 = vlaneseq
      %v720 = vshrl.u32 %v719, 7
      %v721 = vsub.s32 1, %v720
      %v722 = vrot.slane %v713, %v721
      %v723 = vcombine.low %v718, %v722
      %v725 = vsub.f32 %v712, %v723
      %v726 = vld [vmem:[%s2] sm:$0x3]
      %v728 = vlaneseq
      %v729 = vshrl.u32 %v728, 7
      %v730 = vsub.s32 0, %v729
      %v731 = vrot.slane %v726, %v730
      %v732 = vlaneseq
      %v733 = vshrl.u32 %v732, 7
      %v734 = vsub.s32 1, %v733
      %v735 = vrot.slane %v726, %v734
      %v736 = vcombine.low %v731, %v735
      %v738 = vmul.f32 %v725, %v736
      %v739 = vld [vmem:[%s3] sm:$0xf]
      %v740 = vld [vmem:[%s3 + $0x4] sm:$0xf]
      %v741 = vld [vmem:[%s3 + $0x8] sm:$0xf]
      %v742 = vld [vmem:[%s3 + $0xc] sm:$0xf]
      %v743 = vld [vmem:[%s3 + $0x10] sm:$0xf]
      %v744 = vld [vmem:[%s3 + $0x14] sm:$0xf]
      %v745 = vld [vmem:[%s3 + $0x18] sm:$0xf]
      %v746 = vld [vmem:[%s3 + $0x1c] sm:$0xf]
      %v747 = vld [vmem:[%s3 + $0x20] sm:$0xf]
      %v748 = vld [vmem:[%s3 + $0x24] sm:$0xf]
      %v749 = vld [vmem:[%s3 + $0x28] sm:$0xf]
      %v750 = vld [vmem:[%s3 + $0x2c] sm:$0xf]
      %v751 = vld [vmem:[%s3 + $0x30] sm:$0xf]
      %v752 = vld [vmem:[%s3 + $0x34] sm:$0xf]
      %v753 = vld [vmem:[%s3 + $0x38] sm:$0xf]
      %v754 = vld [vmem:[%s3 + $0x3c] sm:$0xf]
      %v755 = vld [vmem:[%s3 + $0x40] sm:$0xf]
      %v756 = vld [vmem:[%s3 + $0x44] sm:$0xf]
      %v757 = vld [vmem:[%s3 + $0x48] sm:$0xf]
      %v758 = vld [vmem:[%s3 + $0x4c] sm:$0xf]
      %v759 = vld [vmem:[%s3 + $0x50] sm:$0xf]
      %v760 = vld [vmem:[%s3 + $0x54] sm:$0xf]
      %v761 = vld [vmem:[%s3 + $0x58] sm:$0xf]
      %v762 = vld [vmem:[%s3 + $0x5c] sm:$0xf]
      %v764 = vcombine.high %v738, %v738
      %v766 = vpack.c.bf16 %v738, %v738
      %v767 = vpack.c.bf16 %v764, %v764
      %v792 = vunpack.c.l.b16 %v739
      %v793 = vunpack.c.l.b16 %v740
      %v794 = vunpack.c.l.b16 %v741
      %v795 = vunpack.c.l.b16 %v742
      %v796 = vunpack.c.l.b16 %v743
      %v797 = vunpack.c.l.b16 %v744
      %v798 = vunpack.c.l.b16 %v745
      %v799 = vunpack.c.l.b16 %v746
      %v800 = vunpack.c.l.b16 %v747
      %v801 = vunpack.c.l.b16 %v748
      %v802 = vunpack.c.l.b16 %v749
      %v803 = vunpack.c.l.b16 %v750
      %v804 = vunpack.c.l.b16 %v751
      %v805 = vunpack.c.l.b16 %v752
      %v806 = vunpack.c.l.b16 %v753
      %v807 = vunpack.c.l.b16 %v754
      %v808 = vunpack.c.l.b16 %v755
      %v809 = vunpack.c.l.b16 %v756
      %v810 = vunpack.c.l.b16 %v757
      %v811 = vunpack.c.l.b16 %v758
      %v812 = vunpack.c.l.b16 %v759
      %v813 = vunpack.c.l.b16 %v760
      %v814 = vunpack.c.l.b16 %v761
      %v815 = vunpack.c.l.b16 %v762
      %v816 = vpack.c.b16 %v793, %v792
      %v817 = vpack.c.b16 %v795, %v794
      %v818 = vpack.c.b16 %v797, %v796
      %v819 = vpack.c.b16 %v799, %v798
      %v820 = vpack.c.b16 %v801, %v800
      %v821 = vpack.c.b16 %v803, %v802
      %v822 = vpack.c.b16 %v805, %v804
      %v823 = vpack.c.b16 %v807, %v806
      %v824 = vpack.c.b16 %v809, %v808
      %v825 = vpack.c.b16 %v811, %v810
      %v826 = vpack.c.b16 %v813, %v812
      %v827 = vpack.c.b16 %v815, %v814
      %vm840 = vcmask 523264
      %v842 = vsel %vm840, %v767, 0
      %844 = vmatprep.subr.bf16.mxu0 0
      %845 = vmatpush1.bf16.msra.mxu0 %v816
      %846 = vmatprep.subr.bf16.mxu0 0
      %847 = vmatpush1.bf16.msra.mxu0 %v817
      %848 = vmatprep.subr.bf16.mxu0 0
      %849 = vmatpush1.bf16.msra.mxu0 %v818
      %850 = vmatprep.subr.bf16.mxu0 0
      %851 = vmatpush1.bf16.msra.mxu0 %v819
      %852 = vmatprep.subr.bf16.mxu0 0
      %853 = vmatpush1.bf16.msra.mxu0 %v820
      %854 = vmatprep.subr.bf16.mxu0 0
      %855 = vmatpush1.bf16.msra.mxu0 %v821
      %856 = vmatprep.subr.bf16.mxu0 0
      %857 = vmatpush1.bf16.msra.mxu0 %v822
      %858 = vmatprep.subr.bf16.mxu0 0
      %859 = vmatpush1.bf16.msra.mxu0 %v823
      %860 = vmatprep.subr.bf16.mxu0 0
      %861 = vmatpush1.bf16.msra.mxu0 %v824
      %862 = vmatprep.subr.bf16.mxu0 0
      %863 = vmatpush1.bf16.msra.mxu0 %v825
      %864 = vmatprep.subr.bf16.mxu0 0
      %865 = vmatpush1.bf16.msra.mxu0 %v826
      %866 = vmatprep.subr.bf16.mxu0 0
      %867 = vmatpush1.bf16.msra.mxu0 %v827
      %868 = vmatprep.subr.bf16.mxu0 0
      %869 = vmatpush1.bf16.msra.mxu0 0
      %870 = vmatprep.subr.bf16.mxu0 0
      %871 = vmatpush1.bf16.msra.mxu0 0
      %872 = vmatprep.subr.bf16.mxu0 0
      %873 = vmatpush1.bf16.msra.mxu0 0
      %874 = vmatprep.subr.bf16.mxu0 0
      %875 = vmatpush1.bf16.msra.mxu0 0
      %876 = vmatprep.mubr.bf16.mxu0 %v842
      %877 = vmatmul.mubr.bf16.gmra.mrb[0].mxu0 %v766
      %v878 = vpop.f32.mrb[0].mxu0
      %v879 = vadd.f32 0.0, %v878
      %v880 = vpop.f32.mrb[0].mxu0
      %v881 = vpop.f32.mrb[0].mxu0
      %v882 = vpop.f32.mrb[0].mxu0
      %883 = vdwg.mxu0
      %v884 = vld [vmem:[%s5] sm:$0x1f]
      %v885 = vld [vmem:[%s4] sm:$0x1]
      %v886 = vadd.f32 %v884, %v885
      %vm887 = vcmask 516096
      %888 = vst.msk [vmem:[#allocation2] sm:$0x1] %vm887, %v886
      %v890 = vrot.slane %v879, 7
      %v892 = vadd.f32 %v884, %v890
      %vm893 = vcmask 520193
      %894 = vst.msk [vmem:[#allocation2] sm:$0x1e] %vm893, %v892
      %v895 = vld [vmem:[#allocation2] sm:$0x1f]
      %v896 = vld [vmem:[%s6] sm:$0x1]
      %v897 = vld [vmem:[%s7] sm:$0x1]
      %vm898 = vcmask 520192
      %v899 = vsel %vm898, %v895, 0.0
      %900 = vadd.xlane.f32.xlu0 %v899
      %v901 = vpop.xlane.xlu0 %900
      %v902 = vrcp.pop 64.0
      %v903 = vmul.f32 %v901, %v902
      %v904 = vsub.f32 %v895, %v903
      %v905 = vmul.f32 %v904, %v904
      %v906 = vsel %vm898, %v905, 0.0
      %907 = vadd.xlane.f32.xlu0 %v906
      %v908 = vpop.xlane.xlu0 %907
      %v909 = vmul.f32 %v908, %v902
      %v910 = vadd.f32 %v909, 1e-05
      %v911 = vrsqrt.pop %v910
      %v912 = vmul.f32 %v904, %v911
      %v914 = vlaneseq
      %v915 = vshrl.u32 %v914, 7
      %v916 = vsub.s32 0, %v915
      %v917 = vrot.slane %v896, %v916
      %v919 = vmul.f32 %v912, %v917
      %v921 = vlaneseq
      %v922 = vshrl.u32 %v921, 7
      %v923 = vsub.s32 0, %v922
      %v924 = vrot.slane %v897, %v923
      %v926 = vadd.f32 %v919, %v924
      %v927 = vld [vmem:[%s8] sm:$0x1]
      %v928 = vld [vmem:[%s9] sm:$0x1]
      %v929 = vsel %vm898, %v926, 0.0
      %930 = vadd.xlane.f32.xlu0 %v929
      %v931 = vpop.xlane.xlu0 %930
      %v932 = vmul.f32 %v931, %v902
      %v933 = vsub.f32 %v926, %v932
      %v934 = vmul.f32 %v933, %v933
      %v935 = vsel %vm898, %v934, 0.0
      %936 = vadd.xlane.f32.xlu0 %v935
      %v937 = vpop.xlane.xlu0 %936
      %v938 = vmul.f32 %v937, %v902
      %v939 = vadd.f32 %v938, 1e-05
      %v940 = vrsqrt.pop %v939
      %v941 = vmul.f32 %v933, %v940
      %v943 = vlaneseq
      %v944 = vshrl.u32 %v943, 7
      %v945 = vsub.s32 0, %v944
      %v946 = vrot.slane %v927, %v945
      %v948 = vmul.f32 %v941, %v946
      %v950 = vlaneseq
      %v951 = vshrl.u32 %v950, 7
      %v952 = vsub.s32 0, %v951
      %v953 = vrot.slane %v928, %v952
      %v955 = vadd.f32 %v948, %v953
      %v956 = vld [vmem:[%s10] sm:$0xff]
      %v957 = vld [vmem:[%s10 + $0x8] sm:$0xff]
      %v958 = vld [vmem:[%s10 + $0x10] sm:$0xff]
      %v959 = vld [vmem:[%s10 + $0x18] sm:$0xff]
      %v960 = vld [vmem:[%s10 + $0x20] sm:$0xff]
      %v961 = vld [vmem:[%s10 + $0x28] sm:$0xff]
      %v962 = vld [vmem:[%s10 + $0x30] sm:$0xff]
      %v963 = vld [vmem:[%s10 + $0x38] sm:$0xff]
      %v964 = vpack.c.bf16 %v955, %v955
      %v965 = vld [vmem:[%s11] sm:$0x3]
      %v967 = vlaneseq
      %v968 = vshrl.u32 %v967, 7
      %v969 = vsub.s32 0, %v968
      %v970 = vrot.slane %v965, %v969
      %v971 = vlaneseq
      %v972 = vshrl.u32 %v971, 7
      %v973 = vsub.s32 1, %v972
      %v974 = vrot.slane %v965, %v973
      %v985 = vunpack.c.l.b16 %v956
      %v986 = vunpack.c.h.b16 %v956
      %v987 = vunpack.c.l.b16 %v957
      %v988 = vunpack.c.h.b16 %v957
      %v989 = vunpack.c.l.b16 %v958
      %v990 = vunpack.c.h.b16 %v958
      %v991 = vunpack.c.l.b16 %v959
      %v992 = vunpack.c.h.b16 %v959
      %v993 = vunpack.c.l.b16 %v960
      %v994 = vunpack.c.h.b16 %v960
      %v995 = vunpack.c.l.b16 %v961
      %v996 = vunpack.c.h.b16 %v961
      %v997 = vunpack.c.l.b16 %v962
      %v998 = vunpack.c.h.b16 %v962
      %v999 = vunpack.c.l.b16 %v963
      %v1000 = vunpack.c.h.b16 %v963
      %v1001 = vpack.c.b16 %v987, %v985
      %v1002 = vpack.c.b16 %v988, %v986
      %v1003 = vpack.c.b16 %v991, %v989
      %v1004 = vpack.c.b16 %v992, %v990
      %v1005 = vpack.c.b16 %v995, %v993
      %v1006 = vpack.c.b16 %v996, %v994
      %v1007 = vpack.c.b16 %v999, %v997
      %v1008 = vpack.c.b16 %v1000, %v998
      %v1018 = vsel %vm840, %v964, 0
      %1020 = vmatprep.subr.bf16.mxu0 %v1002
      %1021 = vmatpush1.bf16.msra.mxu0 %v1001
      %1022 = vmatprep.subr.bf16.mxu0 %v1004
      %1023 = vmatpush1.bf16.msra.mxu0 %v1003
      %1024 = vmatprep.subr.bf16.mxu0 %v1006
      %1025 = vmatpush1.bf16.msra.mxu0 %v1005
      %1026 = vmatprep.subr.bf16.mxu0 %v1008
      %1027 = vmatpush1.bf16.msra.mxu0 %v1007
      %1028 = vmatprep.subr.bf16.mxu0 0
      %1029 = vmatpush1.bf16.msra.mxu0 0
      %1030 = vmatprep.subr.bf16.mxu0 0
      %1031 = vmatpush1.bf16.msra.mxu0 0
      %1032 = vmatprep.subr.bf16.mxu0 0
      %1033 = vmatpush1.bf16.msra.mxu0 0
      %1034 = vmatprep.subr.bf16.mxu0 0
      %1035 = vmatpush1.bf16.msra.mxu0 0
      %1036 = vmatprep.subr.bf16.mxu0 0
      %1037 = vmatpush1.bf16.msra.mxu0 0
      %1038 = vmatprep.subr.bf16.mxu0 0
      %1039 = vmatpush1.bf16.msra.mxu0 0
      %1040 = vmatprep.subr.bf16.mxu0 0
      %1041 = vmatpush1.bf16.msra.mxu0 0
      %1042 = vmatprep.subr.bf16.mxu0 0
      %1043 = vmatpush1.bf16.msra.mxu0 0
      %1044 = vmatprep.subr.bf16.mxu0 0
      %1045 = vmatpush1.bf16.msra.mxu0 0
      %1046 = vmatprep.subr.bf16.mxu0 0
      %1047 = vmatpush1.bf16.msra.mxu0 0
      %1048 = vmatprep.subr.bf16.mxu0 0
      %1049 = vmatpush1.bf16.msra.mxu0 0
      %1050 = vmatprep.subr.bf16.mxu0 0
      %1051 = vmatpush1.bf16.msra.mxu0 0
      %1052 = vmatprep.mubr.bf16.mxu0 0
      %1053 = vmatmul.mubr.bf16.gmra.mrb[0].mxu0 %v1018
      %v1054 = vpop.f32.mrb[0].mxu0
      %v1055 = vadd.f32 %v970, %v1054
      %v1056 = vpop.f32.mrb[0].mxu0
      %v1057 = vadd.f32 %v974, %v1056
      %v1058 = vpop.f32.mrb[0].mxu0
      %v1059 = vpop.f32.mrb[0].mxu0
      %1060 = vdwg.mxu0
      %v1061 = vld [vmem:[%s12] sm:$0xf]
      %v1062 = vld [vmem:[%s12 + $0x4] sm:$0xf]
      %v1063 = vld [vmem:[%s12 + $0x8] sm:$0xf]
      %v1064 = vld [vmem:[%s12 + $0xc] sm:$0xf]
      %v1065 = vld [vmem:[%s12 + $0x10] sm:$0xf]
      %v1066 = vld [vmem:[%s12 + $0x14] sm:$0xf]
      %v1067 = vld [vmem:[%s12 + $0x18] sm:$0xf]
      %v1068 = vld [vmem:[%s12 + $0x1c] sm:$0xf]
      %v1069 = vpack.c.bf16 %v1055, %v1055
      %1071 = vrot.lane.b32.xlu0 %v1069, 64
      %v1072 = vpop.permute.xlu0 %1071
      %vm1073 = vcmask 261120
      %v1075 = vsel %vm1073, %v1069, 0
      %v1078 = vsel %vm1073, %v1072, 0
      %1080 = vmatprep.subr.bf16.mxu0 0
      %1081 = vmatpush1.bf16.xpose.msra.mxu0 %v1078
      %1082 = vmatprep.subr.bf16.mxu0 0
      %1083 = vmatpush1.bf16.xpose.msra.mxu0 0
      %1084 = vmatprep.subr.bf16.mxu0 0
      %1085 = vmatpush1.bf16.xpose.msra.mxu0 0
      %1086 = vmatprep.subr.bf16.mxu0 0
      %1087 = vmatpush1.bf16.xpose.msra.mxu0 0
      %1088 = vmatprep.subr.bf16.mxu0 0
      %1089 = vmatpush1.bf16.xpose.msra.mxu0 0
      %1090 = vmatprep.subr.bf16.mxu0 0
      %1091 = vmatpush1.bf16.xpose.msra.mxu0 0
      %1092 = vmatprep.subr.bf16.mxu0 0
      %1093 = vmatpush1.bf16.xpose.msra.mxu0 0
      %1094 = vmatprep.subr.bf16.mxu0 0
      %1095 = vmatpush1.bf16.xpose.msra.mxu0 0
      %1096 = vmatprep.subr.bf16.mxu0 0
      %1097 = vmatpush1.bf16.xpose.msra.mxu0 0
      %1098 = vmatprep.subr.bf16.mxu0 0
      %1099 = vmatpush1.bf16.xpose.msra.mxu0 0
      %1100 = vmatprep.subr.bf16.mxu0 0
      %1101 = vmatpush1.bf16.xpose.msra.mxu0 0
      %1102 = vmatprep.subr.bf16.mxu0 0
      %1103 = vmatpush1.bf16.xpose.msra.mxu0 0
      %1104 = vmatprep.subr.bf16.mxu0 0
      %1105 = vmatpush1.bf16.xpose.msra.mxu0 0
      %1106 = vmatprep.subr.bf16.mxu0 0
      %1107 = vmatpush1.bf16.xpose.msra.mxu0 0
      %1108 = vmatprep.subr.bf16.mxu0 0
      %1109 = vmatpush1.bf16.xpose.msra.mxu0 0
      %1110 = vmatprep.subr.bf16.mxu0 0
      %1111 = vmatpush1.bf16.xpose.msra.mxu0 0
      %1112 = vmatprep.mubr.bf16.mxu0 0
      %1113 = vmatmul.mubr.bf16.gmra.mrb[0].mxu0 %v1075
      %v1114 = vpop.f32.mrb[0].mxu0
      %v1115 = vadd.f32 0.0, %v1114
      %v1116 = vpop.f32.mrb[0].mxu0
      %v1117 = vpop.f32.mrb[0].mxu0
      %v1118 = vpop.f32.mrb[0].mxu0
      %1119 = vdwg.mxu0
      %v1120 = vmul.f32 %v1115, 0.17677669
      %vm1121 = vcmask 36864
      %v1122 = vsel %vm1121, %v1120, -inf
      %1123 = vmax.xlane.f32.xlu0 %v1122
      %v1124 = vpop.xlane.xlu0 %1123
      %v1125 = vsub.f32 %v1120, %v1124
      %v1126 = vmul.f32 %v1125, 1.442695
      %v1127 = vpow.pop %v1126
      %v1128 = vsel %vm1121, %v1127, 0.0
      %1129 = vadd.xlane.f32.xlu0 %v1128
      %v1130 = vpop.xlane.xlu0 %1129
      %v1131 = vpack.c.bf16 %v1127, %v1127
      %v1132 = vpack.c.bf16 %v1057, %v1057
      %vm1133 = vcmask 39936
      %v1135 = vsel %vm1133, %v1131, 0
      %vm1137 = vcmask 1041408
      %vm1138 = vcmask 1042432
      %v1139 = vsel %vm1137, 4294967295, 65535
      %v1140 = vsel %vm1138, %v1139, 0
      %v1142 = vand.u32 %v1132, %v1140
      %1144 = vmatprep.subr.bf16.mxu0 0
      %1145 = vmatpush1.bf16.msra.mxu0 %v1142
      %1146 = vmatprep.subr.bf16.mxu0 0
      %1147 = vmatpush1.bf16.msra.mxu0 0
      %1148 = vmatprep.subr.bf16.mxu0 0
      %1149 = vmatpush1.bf16.msra.mxu0 0
      %1150 = vmatprep.subr.bf16.mxu0 0
      %1151 = vmatpush1.bf16.msra.mxu0 0
      %1152 = vmatprep.subr.bf16.mxu0 0
      %1153 = vmatpush1.bf16.msra.mxu0 0
      %1154 = vmatprep.subr.bf16.mxu0 0
      %1155 = vmatpush1.bf16.msra.mxu0 0
      %1156 = vmatprep.subr.bf16.mxu0 0
      %1157 = vmatpush1.bf16.msra.mxu0 0
      %1158 = vmatprep.subr.bf16.mxu0 0
      %1159 = vmatpush1.bf16.msra.mxu0 0
      %1160 = vmatprep.subr.bf16.mxu0 0
      %1161 = vmatpush1.bf16.msra.mxu0 0
      %1162 = vmatprep.subr.bf16.mxu0 0
      %1163 = vmatpush1.bf16.msra.mxu0 0
      %1164 = vmatprep.subr.bf16.mxu0 0
      %1165 = vmatpush1.bf16.msra.mxu0 0
      %1166 = vmatprep.subr.bf16.mxu0 0
      %1167 = vmatpush1.bf16.msra.mxu0 0
      %1168 = vmatprep.subr.bf16.mxu0 0
      %1169 = vmatpush1.bf16.msra.mxu0 0
      %1170 = vmatprep.subr.bf16.mxu0 0
      %1171 = vmatpush1.bf16.msra.mxu0 0
      %1172 = vmatprep.subr.bf16.mxu0 0
      %1173 = vmatpush1.bf16.msra.mxu0 0
      %1174 = vmatprep.subr.bf16.mxu0 0
      %1175 = vmatpush1.bf16.msra.mxu0 0
      %1176 = vmatprep.mubr.bf16.mxu0 0
      %1177 = vmatmul.mubr.bf16.gmra.mrb[0].mxu0 %v1135
      %v1178 = vpop.f32.mrb[0].mxu0
      %v1179 = vadd.f32 0.0, %v1178
      %v1180 = vpop.f32.mrb[0].mxu0
      %v1181 = vpop.f32.mrb[0].mxu0
      %v1182 = vpop.f32.mrb[0].mxu0
      %1183 = vdwg.mxu0
      %v1184 = vrcp.pop %v1130
      %v1185 = vmul.f32 %v1179, %v1184
      %v1186 = vpack.c.bf16 %v1185, %v1185
      %1187 = vrot.lane.b32.xlu0 %v1069, 96
      %v1188 = vpop.permute.xlu0 %1187
      %1189 = vrot.lane.b32.xlu0 %v1069, 32
      %v1190 = vpop.permute.xlu0 %1189
      %v1192 = vsel %vm1073, %v1188, 0
      %v1195 = vsel %vm1073, %v1190, 0
      %1197 = vmatprep.subr.bf16.mxu0 0
      %1198 = vmatpush1.bf16.xpose.msra.mxu0 %v1195
      %1199 = vmatprep.subr.bf16.mxu0 0
      %1200 = vmatpush1.bf16.xpose.msra.mxu0 0
      %1201 = vmatprep.subr.bf16.mxu0 0
      %1202 = vmatpush1.bf16.xpose.msra.mxu0 0
      %1203 = vmatprep.subr.bf16.mxu0 0
      %1204 = vmatpush1.bf16.xpose.msra.mxu0 0
      %1205 = vmatprep.subr.bf16.mxu0 0
      %1206 = vmatpush1.bf16.xpose.msra.mxu0 0
      %1207 = vmatprep.subr.bf16.mxu0 0
      %1208 = vmatpush1.bf16.xpose.msra.mxu0 0
      %1209 = vmatprep.subr.bf16.mxu0 0
      %1210 = vmatpush1.bf16.xpose.msra.mxu0 0
      %1211 = vmatprep.subr.bf16.mxu0 0
      %1212 = vmatpush1.bf16.xpose.msra.mxu0 0
      %1213 = vmatprep.subr.bf16.mxu0 0
      %1214 = vmatpush1.bf16.xpose.msra.mxu0 0
      %1215 = vmatprep.subr.bf16.mxu0 0
      %1216 = vmatpush1.bf16.xpose.msra.mxu0 0
      %1217 = vmatprep.subr.bf16.mxu0 0
      %1218 = vmatpush1.bf16.xpose.msra.mxu0 0
      %1219 = vmatprep.subr.bf16.mxu0 0
      %1220 = vmatpush1.bf16.xpose.msra.mxu0 0
      %1221 = vmatprep.subr.bf16.mxu0 0
      %1222 = vmatpush1.bf16.xpose.msra.mxu0 0
      %1223 = vmatprep.subr.bf16.mxu0 0
      %1224 = vmatpush1.bf16.xpose.msra.mxu0 0
      %1225 = vmatprep.subr.bf16.mxu0 0
      %1226 = vmatpush1.bf16.xpose.msra.mxu0 0
      %1227 = vmatprep.subr.bf16.mxu0 0
      %1228 = vmatpush1.bf16.xpose.msra.mxu0 0
      %1229 = vmatprep.mubr.bf16.mxu0 0
      %1230 = vmatmul.mubr.bf16.gmra.mrb[0].mxu0 %v1192
      %v1231 = vpop.f32.mrb[0].mxu0
      %v1232 = vadd.f32 0.0, %v1231
      %v1233 = vpop.f32.mrb[0].mxu0
      %v1234 = vpop.f32.mrb[0].mxu0
      %v1235 = vpop.f32.mrb[0].mxu0
      %1236 = vdwg.mxu0
      %v1237 = vmul.f32 %v1232, 0.17677669
      %v1238 = vsel %vm1121, %v1237, -inf
      %1239 = vmax.xlane.f32.xlu0 %v1238
      %v1240 = vpop.xlane.xlu0 %1239
      %v1241 = vsub.f32 %v1237, %v1240
      %v1242 = vmul.f32 %v1241, 1.442695
      %v1243 = vpow.pop %v1242
      %v1244 = vsel %vm1121, %v1243, 0.0
      %1245 = vadd.xlane.f32.xlu0 %v1244
      %v1246 = vpop.xlane.xlu0 %1245
      %v1247 = vpack.c.bf16 %v1243, %v1243
      %1249 = vrot.lane.b32.xlu0 %v1132, 96
      %v1250 = vpop.permute.xlu0 %1249
      %v1252 = vsel %vm1133, %v1247, 0
      %v1255 = vand.u32 %v1250, %v1140
      %1257 = vmatprep.subr.bf16.mxu0 0
      %1258 = vmatpush1.bf16.msra.mxu0 %v1255
      %1259 = vmatprep.subr.bf16.mxu0 0
      %1260 = vmatpush1.bf16.msra.mxu0 0
      %1261 = vmatprep.subr.bf16.mxu0 0
      %1262 = vmatpush1.bf16.msra.mxu0 0
      %1263 = vmatprep.subr.bf16.mxu0 0
      %1264 = vmatpush1.bf16.msra.mxu0 0
      %1265 = vmatprep.subr.bf16.mxu0 0
      %1266 = vmatpush1.bf16.msra.mxu0 0
      %1267 = vmatprep.subr.bf16.mxu0 0
      %1268 = vmatpush1.bf16.msra.mxu0 0
      %1269 = vmatprep.subr.bf16.mxu0 0
      %1270 = vmatpush1.bf16.msra.mxu0 0
      %1271 = vmatprep.subr.bf16.mxu0 0
      %1272 = vmatpush1.bf16.msra.mxu0 0
      %1273 = vmatprep.subr.bf16.mxu0 0
      %1274 = vmatpush1.bf16.msra.mxu0 0
      %1275 = vmatprep.subr.bf16.mxu0 0
      %1276 = vmatpush1.bf16.msra.mxu0 0
      %1277 = vmatprep.subr.bf16.mxu0 0
      %1278 = vmatpush1.bf16.msra.mxu0 0
      %1279 = vmatprep.subr.bf16.mxu0 0
      %1280 = vmatpush1.bf16.msra.mxu0 0
      %1281 = vmatprep.subr.bf16.mxu0 0
      %1282 = vmatpush1.bf16.msra.mxu0 0
      %1283 = vmatprep.subr.bf16.mxu0 0
      %1284 = vmatpush1.bf16.msra.mxu0 0
      %1285 = vmatprep.subr.bf16.mxu0 0
      %1286 = vmatpush1.bf16.msra.mxu0 0
      %1287 = vmatprep.subr.bf16.mxu0 0
      %1288 = vmatpush1.bf16.msra.mxu0 0
      %1289 = vmatprep.mubr.bf16.mxu0 0
      %1290 = vmatmul.mubr.bf16.gmra.mrb[0].mxu0 %v1252
      %v1291 = vpop.f32.mrb[0].mxu0
      %v1292 = vadd.f32 0.0, %v1291
      %v1293 = vpop.f32.mrb[0].mxu0
      %v1294 = vpop.f32.mrb[0].mxu0
      %v1295 = vpop.f32.mrb[0].mxu0
      %1296 = vdwg.mxu0
      %v1297 = vrcp.pop %v1246
      %v1298 = vmul.f32 %v1292, %v1297
      %v1299 = vpack.c.bf16 %v1298, %v1298
      %v1304 = vunpack.c.l.b16 %v1065
      %v1305 = vunpack.c.l.b16 %v1066
      %v1306 = vunpack.c.l.b16 %v1067
      %v1307 = vunpack.c.l.b16 %v1068
      %v1308 = vpack.c.b16 %v1305, %v1304
      %v1309 = vpack.c.b16 %v1307, %v1306
      %v1313 = vsel %vm1073, %v1299, 0
      %1315 = vmatprep.subr.bf16.mxu0 0
      %1316 = vmatpush1.bf16.msra.mxu0 %v1308
      %1317 = vmatprep.subr.bf16.mxu0 0
      %1318 = vmatpush1.bf16.msra.mxu0 %v1309
      %1319 = vmatprep.subr.bf16.mxu0 0
      %1320 = vmatpush1.bf16.msra.mxu0 0
      %1321 = vmatprep.subr.bf16.mxu0 0
      %1322 = vmatpush1.bf16.msra.mxu0 0
      %1323 = vmatprep.subr.bf16.mxu0 0
      %1324 = vmatpush1.bf16.msra.mxu0 0
      %1325 = vmatprep.subr.bf16.mxu0 0
      %1326 = vmatpush1.bf16.msra.mxu0 0
      %1327 = vmatprep.subr.bf16.mxu0 0
      %1328 = vmatpush1.bf16.msra.mxu0 0
      %1329 = vmatprep.subr.bf16.mxu0 0
      %1330 = vmatpush1.bf16.msra.mxu0 0
      %1331 = vmatprep.subr.bf16.mxu0 0
      %1332 = vmatpush1.bf16.msra.mxu0 0
      %1333 = vmatprep.subr.bf16.mxu0 0
      %1334 = vmatpush1.bf16.msra.mxu0 0
      %1335 = vmatprep.subr.bf16.mxu0 0
      %1336 = vmatpush1.bf16.msra.mxu0 0
      %1337 = vmatprep.subr.bf16.mxu0 0
      %1338 = vmatpush1.bf16.msra.mxu0 0
      %1339 = vmatprep.subr.bf16.mxu0 0
      %1340 = vmatpush1.bf16.msra.mxu0 0
      %1341 = vmatprep.subr.bf16.mxu0 0
      %1342 = vmatpush1.bf16.msra.mxu0 0
      %1343 = vmatprep.subr.bf16.mxu0 0
      %1344 = vmatpush1.bf16.msra.mxu0 0
      %1345 = vmatprep.subr.bf16.mxu0 0
      %1346 = vmatpush1.bf16.msra.mxu0 0
      %1347 = vmatprep.mubr.bf16.mxu0 0
      %1348 = vmatmul.mubr.bf16.gmra.mrb[0].mxu0 %v1313
      %v1349 = vpop.f32.mrb[0].mxu0
      %v1350 = vadd.f32 0.0, %v1349
      %v1351 = vpop.f32.mrb[0].mxu0
      %v1352 = vpop.f32.mrb[0].mxu0
      %v1353 = vpop.f32.mrb[0].mxu0
      %1354 = vdwg.mxu0
      %v1359 = vunpack.c.l.b16 %v1061
      %v1360 = vunpack.c.l.b16 %v1062
      %v1361 = vunpack.c.l.b16 %v1063
      %v1362 = vunpack.c.l.b16 %v1064
      %v1363 = vpack.c.b16 %v1360, %v1359
      %v1364 = vpack.c.b16 %v1362, %v1361
      %v1368 = vsel %vm1073, %v1186, 0
      %1370 = vmatprep.subr.bf16.mxu0 0
      %1371 = vmatpush1.bf16.msra.mxu0 %v1363
      %1372 = vmatprep.subr.bf16.mxu0 0
      %1373 = vmatpush1.bf16.msra.mxu0 %v1364
      %1374 = vmatprep.subr.bf16.mxu0 0
      %1375 = vmatpush1.bf16.msra.mxu0 0
      %1376 = vmatprep.subr.bf16.mxu0 0
      %1377 = vmatpush1.bf16.msra.mxu0 0
      %1378 = vmatprep.subr.bf16.mxu0 0
      %1379 = vmatpush1.bf16.msra.mxu0 0
      %1380 = vmatprep.subr.bf16.mxu0 0
      %1381 = vmatpush1.bf16.msra.mxu0 0
      %1382 = vmatprep.subr.bf16.mxu0 0
      %1383 = vmatpush1.bf16.msra.mxu0 0
      %1384 = vmatprep.subr.bf16.mxu0 0
      %1385 = vmatpush1.bf16.msra.mxu0 0
      %1386 = vmatprep.subr.bf16.mxu0 0
      %1387 = vmatpush1.bf16.msra.mxu0 0
      %1388 = vmatprep.subr.bf16.mxu0 0
      %1389 = vmatpush1.bf16.msra.mxu0 0
      %1390 = vmatprep.subr.bf16.mxu0 0
      %1391 = vmatpush1.bf16.msra.mxu0 0
      %1392 = vmatprep.subr.bf16.mxu0 0
      %1393 = vmatpush1.bf16.msra.mxu0 0
      %1394 = vmatprep.subr.bf16.mxu0 0
      %1395 = vmatpush1.bf16.msra.mxu0 0
      %1396 = vmatprep.subr.bf16.mxu0 0
      %1397 = vmatpush1.bf16.msra.mxu0 0
      %1398 = vmatprep.subr.bf16.mxu0 0
      %1399 = vmatpush1.bf16.msra.mxu0 0
      %1400 = vmatprep.subr.bf16.mxu0 0
      %1401 = vmatpush1.bf16.msra.mxu0 0
      %1402 = vmatprep.mubr.bf16.mxu0 0
      %1403 = vmatmul.mubr.bf16.gmra.mrb[0].mxu0 %v1368
      %v1404 = vpop.f32.mrb[0].mxu0
      %v1405 = vadd.f32 %v1350, %v1404
      %v1406 = vpop.f32.mrb[0].mxu0
      %v1407 = vpop.f32.mrb[0].mxu0
      %v1408 = vpop.f32.mrb[0].mxu0
      %1409 = vdwg.mxu0
      %v1410 = vadd.f32 %v926, %v1405
      %v1411 = vld [vmem:[%s13] sm:$0x1]
      %v1413 = vlaneseq
      %v1414 = vshrl.u32 %v1413, 7
      %v1415 = vsub.s32 0, %v1414
      %v1416 = vrot.slane %v1411, %v1415
      %v1418 = vadd.f32 %v1410, %v1416
      %v1419 = vld [vmem:[%s14] sm:$0x1]
      %v1420 = vld [vmem:[%s15] sm:$0x1]
      %v1421 = vsel %vm898, %v1418, 0.0
      %1422 = vadd.xlane.f32.xlu0 %v1421
      %v1423 = vpop.xlane.xlu0 %1422
      %v1424 = vmul.f32 %v1423, %v902
      %v1425 = vsub.f32 %v1418, %v1424
      %v1426 = vmul.f32 %v1425, %v1425
      %v1427 = vsel %vm898, %v1426, 0.0
      %1428 = vadd.xlane.f32.xlu0 %v1427
      %v1429 = vpop.xlane.xlu0 %1428
      %v1430 = vmul.f32 %v1429, %v902
      %v1431 = vadd.f32 %v1430, 1e-05
      %v1432 = vrsqrt.pop %v1431
      %v1433 = vmul.f32 %v1425, %v1432
      %v1435 = vlaneseq
      %v1436 = vshrl.u32 %v1435, 7
      %v1437 = vsub.s32 0, %v1436
      %v1438 = vrot.slane %v1419, %v1437
      %v1440 = vmul.f32 %v1433, %v1438
      %v1442 = vlaneseq
      %v1443 = vshrl.u32 %v1442, 7
      %v1444 = vsub.s32 0, %v1443
      %v1445 = vrot.slane %v1420, %v1444
      %v1447 = vadd.f32 %v1440, %v1445
      %v1448 = vld [vmem:[%s16] sm:$0xff]
      %v1449 = vld [vmem:[%s16 + $0x8] sm:$0xff]
      %v1450 = vld [vmem:[%s16 + $0x10] sm:$0xff]
      %v1451 = vld [vmem:[%s16 + $0x18] sm:$0xff]
      %v1452 = vld [vmem:[%s16 + $0x20] sm:$0xff]
      %v1453 = vld [vmem:[%s16 + $0x28] sm:$0xff]
      %v1454 = vld [vmem:[%s16 + $0x30] sm:$0xff]
      %v1455 = vld [vmem:[%s16 + $0x38] sm:$0xff]
      %v1456 = vpack.c.bf16 %v1447, %v1447
      %v1457 = vld [vmem:[%s17] sm:$0x3]
      %v1459 = vlaneseq
      %v1460 = vshrl.u32 %v1459, 7
      %v1461 = vsub.s32 0, %v1460
      %v1462 = vrot.slane %v1457, %v1461
      %v1463 = vlaneseq
      %v1464 = vshrl.u32 %v1463, 7
      %v1465 = vsub.s32 1, %v1464
      %v1466 = vrot.slane %v1457, %v1465
      %v1477 = vunpack.c.l.b16 %v1448
      %v1478 = vunpack.c.h.b16 %v1448
      %v1479 = vunpack.c.l.b16 %v1449
      %v1480 = vunpack.c.h.b16 %v1449
      %v1481 = vunpack.c.l.b16 %v1450
      %v1482 = vunpack.c.h.b16 %v1450
      %v1483 = vunpack.c.l.b16 %v1451
      %v1484 = vunpack.c.h.b16 %v1451
      %v1485 = vunpack.c.l.b16 %v1452
      %v1486 = vunpack.c.h.b16 %v1452
      %v1487 = vunpack.c.l.b16 %v1453
      %v1488 = vunpack.c.h.b16 %v1453
      %v1489 = vunpack.c.l.b16 %v1454
      %v1490 = vunpack.c.h.b16 %v1454
      %v1491 = vunpack.c.l.b16 %v1455
      %v1492 = vunpack.c.h.b16 %v1455
      %v1493 = vpack.c.b16 %v1479, %v1477
      %v1494 = vpack.c.b16 %v1480, %v1478
      %v1495 = vpack.c.b16 %v1483, %v1481
      %v1496 = vpack.c.b16 %v1484, %v1482
      %v1497 = vpack.c.b16 %v1487, %v1485
      %v1498 = vpack.c.b16 %v1488, %v1486
      %v1499 = vpack.c.b16 %v1491, %v1489
      %v1500 = vpack.c.b16 %v1492, %v1490
      %v1510 = vsel %vm840, %v1456, 0
      %1512 = vmatprep.subr.bf16.mxu0 %v1494
      %1513 = vmatpush1.bf16.msra.mxu0 %v1493
      %1514 = vmatprep.subr.bf16.mxu0 %v1496
      %1515 = vmatpush1.bf16.msra.mxu0 %v1495
      %1516 = vmatprep.subr.bf16.mxu0 %v1498
      %1517 = vmatpush1.bf16.msra.mxu0 %v1497
      %1518 = vmatprep.subr.bf16.mxu0 %v1500
      %1519 = vmatpush1.bf16.msra.mxu0 %v1499
      %1520 = vmatprep.subr.bf16.mxu0 0
      %1521 = vmatpush1.bf16.msra.mxu0 0
      %1522 = vmatprep.subr.bf16.mxu0 0
      %1523 = vmatpush1.bf16.msra.mxu0 0
      %1524 = vmatprep.subr.bf16.mxu0 0
      %1525 = vmatpush1.bf16.msra.mxu0 0
      %1526 = vmatprep.subr.bf16.mxu0 0
      %1527 = vmatpush1.bf16.msra.mxu0 0
      %1528 = vmatprep.subr.bf16.mxu0 0
      %1529 = vmatpush1.bf16.msra.mxu0 0
      %1530 = vmatprep.subr.bf16.mxu0 0
      %1531 = vmatpush1.bf16.msra.mxu0 0
      %1532 = vmatprep.subr.bf16.mxu0 0
      %1533 = vmatpush1.bf16.msra.mxu0 0
      %1534 = vmatprep.subr.bf16.mxu0 0
      %1535 = vmatpush1.bf16.msra.mxu0 0
      %1536 = vmatprep.subr.bf16.mxu0 0
      %1537 = vmatpush1.bf16.msra.mxu0 0
      %1538 = vmatprep.subr.bf16.mxu0 0
      %1539 = vmatpush1.bf16.msra.mxu0 0
      %1540 = vmatprep.subr.bf16.mxu0 0
      %1541 = vmatpush1.bf16.msra.mxu0 0
      %1542 = vmatprep.subr.bf16.mxu0 0
      %1543 = vmatpush1.bf16.msra.mxu0 0
      %1544 = vmatprep.mubr.bf16.mxu0 0
      %1545 = vmatmul.mubr.bf16.gmra.mrb[0].mxu0 %v1510
      %v1546 = vpop.f32.mrb[0].mxu0
      %v1547 = vadd.f32 %v1462, %v1546
      %v1548 = vpop.f32.mrb[0].mxu0
      %v1549 = vadd.f32 %v1466, %v1548
      %v1550 = vpop.f32.mrb[0].mxu0
      %v1551 = vpop.f32.mrb[0].mxu0
      %1552 = vdwg.mxu0
      %v1553 = vmul.f32 %v1547, 1.702
      %v1554 = vmul.f32 %v1549, 1.702
      %v1555 = vxor.u32 %v1553, 2147483648
      %v1556 = vxor.u32 %v1554, 2147483648
      %v1557 = vmul.f32 %v1555, 1.442695
      %v1558 = vpow.pop %v1557
      %v1559 = vmul.f32 %v1556, 1.442695
      %v1560 = vpow.pop %v1559
      %v1561 = vadd.f32 %v1558, 1.0
      %v1562 = vadd.f32 %v1560, 1.0
      %v1563 = vrcp.pop %v1561
      %v1564 = vmul.f32 1.0, %v1563
      %v1565 = vrcp.pop %v1562
      %v1566 = vmul.f32 1.0, %v1565
      %v1567 = vmul.f32 %v1547, %v1564
      %v1568 = vmul.f32 %v1549, %v1566
      %v1569 = vld [vmem:[%s18] sm:$0xf]
      %v1570 = vld [vmem:[%s18 + $0x4] sm:$0xf]
      %v1571 = vld [vmem:[%s18 + $0x8] sm:$0xf]
      %v1572 = vld [vmem:[%s18 + $0xc] sm:$0xf]
      %v1573 = vld [vmem:[%s18 + $0x10] sm:$0xf]
      %v1574 = vld [vmem:[%s18 + $0x14] sm:$0xf]
      %v1575 = vld [vmem:[%s18 + $0x18] sm:$0xf]
      %v1576 = vld [vmem:[%s18 + $0x1c] sm:$0xf]
      %v1577 = vld [vmem:[%s18 + $0x20] sm:$0xf]
      %v1578 = vld [vmem:[%s18 + $0x24] sm:$0xf]
      %v1579 = vld [vmem:[%s18 + $0x28] sm:$0xf]
      %v1580 = vld [vmem:[%s18 + $0x2c] sm:$0xf]
      %v1581 = vld [vmem:[%s18 + $0x30] sm:$0xf]
      %v1582 = vld [vmem:[%s18 + $0x34] sm:$0xf]
      %v1583 = vld [vmem:[%s18 + $0x38] sm:$0xf]
      %v1584 = vld [vmem:[%s18 + $0x3c] sm:$0xf]
      %v1585 = vld [vmem:[%s18 + $0x40] sm:$0xf]
      %v1586 = vld [vmem:[%s18 + $0x44] sm:$0xf]
      %v1587 = vld [vmem:[%s18 + $0x48] sm:$0xf]
      %v1588 = vld [vmem:[%s18 + $0x4c] sm:$0xf]
      %v1589 = vld [vmem:[%s18 + $0x50] sm:$0xf]
      %v1590 = vld [vmem:[%s18 + $0x54] sm:$0xf]
      %v1591 = vld [vmem:[%s18 + $0x58] sm:$0xf]
      %v1592 = vld [vmem:[%s18 + $0x5c] sm:$0xf]
      %v1593 = vld [vmem:[%s18 + $0x60] sm:$0xf]
      %v1594 = vld [vmem:[%s18 + $0x64] sm:$0xf]
      %v1595 = vld [vmem:[%s18 + $0x68] sm:$0xf]
      %v1596 = vld [vmem:[%s18 + $0x6c] sm:$0xf]
      %v1597 = vld [vmem:[%s18 + $0x70] sm:$0xf]
      %v1598 = vld [vmem:[%s18 + $0x74] sm:$0xf]
      %v1599 = vld [vmem:[%s18 + $0x78] sm:$0xf]
      %v1600 = vld [vmem:[%s18 + $0x7c] sm:$0xf]
      %v1601 = vpack.c.bf16 %v1567, %v1567
      %v1602 = vpack.c.bf16 %v1568, %v1568
      %v1603 = vld [vmem:[%s19] sm:$0x1]
      %v1605 = vlaneseq
      %v1606 = vshrl.u32 %v1605, 7
      %v1607 = vsub.s32 0, %v1606
      %v1608 = vrot.slane %v1603, %v1607
      %v1642 = vunpack.c.l.b16 %v1569
      %v1643 = vunpack.c.l.b16 %v1570
      %v1644 = vunpack.c.l.b16 %v1571
      %v1645 = vunpack.c.l.b16 %v1572
      %v1646 = vunpack.c.l.b16 %v1573
      %v1647 = vunpack.c.l.b16 %v1574
      %v1648 = vunpack.c.l.b16 %v1575
      %v1649 = vunpack.c.l.b16 %v1576
      %v1650 = vunpack.c.l.b16 %v1577
      %v1651 = vunpack.c.l.b16 %v1578
      %v1652 = vunpack.c.l.b16 %v1579
      %v1653 = vunpack.c.l.b16 %v1580
      %v1654 = vunpack.c.l.b16 %v1581
      %v1655 = vunpack.c.l.b16 %v1582
      %v1656 = vunpack.c.l.b16 %v1583
      %v1657 = vunpack.c.l.b16 %v1584
      %v1658 = vunpack.c.l.b16 %v1585
      %v1659 = vunpack.c.l.b16 %v1586
      %v1660 = vunpack.c.l.b16 %v1587
      %v1661 = vunpack.c.l.b16 %v1588
      %v1662 = vunpack.c.l.b16 %v1589
      %v1663 = vunpack.c.l.b16 %v1590
      %v1664 = vunpack.c.l.b16 %v1591
      %v1665 = vunpack.c.l.b16 %v1592
      %v1666 = vunpack.c.l.b16 %v1593
      %v1667 = vunpack.c.l.b16 %v1594
      %v1668 = vunpack.c.l.b16 %v1595
      %v1669 = vunpack.c.l.b16 %v1596
      %v1670 = vunpack.c.l.b16 %v1597
      %v1671 = vunpack.c.l.b16 %v1598
      %v1672 = vunpack.c.l.b16 %v1599
      %v1673 = vunpack.c.l.b16 %v1600
      %v1674 = vpack.c.b16 %v1643, %v1642
      %v1675 = vpack.c.b16 %v1645, %v1644
      %v1676 = vpack.c.b16 %v1647, %v1646
      %v1677 = vpack.c.b16 %v1649, %v1648
      %v1678 = vpack.c.b16 %v1651, %v1650
      %v1679 = vpack.c.b16 %v1653, %v1652
      %v1680 = vpack.c.b16 %v1655, %v1654
      %v1681 = vpack.c.b16 %v1657, %v1656
      %v1682 = vpack.c.b16 %v1659, %v1658
      %v1683 = vpack.c.b16 %v1661, %v1660
      %v1684 = vpack.c.b16 %v1663, %v1662
      %v1685 = vpack.c.b16 %v1665, %v1664
      %v1686 = vpack.c.b16 %v1667, %v1666
      %v1687 = vpack.c.b16 %v1669, %v1668
      %v1688 = vpack.c.b16 %v1671, %v1670
      %v1689 = vpack.c.b16 %v1673, %v1672
      %1706 = vmatprep.subr.bf16.mxu0 0
      %1707 = vmatpush1.bf16.msra.mxu0 %v1674
      %1708 = vmatprep.subr.bf16.mxu0 0
      %1709 = vmatpush1.bf16.msra.mxu0 %v1675
      %1710 = vmatprep.subr.bf16.mxu0 0
      %1711 = vmatpush1.bf16.msra.mxu0 %v1676
      %1712 = vmatprep.subr.bf16.mxu0 0
      %1713 = vmatpush1.bf16.msra.mxu0 %v1677
      %1714 = vmatprep.subr.bf16.mxu0 0
      %1715 = vmatpush1.bf16.msra.mxu0 %v1678
      %1716 = vmatprep.subr.bf16.mxu0 0
      %1717 = vmatpush1.bf16.msra.mxu0 %v1679
      %1718 = vmatprep.subr.bf16.mxu0 0
      %1719 = vmatpush1.bf16.msra.mxu0 %v1680
      %1720 = vmatprep.subr.bf16.mxu0 0
      %1721 = vmatpush1.bf16.msra.mxu0 %v1681
      %1722 = vmatprep.subr.bf16.mxu0 0
      %1723 = vmatpush1.bf16.msra.mxu0 %v1682
      %1724 = vmatprep.subr.bf16.mxu0 0
      %1725 = vmatpush1.bf16.msra.mxu0 %v1683
      %1726 = vmatprep.subr.bf16.mxu0 0
      %1727 = vmatpush1.bf16.msra.mxu0 %v1684
      %1728 = vmatprep.subr.bf16.mxu0 0
      %1729 = vmatpush1.bf16.msra.mxu0 %v1685
      %1730 = vmatprep.subr.bf16.mxu0 0
      %1731 = vmatpush1.bf16.msra.mxu0 %v1686
      %1732 = vmatprep.subr.bf16.mxu0 0
      %1733 = vmatpush1.bf16.msra.mxu0 %v1687
      %1734 = vmatprep.subr.bf16.mxu0 0
      %1735 = vmatpush1.bf16.msra.mxu0 %v1688
      %1736 = vmatprep.subr.bf16.mxu0 0
      %1737 = vmatpush1.bf16.msra.mxu0 %v1689
      %1738 = vmatprep.mubr.bf16.mxu0 %v1602
      %1739 = vmatmul.mubr.bf16.gmra.mrb[0].mxu0 %v1601
      %v1740 = vpop.f32.mrb[0].mxu0
      %v1741 = vadd.f32 %v1608, %v1740
      %v1742 = vpop.f32.mrb[0].mxu0
      %v1743 = vpop.f32.mrb[0].mxu0
      %v1744 = vpop.f32.mrb[0].mxu0
      %1745 = vdwg.mxu0
      %v1746 = vadd.f32 %v1418, %v1741
      %s1747 = scalar_lea.vmem %s8, 1
      %v1748 = vld [vmem:[%s1747] sm:$0x1]
      %s1749 = scalar_lea.vmem %s9, 1
      %v1750 = vld [vmem:[%s1749] sm:$0x1]
      %v1751 = vsel %vm898, %v1746, 0.0
      %1752 = vadd.xlane.f32.xlu0 %v1751
      %v1753 = vpop.xlane.xlu0 %1752
      %v1754 = vmul.f32 %v1753, %v902
      %v1755 = vsub.f32 %v1746, %v1754
      %v1756 = vmul.f32 %v1755, %v1755
      %v1757 = vsel %vm898, %v1756, 0.0
      %1758 = vadd.xlane.f32.xlu0 %v1757
      %v1759 = vpop.xlane.xlu0 %1758
      %v1760 = vmul.f32 %v1759, %v902
      %v1761 = vadd.f32 %v1760, 1e-05
      %v1762 = vrsqrt.pop %v1761
      %v1763 = vmul.f32 %v1755, %v1762
      %v1765 = vlaneseq
      %v1766 = vshrl.u32 %v1765, 7
      %v1767 = vsub.s32 0, %v1766
      %v1768 = vrot.slane %v1748, %v1767
      %v1770 = vmul.f32 %v1763, %v1768
      %v1772 = vlaneseq
      %v1773 = vshrl.u32 %v1772, 7
      %v1774 = vsub.s32 0, %v1773
      %v1775 = vrot.slane %v1750, %v1774
      %v1777 = vadd.f32 %v1770, %v1775
      %s1778 = scalar_lea.vmem %s10, 64
      %v1779 = vld [vmem:[%s1778] sm:$0xff]
      %v1780 = vld [vmem:[%s1778 + $0x8] sm:$0xff]
      %v1781 = vld [vmem:[%s1778 + $0x10] sm:$0xff]
      %v1782 = vld [vmem:[%s1778 + $0x18] sm:$0xff]
      %v1783 = vld [vmem:[%s1778 + $0x20] sm:$0xff]
      %v1784 = vld [vmem:[%s1778 + $0x28] sm:$0xff]
      %v1785 = vld [vmem:[%s1778 + $0x30] sm:$0xff]
      %v1786 = vld [vmem:[%s1778 + $0x38] sm:$0xff]
      %v1787 = vpack.c.bf16 %v1777, %v1777
      %s1788 = scalar_lea.vmem %s11, 2
      %v1789 = vld [vmem:[%s1788] sm:$0x3]
      %v1791 = vlaneseq
      %v1792 = vshrl.u32 %v1791, 7
      %v1793 = vsub.s32 0, %v1792
      %v1794 = vrot.slane %v1789, %v1793
      %v1795 = vlaneseq
      %v1796 = vshrl.u32 %v1795, 7
      %v1797 = vsub.s32 1, %v1796
      %v1798 = vrot.slane %v1789, %v1797
      %v1809 = vunpack.c.l.b16 %v1779
      %v1810 = vunpack.c.h.b16 %v1779
      %v1811 = vunpack.c.l.b16 %v1780
      %v1812 = vunpack.c.h.b16 %v1780
      %v1813 = vunpack.c.l.b16 %v1781
      %v1814 = vunpack.c.h.b16 %v1781
      %v1815 = vunpack.c.l.b16 %v1782
      %v1816 = vunpack.c.h.b16 %v1782
      %v1817 = vunpack.c.l.b16 %v1783
      %v1818 = vunpack.c.h.b16 %v1783
      %v1819 = vunpack.c.l.b16 %v1784
      %v1820 = vunpack.c.h.b16 %v1784
      %v1821 = vunpack.c.l.b16 %v1785
      %v1822 = vunpack.c.h.b16 %v1785
      %v1823 = vunpack.c.l.b16 %v1786
      %v1824 = vunpack.c.h.b16 %v1786
      %v1825 = vpack.c.b16 %v1811, %v1809
      %v1826 = vpack.c.b16 %v1812, %v1810
      %v1827 = vpack.c.b16 %v1815, %v1813
      %v1828 = vpack.c.b16 %v1816, %v1814
      %v1829 = vpack.c.b16 %v1819, %v1817
      %v1830 = vpack.c.b16 %v1820, %v1818
      %v1831 = vpack.c.b16 %v1823, %v1821
      %v1832 = vpack.c.b16 %v1824, %v1822
      %v1842 = vsel %vm840, %v1787, 0
      %1844 = vmatprep.subr.bf16.mxu0 %v1826
      %1845 = vmatpush1.bf16.msra.mxu0 %v1825
      %1846 = vmatprep.subr.bf16.mxu0 %v1828
      %1847 = vmatpush1.bf16.msra.mxu0 %v1827
      %1848 = vmatprep.subr.bf16.mxu0 %v1830
      %1849 = vmatpush1.bf16.msra.mxu0 %v1829
      %1850 = vmatprep.subr.bf16.mxu0 %v1832
      %1851 = vmatpush1.bf16.msra.mxu0 %v1831
      %1852 = vmatprep.subr.bf16.mxu0 0
      %1853 = vmatpush1.bf16.msra.mxu0 0
      %1854 = vmatprep.subr.bf16.mxu0 0
      %1855 = vmatpush1.bf16.msra.mxu0 0
      %1856 = vmatprep.subr.bf16.mxu0 0
      %1857 = vmatpush1.bf16.msra.mxu0 0
      %1858 = vmatprep.subr.bf16.mxu0 0
      %1859 = vmatpush1.bf16.msra.mxu0 0
      %1860 = vmatprep.subr.bf16.mxu0 0
      %1861 = vmatpush1.bf16.msra.mxu0 0
      %1862 = vmatprep.subr.bf16.mxu0 0
      %1863 = vmatpush1.bf16.msra.mxu0 0
      %1864 = vmatprep.subr.bf16.mxu0 0
      %1865 = vmatpush1.bf16.msra.mxu0 0
      %1866 = vmatprep.subr.bf16.mxu0 0
      %1867 = vmatpush1.bf16.msra.mxu0 0
      %1868 = vmatprep.subr.bf16.mxu0 0
      %1869 = vmatpush1.bf16.msra.mxu0 0
      %1870 = vmatprep.subr.bf16.mxu0 0
      %1871 = vmatpush1.bf16.msra.mxu0 0
      %1872 = vmatprep.subr.bf16.mxu0 0
      %1873 = vmatpush1.bf16.msra.mxu0 0
      %1874 = vmatprep.subr.bf16.mxu0 0
      %1875 = vmatpush1.bf16.msra.mxu0 0
      %1876 = vmatprep.mubr.bf16.mxu0 0
      %1877 = vmatmul.mubr.bf16.gmra.mrb[0].mxu0 %v1842
      %v1878 = vpop.f32.mrb[0].mxu0
      %v1879 = vadd.f32 %v1794, %v1878
      %v1880 = vpop.f32.mrb[0].mxu0
      %v1881 = vadd.f32 %v1798, %v1880
      %v1882 = vpop.f32.mrb[0].mxu0
      %v1883 = vpop.f32.mrb[0].mxu0
      %1884 = vdwg.mxu0
      %s1885 = scalar_lea.vmem %s12, 32
      %v1886 = vld [vmem:[%s1885] sm:$0xf]
      %v1887 = vld [vmem:[%s1885 + $0x4] sm:$0xf]
      %v1888 = vld [vmem:[%s1885 + $0x8] sm:$0xf]
      %v1889 = vld [vmem:[%s1885 + $0xc] sm:$0xf]
      %v1890 = vld [vmem:[%s1885 + $0x10] sm:$0xf]
      %v1891 = vld [vmem:[%s1885 + $0x14] sm:$0xf]
      %v1892 = vld [vmem:[%s1885 + $0x18] sm:$0xf]
      %v1893 = vld [vmem:[%s1885 + $0x1c] sm:$0xf]
      %v1894 = vpack.c.bf16 %v1879, %v1879
      %1896 = vrot.lane.b32.xlu0 %v1894, 64
      %v1897 = vpop.permute.xlu0 %1896
      %v1899 = vsel %vm1073, %v1894, 0
      %v1902 = vsel %vm1073, %v1897, 0
      %1904 = vmatprep.subr.bf16.mxu0 0
      %1905 = vmatpush1.bf16.xpose.msra.mxu0 %v1902
      %1906 = vmatprep.subr.bf16.mxu0 0
      %1907 = vmatpush1.bf16.xpose.msra.mxu0 0
      %1908 = vmatprep.subr.bf16.mxu0 0
      %1909 = vmatpush1.bf16.xpose.msra.mxu0 0
      %1910 = vmatprep.subr.bf16.mxu0 0
      %1911 = vmatpush1.bf16.xpose.msra.mxu0 0
      %1912 = vmatprep.subr.bf16.mxu0 0
      %1913 = vmatpush1.bf16.xpose.msra.mxu0 0
      %1914 = vmatprep.subr.bf16.mxu0 0
      %1915 = vmatpush1.bf16.xpose.msra.mxu0 0
      %1916 = vmatprep.subr.bf16.mxu0 0
      %1917 = vmatpush1.bf16.xpose.msra.mxu0 0
      %1918 = vmatprep.subr.bf16.mxu0 0
      %1919 = vmatpush1.bf16.xpose.msra.mxu0 0
      %1920 = vmatprep.subr.bf16.mxu0 0
      %1921 = vmatpush1.bf16.xpose.msra.mxu0 0
      %1922 = vmatprep.subr.bf16.mxu0 0
      %1923 = vmatpush1.bf16.xpose.msra.mxu0 0
      %1924 = vmatprep.subr.bf16.mxu0 0
      %1925 = vmatpush1.bf16.xpose.msra.mxu0 0
      %1926 = vmatprep.subr.bf16.mxu0 0
      %1927 = vmatpush1.bf16.xpose.msra.mxu0 0
      %1928 = vmatprep.subr.bf16.mxu0 0
      %1929 = vmatpush1.bf16.xpose.msra.mxu0 0
      %1930 = vmatprep.subr.bf16.mxu0 0
      %1931 = vmatpush1.bf16.xpose.msra.mxu0 0
      %1932 = vmatprep.subr.bf16.mxu0 0
      %1933 = vmatpush1.bf16.xpose.msra.mxu0 0
      %1934 = vmatprep.subr.bf16.mxu0 0
      %1935 = vmatpush1.bf16.xpose.msra.mxu0 0
      %1936 = vmatprep.mubr.bf16.mxu0 0
      %1937 = vmatmul.mubr.bf16.gmra.mrb[0].mxu0 %v1899
      %v1938 = vpop.f32.mrb[0].mxu0
      %v1939 = vadd.f32 0.0, %v1938
      %v1940 = vpop.f32.mrb[0].mxu0
      %v1941 = vpop.f32.mrb[0].mxu0
      %v1942 = vpop.f32.mrb[0].mxu0
      %1943 = vdwg.mxu0
      %v1944 = vmul.f32 %v1939, 0.17677669
      %v1945 = vsel %vm1121, %v1944, -inf
      %1946 = vmax.xlane.f32.xlu0 %v1945
      %v1947 = vpop.xlane.xlu0 %1946
      %v1948 = vsub.f32 %v1944, %v1947
      %v1949 = vmul.f32 %v1948, 1.442695
      %v1950 = vpow.pop %v1949
      %v1951 = vsel %vm1121, %v1950, 0.0
      %1952 = vadd.xlane.f32.xlu0 %v1951
      %v1953 = vpop.xlane.xlu0 %1952
      %v1954 = vpack.c.bf16 %v1950, %v1950
      %v1955 = vpack.c.bf16 %v1881, %v1881
      %v1957 = vsel %vm1133, %v1954, 0
      %v1960 = vand.u32 %v1955, %v1140
      %1962 = vmatprep.subr.bf16.mxu0 0
      %1963 = vmatpush1.bf16.msra.mxu0 %v1960
      %1964 = vmatprep.subr.bf16.mxu0 0
      %1965 = vmatpush1.bf16.msra.mxu0 0
      %1966 = vmatprep.subr.bf16.mxu0 0
      %1967 = vmatpush1.bf16.msra.mxu0 0
      %1968 = vmatprep.subr.bf16.mxu0 0
      %1969 = vmatpush1.bf16.msra.mxu0 0
      %1970 = vmatprep.subr.bf16.mxu0 0
      %1971 = vmatpush1.bf16.msra.mxu0 0
      %1972 = vmatprep.subr.bf16.mxu0 0
      %1973 = vmatpush1.bf16.msra.mxu0 0
      %1974 = vmatprep.subr.bf16.mxu0 0
      %1975 = vmatpush1.bf16.msra.mxu0 0
      %1976 = vmatprep.subr.bf16.mxu0 0
      %1977 = vmatpush1.bf16.msra.mxu0 0
      %1978 = vmatprep.subr.bf16.mxu0 0
      %1979 = vmatpush1.bf16.msra.mxu0 0
      %1980 = vmatprep.subr.bf16.mxu0 0
      %1981 = vmatpush1.bf16.msra.mxu0 0
      %1982 = vmatprep.subr.bf16.mxu0 0
      %1983 = vmatpush1.bf16.msra.mxu0 0
      %1984 = vmatprep.subr.bf16.mxu0 0
      %1985 = vmatpush1.bf16.msra.mxu0 0
      %1986 = vmatprep.subr.bf16.mxu0 0
      %1987 = vmatpush1.bf16.msra.mxu0 0
      %1988 = vmatprep.subr.bf16.mxu0 0
      %1989 = vmatpush1.bf16.msra.mxu0 0
      %1990 = vmatprep.subr.bf16.mxu0 0
      %1991 = vmatpush1.bf16.msra.mxu0 0
      %1992 = vmatprep.subr.bf16.mxu0 0
      %1993 = vmatpush1.bf16.msra.mxu0 0
      %1994 = vmatprep.mubr.bf16.mxu0 0
      %1995 = vmatmul.mubr.bf16.gmra.mrb[0].mxu0 %v1957
      %v1996 = vpop.f32.mrb[0].mxu0
      %v1997 = vadd.f32 0.0, %v1996
      %v1998 = vpop.f32.mrb[0].mxu0
      %v1999 = vpop.f32.mrb[0].mxu0
      %v2000 = vpop.f32.mrb[0].mxu0
      %2001 = vdwg.mxu0
      %v2002 = vrcp.pop %v1953
      %v2003 = vmul.f32 %v1997, %v2002
      %v2004 = vpack.c.bf16 %v2003, %v2003
      %2005 = vrot.lane.b32.xlu0 %v1894, 96
      %v2006 = vpop.permute.xlu0 %2005
      %2007 = vrot.lane.b32.xlu0 %v1894, 32
      %v2008 = vpop.permute.xlu0 %2007
      %v2010 = vsel %vm1073, %v2006, 0
      %v2013 = vsel %vm1073, %v2008, 0
      %2015 = vmatprep.subr.bf16.mxu0 0
      %2016 = vmatpush1.bf16.xpose.msra.mxu0 %v2013
      %2017 = vmatprep.subr.bf16.mxu0 0
      %2018 = vmatpush1.bf16.xpose.msra.mxu0 0
      %2019 = vmatprep.subr.bf16.mxu0 0
      %2020 = vmatpush1.bf16.xpose.msra.mxu0 0
      %2021 = vmatprep.subr.bf16.mxu0 0
      %2022 = vmatpush1.bf16.xpose.msra.mxu0 0
      %2023 = vmatprep.subr.bf16.mxu0 0
      %2024 = vmatpush1.bf16.xpose.msra.mxu0 0
      %2025 = vmatprep.subr.bf16.mxu0 0
      %2026 = vmatpush1.bf16.xpose.msra.mxu0 0
      %2027 = vmatprep.subr.bf16.mxu0 0
      %2028 = vmatpush1.bf16.xpose.msra.mxu0 0
      %2029 = vmatprep.subr.bf16.mxu0 0
      %2030 = vmatpush1.bf16.xpose.msra.mxu0 0
      %2031 = vmatprep.subr.bf16.mxu0 0
      %2032 = vmatpush1.bf16.xpose.msra.mxu0 0
      %2033 = vmatprep.subr.bf16.mxu0 0
      %2034 = vmatpush1.bf16.xpose.msra.mxu0 0
      %2035 = vmatprep.subr.bf16.mxu0 0
      %2036 = vmatpush1.bf16.xpose.msra.mxu0 0
      %2037 = vmatprep.subr.bf16.mxu0 0
      %2038 = vmatpush1.bf16.xpose.msra.mxu0 0
      %2039 = vmatprep.subr.bf16.mxu0 0
      %2040 = vmatpush1.bf16.xpose.msra.mxu0 0
      %2041 = vmatprep.subr.bf16.mxu0 0
      %2042 = vmatpush1.bf16.xpose.msra.mxu0 0
      %2043 = vmatprep.subr.bf16.mxu0 0
      %2044 = vmatpush1.bf16.xpose.msra.mxu0 0
      %2045 = vmatprep.subr.bf16.mxu0 0
      %2046 = vmatpush1.bf16.xpose.msra.mxu0 0
      %2047 = vmatprep.mubr.bf16.mxu0 0
      %2048 = vmatmul.mubr.bf16.gmra.mrb[0].mxu0 %v2010
      %v2049 = vpop.f32.mrb[0].mxu0
      %v2050 = vadd.f32 0.0, %v2049
      %v2051 = vpop.f32.mrb[0].mxu0
      %v2052 = vpop.f32.mrb[0].mxu0
      %v2053 = vpop.f32.mrb[0].mxu0
      %2054 = vdwg.mxu0
      %v2055 = vmul.f32 %v2050, 0.17677669
      %v2056 = vsel %vm1121, %v2055, -inf
      %2057 = vmax.xlane.f32.xlu0 %v2056
      %v2058 = vpop.xlane.xlu0 %2057
      %v2059 = vsub.f32 %v2055, %v2058
      %v2060 = vmul.f32 %v2059, 1.442695
      %v2061 = vpow.pop %v2060
      %v2062 = vsel %vm1121, %v2061, 0.0
      %2063 = vadd.xlane.f32.xlu0 %v2062
      %v2064 = vpop.xlane.xlu0 %2063
      %v2065 = vpack.c.bf16 %v2061, %v2061
      %2067 = vrot.lane.b32.xlu0 %v1955, 96
      %v2068 = vpop.permute.xlu0 %2067
      %v2070 = vsel %vm1133, %v2065, 0
      %v2073 = vand.u32 %v2068, %v1140
      %2075 = vmatprep.subr.bf16.mxu0 0
      %2076 = vmatpush1.bf16.msra.mxu0 %v2073
      %2077 = vmatprep.subr.bf16.mxu0 0
      %2078 = vmatpush1.bf16.msra.mxu0 0
      %2079 = vmatprep.subr.bf16.mxu0 0
      %2080 = vmatpush1.bf16.msra.mxu0 0
      %2081 = vmatprep.subr.bf16.mxu0 0
      %2082 = vmatpush1.bf16.msra.mxu0 0
      %2083 = vmatprep.subr.bf16.mxu0 0
      %2084 = vmatpush1.bf16.msra.mxu0 0
      %2085 = vmatprep.subr.bf16.mxu0 0
      %2086 = vmatpush1.bf16.msra.mxu0 0
      %2087 = vmatprep.subr.bf16.mxu0 0
      %2088 = vmatpush1.bf16.msra.mxu0 0
      %2089 = vmatprep.subr.bf16.mxu0 0
      %2090 = vmatpush1.bf16.msra.mxu0 0
      %2091 = vmatprep.subr.bf16.mxu0 0
      %2092 = vmatpush1.bf16.msra.mxu0 0
      %2093 = vmatprep.subr.bf16.mxu0 0
      %2094 = vmatpush1.bf16.msra.mxu0 0
      %2095 = vmatprep.subr.bf16.mxu0 0
      %2096 = vmatpush1.bf16.msra.mxu0 0
      %2097 = vmatprep.subr.bf16.mxu0 0
      %2098 = vmatpush1.bf16.msra.mxu0 0
      %2099 = vmatprep.subr.bf16.mxu0 0
      %2100 = vmatpush1.bf16.msra.mxu0 0
      %2101 = vmatprep.subr.bf16.mxu0 0
      %2102 = vmatpush1.bf16.msra.mxu0 0
      %2103 = vmatprep.subr.bf16.mxu0 0
      %2104 = vmatpush1.bf16.msra.mxu0 0
      %2105 = vmatprep.subr.bf16.mxu0 0
      %2106 = vmatpush1.bf16.msra.mxu0 0
      %2107 = vmatprep.mubr.bf16.mxu0 0
      %2108 = vmatmul.mubr.bf16.gmra.mrb[0].mxu0 %v2070
      %v2109 = vpop.f32.mrb[0].mxu0
      %v2110 = vadd.f32 0.0, %v2109
      %v2111 = vpop.f32.mrb[0].mxu0
      %v2112 = vpop.f32.mrb[0].mxu0
      %v2113 = vpop.f32.mrb[0].mxu0
      %2114 = vdwg.mxu0
      %v2115 = vrcp.pop %v2064
      %v2116 = vmul.f32 %v2110, %v2115
      %v2117 = vpack.c.bf16 %v2116, %v2116
      %v2122 = vunpack.c.l.b16 %v1890
      %v2123 = vunpack.c.l.b16 %v1891
      %v2124 = vunpack.c.l.b16 %v1892
      %v2125 = vunpack.c.l.b16 %v1893
      %v2126 = vpack.c.b16 %v2123, %v2122
      %v2127 = vpack.c.b16 %v2125, %v2124
      %v2131 = vsel %vm1073, %v2117, 0
      %2133 = vmatprep.subr.bf16.mxu0 0
      %2134 = vmatpush1.bf16.msra.mxu0 %v2126
      %2135 = vmatprep.subr.bf16.mxu0 0
      %2136 = vmatpush1.bf16.msra.mxu0 %v2127
      %2137 = vmatprep.subr.bf16.mxu0 0
      %2138 = vmatpush1.bf16.msra.mxu0 0
      %2139 = vmatprep.subr.bf16.mxu0 0
      %2140 = vmatpush1.bf16.msra.mxu0 0
      %2141 = vmatprep.subr.bf16.mxu0 0
      %2142 = vmatpush1.bf16.msra.mxu0 0
      %2143 = vmatprep.subr.bf16.mxu0 0
      %2144 = vmatpush1.bf16.msra.mxu0 0
      %2145 = vmatprep.subr.bf16.mxu0 0
      %2146 = vmatpush1.bf16.msra.mxu0 0
      %2147 = vmatprep.subr.bf16.mxu0 0
      %2148 = vmatpush1.bf16.msra.mxu0 0
      %2149 = vmatprep.subr.bf16.mxu0 0
      %2150 = vmatpush1.bf16.msra.mxu0 0
      %2151 = vmatprep.subr.bf16.mxu0 0
      %2152 = vmatpush1.bf16.msra.mxu0 0
      %2153 = vmatprep.subr.bf16.mxu0 0
      %2154 = vmatpush1.bf16.msra.mxu0 0
      %2155 = vmatprep.subr.bf16.mxu0 0
      %2156 = vmatpush1.bf16.msra.mxu0 0
      %2157 = vmatprep.subr.bf16.mxu0 0
      %2158 = vmatpush1.bf16.msra.mxu0 0
      %2159 = vmatprep.subr.bf16.mxu0 0
      %2160 = vmatpush1.bf16.msra.mxu0 0
      %2161 = vmatprep.subr.bf16.mxu0 0
      %2162 = vmatpush1.bf16.msra.mxu0 0
      %2163 = vmatprep.subr.bf16.mxu0 0
      %2164 = vmatpush1.bf16.msra.mxu0 0
      %2165 = vmatprep.mubr.bf16.mxu0 0
      %2166 = vmatmul.mubr.bf16.gmra.mrb[0].mxu0 %v2131
      %v2167 = vpop.f32.mrb[0].mxu0
      %v2168 = vadd.f32 0.0, %v2167
      %v2169 = vpop.f32.mrb[0].mxu0
      %v2170 = vpop.f32.mrb[0].mxu0
      %v2171 = vpop.f32.mrb[0].mxu0
      %2172 = vdwg.mxu0
      %v2177 = vunpack.c.l.b16 %v1886
      %v2178 = vunpack.c.l.b16 %v1887
      %v2179 = vunpack.c.l.b16 %v1888
      %v2180 = vunpack.c.l.b16 %v1889
      %v2181 = vpack.c.b16 %v2178, %v2177
      %v2182 = vpack.c.b16 %v2180, %v2179
      %v2186 = vsel %vm1073, %v2004, 0
      %2188 = vmatprep.subr.bf16.mxu0 0
      %2189 = vmatpush1.bf16.msra.mxu0 %v2181
      %2190 = vmatprep.subr.bf16.mxu0 0
      %2191 = vmatpush1.bf16.msra.mxu0 %v2182
      %2192 = vmatprep.subr.bf16.mxu0 0
      %2193 = vmatpush1.bf16.msra.mxu0 0
      %2194 = vmatprep.subr.bf16.mxu0 0
      %2195 = vmatpush1.bf16.msra.mxu0 0
      %2196 = vmatprep.subr.bf16.mxu0 0
      %2197 = vmatpush1.bf16.msra.mxu0 0
      %2198 = vmatprep.subr.bf16.mxu0 0
      %2199 = vmatpush1.bf16.msra.mxu0 0
      %2200 = vmatprep.subr.bf16.mxu0 0
      %2201 = vmatpush1.bf16.msra.mxu0 0
      %2202 = vmatprep.subr.bf16.mxu0 0
      %2203 = vmatpush1.bf16.msra.mxu0 0
      %2204 = vmatprep.subr.bf16.mxu0 0
      %2205 = vmatpush1.bf16.msra.mxu0 0
      %2206 = vmatprep.subr.bf16.mxu0 0
      %2207 = vmatpush1.bf16.msra.mxu0 0
      %2208 = vmatprep.subr.bf16.mxu0 0
      %2209 = vmatpush1.bf16.msra.mxu0 0
      %2210 = vmatprep.subr.bf16.mxu0 0
      %2211 = vmatpush1.bf16.msra.mxu0 0
      %2212 = vmatprep.subr.bf16.mxu0 0
      %2213 = vmatpush1.bf16.msra.mxu0 0
      %2214 = vmatprep.subr.bf16.mxu0 0
      %2215 = vmatpush1.bf16.msra.mxu0 0
      %2216 = vmatprep.subr.bf16.mxu0 0
      %2217 = vmatpush1.bf16.msra.mxu0 0
      %2218 = vmatprep.subr.bf16.mxu0 0
      %2219 = vmatpush1.bf16.msra.mxu0 0
      %2220 = vmatprep.mubr.bf16.mxu0 0
      %2221 = vmatmul.mubr.bf16.gmra.mrb[0].mxu0 %v2186
      %v2222 = vpop.f32.mrb[0].mxu0
      %v2223 = vadd.f32 %v2168, %v2222
      %v2224 = vpop.f32.mrb[0].mxu0
      %v2225 = vpop.f32.mrb[0].mxu0
      %v2226 = vpop.f32.mrb[0].mxu0
      %2227 = vdwg.mxu0
      %v2228 = vadd.f32 %v1746, %v2223
      %s2229 = scalar_lea.vmem %s13, 1
      %v2230 = vld [vmem:[%s2229] sm:$0x1]
      %v2232 = vlaneseq
      %v2233 = vshrl.u32 %v2232, 7
      %v2234 = vsub.s32 0, %v2233
      %v2235 = vrot.slane %v2230, %v2234
      %v2237 = vadd.f32 %v2228, %v2235
      %s2238 = scalar_lea.vmem %s14, 1
      %v2239 = vld [vmem:[%s2238] sm:$0x1]
      %s2240 = scalar_lea.vmem %s15, 1
      %v2241 = vld [vmem:[%s2240] sm:$0x1]
      %v2242 = vsel %vm898, %v2237, 0.0
      %2243 = vadd.xlane.f32.xlu0 %v2242
      %v2244 = vpop.xlane.xlu0 %2243
      %v2245 = vmul.f32 %v2244, %v902
      %v2246 = vsub.f32 %v2237, %v2245
      %v2247 = vmul.f32 %v2246, %v2246
      %v2248 = vsel %vm898, %v2247, 0.0
      %2249 = vadd.xlane.f32.xlu0 %v2248
      %v2250 = vpop.xlane.xlu0 %2249
      %v2251 = vmul.f32 %v2250, %v902
      %v2252 = vadd.f32 %v2251, 1e-05
      %v2253 = vrsqrt.pop %v2252
      %v2254 = vmul.f32 %v2246, %v2253
      %v2256 = vlaneseq
      %v2257 = vshrl.u32 %v2256, 7
      %v2258 = vsub.s32 0, %v2257
      %v2259 = vrot.slane %v2239, %v2258
      %v2261 = vmul.f32 %v2254, %v2259
      %v2263 = vlaneseq
      %v2264 = vshrl.u32 %v2263, 7
      %v2265 = vsub.s32 0, %v2264
      %v2266 = vrot.slane %v2241, %v2265
      %v2268 = vadd.f32 %v2261, %v2266
      %s2269 = scalar_lea.vmem %s16, 64
      %v2270 = vld [vmem:[%s2269] sm:$0xff]
      %v2271 = vld [vmem:[%s2269 + $0x8] sm:$0xff]
      %v2272 = vld [vmem:[%s2269 + $0x10] sm:$0xff]
      %v2273 = vld [vmem:[%s2269 + $0x18] sm:$0xff]
      %v2274 = vld [vmem:[%s2269 + $0x20] sm:$0xff]
      %v2275 = vld [vmem:[%s2269 + $0x28] sm:$0xff]
      %v2276 = vld [vmem:[%s2269 + $0x30] sm:$0xff]
      %v2277 = vld [vmem:[%s2269 + $0x38] sm:$0xff]
      %v2278 = vpack.c.bf16 %v2268, %v2268
      %s2279 = scalar_lea.vmem %s17, 2
      %v2280 = vld [vmem:[%s2279] sm:$0x3]
      %v2282 = vlaneseq
      %v2283 = vshrl.u32 %v2282, 7
      %v2284 = vsub.s32 0, %v2283
      %v2285 = vrot.slane %v2280, %v2284
      %v2286 = vlaneseq
      %v2287 = vshrl.u32 %v2286, 7
      %v2288 = vsub.s32 1, %v2287
      %v2289 = vrot.slane %v2280, %v2288
      %v2300 = vunpack.c.l.b16 %v2270
      %v2301 = vunpack.c.h.b16 %v2270
      %v2302 = vunpack.c.l.b16 %v2271
      %v2303 = vunpack.c.h.b16 %v2271
      %v2304 = vunpack.c.l.b16 %v2272
      %v2305 = vunpack.c.h.b16 %v2272
      %v2306 = vunpack.c.l.b16 %v2273
      %v2307 = vunpack.c.h.b16 %v2273
      %v2308 = vunpack.c.l.b16 %v2274
      %v2309 = vunpack.c.h.b16 %v2274
      %v2310 = vunpack.c.l.b16 %v2275
      %v2311 = vunpack.c.h.b16 %v2275
      %v2312 = vunpack.c.l.b16 %v2276
      %v2313 = vunpack.c.h.b16 %v2276
      %v2314 = vunpack.c.l.b16 %v2277
      %v2315 = vunpack.c.h.b16 %v2277
      %v2316 = vpack.c.b16 %v2302, %v2300
      %v2317 = vpack.c.b16 %v2303, %v2301
      %v2318 = vpack.c.b16 %v2306, %v2304
      %v2319 = vpack.c.b16 %v2307, %v2305
      %v2320 = vpack.c.b16 %v2310, %v2308
      %v2321 = vpack.c.b16 %v2311, %v2309
      %v2322 = vpack.c.b16 %v2314, %v2312
      %v2323 = vpack.c.b16 %v2315, %v2313
      %v2333 = vsel %vm840, %v2278, 0
      %2335 = vmatprep.subr.bf16.mxu0 %v2317
      %2336 = vmatpush1.bf16.msra.mxu0 %v2316
      %2337 = vmatprep.subr.bf16.mxu0 %v2319
      %2338 = vmatpush1.bf16.msra.mxu0 %v2318
      %2339 = vmatprep.subr.bf16.mxu0 %v2321
      %2340 = vmatpush1.bf16.msra.mxu0 %v2320
      %2341 = vmatprep.subr.bf16.mxu0 %v2323
      %2342 = vmatpush1.bf16.msra.mxu0 %v2322
      %2343 = vmatprep.subr.bf16.mxu0 0
      %2344 = vmatpush1.bf16.msra.mxu0 0
      %2345 = vmatprep.subr.bf16.mxu0 0
      %2346 = vmatpush1.bf16.msra.mxu0 0
      %2347 = vmatprep.subr.bf16.mxu0 0
      %2348 = vmatpush1.bf16.msra.mxu0 0
      %2349 = vmatprep.subr.bf16.mxu0 0
      %2350 = vmatpush1.bf16.msra.mxu0 0
      %2351 = vmatprep.subr.bf16.mxu0 0
      %2352 = vmatpush1.bf16.msra.mxu0 0
      %2353 = vmatprep.subr.bf16.mxu0 0
      %2354 = vmatpush1.bf16.msra.mxu0 0
      %2355 = vmatprep.subr.bf16.mxu0 0
      %2356 = vmatpush1.bf16.msra.mxu0 0
      %2357 = vmatprep.subr.bf16.mxu0 0
      %2358 = vmatpush1.bf16.msra.mxu0 0
      %2359 = vmatprep.subr.bf16.mxu0 0
      %2360 = vmatpush1.bf16.msra.mxu0 0
      %2361 = vmatprep.subr.bf16.mxu0 0
      %2362 = vmatpush1.bf16.msra.mxu0 0
      %2363 = vmatprep.subr.bf16.mxu0 0
      %2364 = vmatpush1.bf16.msra.mxu0 0
      %2365 = vmatprep.subr.bf16.mxu0 0
      %2366 = vmatpush1.bf16.msra.mxu0 0
      %2367 = vmatprep.mubr.bf16.mxu0 0
      %2368 = vmatmul.mubr.bf16.gmra.mrb[0].mxu0 %v2333
      %v2369 = vpop.f32.mrb[0].mxu0
      %v2370 = vadd.f32 %v2285, %v2369
      %v2371 = vpop.f32.mrb[0].mxu0
      %v2372 = vadd.f32 %v2289, %v2371
      %v2373 = vpop.f32.mrb[0].mxu0
      %v2374 = vpop.f32.mrb[0].mxu0
      %2375 = vdwg.mxu0
      %v2376 = vmul.f32 %v2370, 1.702
      %v2377 = vmul.f32 %v2372, 1.702
      %v2378 = vxor.u32 %v2376, 2147483648
      %v2379 = vxor.u32 %v2377, 2147483648
      %v2380 = vmul.f32 %v2378, 1.442695
      %v2381 = vpow.pop %v2380
      %v2382 = vmul.f32 %v2379, 1.442695
      %v2383 = vpow.pop %v2382
      %v2384 = vadd.f32 %v2381, 1.0
      %v2385 = vadd.f32 %v2383, 1.0
      %v2386 = vrcp.pop %v2384
      %v2387 = vmul.f32 1.0, %v2386
      %v2388 = vrcp.pop %v2385
      %v2389 = vmul.f32 1.0, %v2388
      %v2390 = vmul.f32 %v2370, %v2387
      %v2391 = vmul.f32 %v2372, %v2389
      %s2392 = scalar_lea.vmem %s18, 128
      %v2393 = vld [vmem:[%s2392] sm:$0xf]
      %v2394 = vld [vmem:[%s2392 + $0x4] sm:$0xf]
      %v2395 = vld [vmem:[%s2392 + $0x8] sm:$0xf]
      %v2396 = vld [vmem:[%s2392 + $0xc] sm:$0xf]
      %v2397 = vld [vmem:[%s2392 + $0x10] sm:$0xf]
      %v2398 = vld [vmem:[%s2392 + $0x14] sm:$0xf]
      %v2399 = vld [vmem:[%s2392 + $0x18] sm:$0xf]
      %v2400 = vld [vmem:[%s2392 + $0x1c] sm:$0xf]
      %v2401 = vld [vmem:[%s2392 + $0x20] sm:$0xf]
      %v2402 = vld [vmem:[%s2392 + $0x24] sm:$0xf]
      %v2403 = vld [vmem:[%s2392 + $0x28] sm:$0xf]
      %v2404 = vld [vmem:[%s2392 + $0x2c] sm:$0xf]
      %v2405 = vld [vmem:[%s2392 + $0x30] sm:$0xf]
      %v2406 = vld [vmem:[%s2392 + $0x34] sm:$0xf]
      %v2407 = vld [vmem:[%s2392 + $0x38] sm:$0xf]
      %v2408 = vld [vmem:[%s2392 + $0x3c] sm:$0xf]
      %v2409 = vld [vmem:[%s2392 + $0x40] sm:$0xf]
      %v2410 = vld [vmem:[%s2392 + $0x44] sm:$0xf]
      %v2411 = vld [vmem:[%s2392 + $0x48] sm:$0xf]
      %v2412 = vld [vmem:[%s2392 + $0x4c] sm:$0xf]
      %v2413 = vld [vmem:[%s2392 + $0x50] sm:$0xf]
      %v2414 = vld [vmem:[%s2392 + $0x54] sm:$0xf]
      %v2415 = vld [vmem:[%s2392 + $0x58] sm:$0xf]
      %v2416 = vld [vmem:[%s2392 + $0x5c] sm:$0xf]
      %v2417 = vld [vmem:[%s2392 + $0x60] sm:$0xf]
      %v2418 = vld [vmem:[%s2392 + $0x64] sm:$0xf]
      %v2419 = vld [vmem:[%s2392 + $0x68] sm:$0xf]
      %v2420 = vld [vmem:[%s2392 + $0x6c] sm:$0xf]
      %v2421 = vld [vmem:[%s2392 + $0x70] sm:$0xf]
      %v2422 = vld [vmem:[%s2392 + $0x74] sm:$0xf]
      %v2423 = vld [vmem:[%s2392 + $0x78] sm:$0xf]
      %v2424 = vld [vmem:[%s2392 + $0x7c] sm:$0xf]
      %v2425 = vpack.c.bf16 %v2390, %v2390
      %v2426 = vpack.c.bf16 %v2391, %v2391
      %s2427 = scalar_lea.vmem %s19, 1
      %v2428 = vld [vmem:[%s2427] sm:$0x1]
      %v2430 = vlaneseq
      %v2431 = vshrl.u32 %v2430, 7
      %v2432 = vsub.s32 0, %v2431
      %v2433 = vrot.slane %v2428, %v2432
      %v2467 = vunpack.c.l.b16 %v2393
      %v2468 = vunpack.c.l.b16 %v2394
      %v2469 = vunpack.c.l.b16 %v2395
      %v2470 = vunpack.c.l.b16 %v2396
      %v2471 = vunpack.c.l.b16 %v2397
      %v2472 = vunpack.c.l.b16 %v2398
      %v2473 = vunpack.c.l.b16 %v2399
      %v2474 = vunpack.c.l.b16 %v2400
      %v2475 = vunpack.c.l.b16 %v2401
      %v2476 = vunpack.c.l.b16 %v2402
      %v2477 = vunpack.c.l.b16 %v2403
      %v2478 = vunpack.c.l.b16 %v2404
      %v2479 = vunpack.c.l.b16 %v2405
      %v2480 = vunpack.c.l.b16 %v2406
      %v2481 = vunpack.c.l.b16 %v2407
      %v2482 = vunpack.c.l.b16 %v2408
      %v2483 = vunpack.c.l.b16 %v2409
      %v2484 = vunpack.c.l.b16 %v2410
      %v2485 = vunpack.c.l.b16 %v2411
      %v2486 = vunpack.c.l.b16 %v2412
      %v2487 = vunpack.c.l.b16 %v2413
      %v2488 = vunpack.c.l.b16 %v2414
      %v2489 = vunpack.c.l.b16 %v2415
      %v2490 = vunpack.c.l.b16 %v2416
      %v2491 = vunpack.c.l.b16 %v2417
      %v2492 = vunpack.c.l.b16 %v2418
      %v2493 = vunpack.c.l.b16 %v2419
      %v2494 = vunpack.c.l.b16 %v2420
      %v2495 = vunpack.c.l.b16 %v2421
      %v2496 = vunpack.c.l.b16 %v2422
      %v2497 = vunpack.c.l.b16 %v2423
      %v2498 = vunpack.c.l.b16 %v2424
      %v2499 = vpack.c.b16 %v2468, %v2467
      %v2500 = vpack.c.b16 %v2470, %v2469
      %v2501 = vpack.c.b16 %v2472, %v2471
      %v2502 = vpack.c.b16 %v2474, %v2473
      %v2503 = vpack.c.b16 %v2476, %v2475
      %v2504 = vpack.c.b16 %v2478, %v2477
      %v2505 = vpack.c.b16 %v2480, %v2479
      %v2506 = vpack.c.b16 %v2482, %v2481
      %v2507 = vpack.c.b16 %v2484, %v2483
      %v2508 = vpack.c.b16 %v2486, %v2485
      %v2509 = vpack.c.b16 %v2488, %v2487
      %v2510 = vpack.c.b16 %v2490, %v2489
      %v2511 = vpack.c.b16 %v2492, %v2491
      %v2512 = vpack.c.b16 %v2494, %v2493
      %v2513 = vpack.c.b16 %v2496, %v2495
      %v2514 = vpack.c.b16 %v2498, %v2497
      %2531 = vmatprep.subr.bf16.mxu0 0
      %2532 = vmatpush1.bf16.msra.mxu0 %v2499
      %2533 = vmatprep.subr.bf16.mxu0 0
      %2534 = vmatpush1.bf16.msra.mxu0 %v2500
      %2535 = vmatprep.subr.bf16.mxu0 0
      %2536 = vmatpush1.bf16.msra.mxu0 %v2501
      %2537 = vmatprep.subr.bf16.mxu0 0
      %2538 = vmatpush1.bf16.msra.mxu0 %v2502
      %2539 = vmatprep.subr.bf16.mxu0 0
      %2540 = vmatpush1.bf16.msra.mxu0 %v2503
      %2541 = vmatprep.subr.bf16.mxu0 0
      %2542 = vmatpush1.bf16.msra.mxu0 %v2504
      %2543 = vmatprep.subr.bf16.mxu0 0
      %2544 = vmatpush1.bf16.msra.mxu0 %v2505
      %2545 = vmatprep.subr.bf16.mxu0 0
      %2546 = vmatpush1.bf16.msra.mxu0 %v2506
      %2547 = vmatprep.subr.bf16.mxu0 0
      %2548 = vmatpush1.bf16.msra.mxu0 %v2507
      %2549 = vmatprep.subr.bf16.mxu0 0
      %2550 = vmatpush1.bf16.msra.mxu0 %v2508
      %2551 = vmatprep.subr.bf16.mxu0 0
      %2552 = vmatpush1.bf16.msra.mxu0 %v2509
      %2553 = vmatprep.subr.bf16.mxu0 0
      %2554 = vmatpush1.bf16.msra.mxu0 %v2510
      %2555 = vmatprep.subr.bf16.mxu0 0
      %2556 = vmatpush1.bf16.msra.mxu0 %v2511
      %2557 = vmatprep.subr.bf16.mxu0 0
      %2558 = vmatpush1.bf16.msra.mxu0 %v2512
      %2559 = vmatprep.subr.bf16.mxu0 0
      %2560 = vmatpush1.bf16.msra.mxu0 %v2513
      %2561 = vmatprep.subr.bf16.mxu0 0
      %2562 = vmatpush1.bf16.msra.mxu0 %v2514
      %2563 = vmatprep.mubr.bf16.mxu0 %v2426
      %2564 = vmatmul.mubr.bf16.gmra.mrb[0].mxu0 %v2425
      %v2565 = vpop.f32.mrb[0].mxu0
      %v2566 = vadd.f32 %v2433, %v2565
      %v2567 = vpop.f32.mrb[0].mxu0
      %v2568 = vpop.f32.mrb[0].mxu0
      %v2569 = vpop.f32.mrb[0].mxu0
      %2570 = vdwg.mxu0
      %v2571 = vadd.f32 %v2237, %v2566
      %v2572 = vld [vmem:[%s20] sm:$0x1]
      %v2573 = vld [vmem:[%s21] sm:$0x1]
      %v2574 = vsel %vm887, %v2571, 0.0
      %2575 = vadd.xlane.f32.xlu0 %v2574
      %v2576 = vpop.xlane.xlu0 %2575
      %v2577 = vmul.f32 %v2576, %v902
      %v2578 = vsub.f32 %v2571, %v2577
      %v2579 = vmul.f32 %v2578, %v2578
      %v2580 = vsel %vm887, %v2579, 0.0
      %2581 = vadd.xlane.f32.xlu0 %v2580
      %v2582 = vpop.xlane.xlu0 %2581
      %v2583 = vmul.f32 %v2582, %v902
      %v2584 = vadd.f32 %v2583, 1e-05
      %v2585 = vrsqrt.pop %v2584
      %v2586 = vmul.f32 %v2578, %v2585
      %v2587 = vmul.f32 %v2586, %v2572
      %v2588 = vadd.f32 %v2587, %v2573
      %v2589 = vld [vmem:[%s22] sm:$0xf]
      %v2590 = vld [vmem:[%s22 + $0x4] sm:$0xf]
      %v2591 = vld [vmem:[%s22 + $0x8] sm:$0xf]
      %v2592 = vld [vmem:[%s22 + $0xc] sm:$0xf]
      %v2593 = vld [vmem:[%s22 + $0x10] sm:$0xf]
      %v2594 = vld [vmem:[%s22 + $0x14] sm:$0xf]
      %v2595 = vld [vmem:[%s22 + $0x18] sm:$0xf]
      %v2596 = vld [vmem:[%s22 + $0x1c] sm:$0xf]
      %v2597 = vpack.c.bf16 %v2588, %v2588
      %v2606 = vunpack.c.l.b16 %v2589
      %v2607 = vunpack.c.l.b16 %v2590
      %v2608 = vunpack.c.l.b16 %v2591
      %v2609 = vunpack.c.l.b16 %v2592
      %v2610 = vunpack.c.l.b16 %v2593
      %v2611 = vunpack.c.l.b16 %v2594
      %v2612 = vunpack.c.l.b16 %v2595
      %v2613 = vunpack.c.l.b16 %v2596
      %v2614 = vpack.c.b16 %v2607, %v2606
      %v2615 = vpack.c.b16 %v2609, %v2608
      %v2616 = vpack.c.b16 %v2611, %v2610
      %v2617 = vpack.c.b16 %v2613, %v2612
      %v2623 = vsel %vm840, %v2597, 0
      %2625 = vmatprep.subr.bf16.mxu0 0
      %2626 = vmatpush1.bf16.msra.mxu0 %v2614
      %2627 = vmatprep.subr.bf16.mxu0 0
      %2628 = vmatpush1.bf16.msra.mxu0 %v2615
      %2629 = vmatprep.subr.bf16.mxu0 0
      %2630 = vmatpush1.bf16.msra.mxu0 %v2616
      %2631 = vmatprep.subr.bf16.mxu0 0
      %2632 = vmatpush1.bf16.msra.mxu0 %v2617
      %2633 = vmatprep.subr.bf16.mxu0 0
      %2634 = vmatpush1.bf16.msra.mxu0 0
      %2635 = vmatprep.subr.bf16.mxu0 0
      %2636 = vmatpush1.bf16.msra.mxu0 0
      %2637 = vmatprep.subr.bf16.mxu0 0
      %2638 = vmatpush1.bf16.msra.mxu0 0
      %2639 = vmatprep.subr.bf16.mxu0 0
      %2640 = vmatpush1.bf16.msra.mxu0 0
      %2641 = vmatprep.subr.bf16.mxu0 0
      %2642 = vmatpush1.bf16.msra.mxu0 0
      %2643 = vmatprep.subr.bf16.mxu0 0
      %2644 = vmatpush1.bf16.msra.mxu0 0
      %2645 = vmatprep.subr.bf16.mxu0 0
      %2646 = vmatpush1.bf16.msra.mxu0 0
      %2647 = vmatprep.subr.bf16.mxu0 0
      %2648 = vmatpush1.bf16.msra.mxu0 0
      %2649 = vmatprep.subr.bf16.mxu0 0
      %2650 = vmatpush1.bf16.msra.mxu0 0
      %2651 = vmatprep.subr.bf16.mxu0 0
      %2652 = vmatpush1.bf16.msra.mxu0 0
      %2653 = vmatprep.subr.bf16.mxu0 0
      %2654 = vmatpush1.bf16.msra.mxu0 0
      %2655 = vmatprep.subr.bf16.mxu0 0
      %2656 = vmatpush1.bf16.msra.mxu0 0
      %2657 = vmatprep.mubr.bf16.mxu0 0
      %2658 = vmatmul.mubr.bf16.gmra.mrb[0].mxu0 %v2623
      %v2659 = vpop.f32.mrb[0].mxu0
      %v2660 = vadd.f32 0.0, %v2659
      %v2661 = vpop.f32.mrb[0].mxu0
      %v2662 = vpop.f32.mrb[0].mxu0
      %v2663 = vpop.f32.mrb[0].mxu0
      %2664 = vdwg.mxu0
      %v2665 = vlaneseq
      %v2666 = vshrl.u32 %v2665, 7
      %v2667 = vsub.s32 0, %v2666
      %v2668 = vrot.slane %v2660, %v2667
      %2669 = vst [vmem:[%s708] sm:$0xff] %v2668
      %p2670 = scmp.lt.s32.totalorder %s34, 1
      %s2671 = scalar_select %p2670, %s34, 1
      %s2672 = smul.addr %s2671, 8
      %s2673 = scalar_lea.vmem %s23, %s2672
      // Predicated region
      $region113: #{clip_image_encode.1} parent=111 // pred_check
        %p2674 = pneg %p540
      $region114: #{clip_image_encode.1} parent=111 // pred_check_branch
        %2676 = sbr.rel (%p2674) target = $region116
      $region115: #{clip_image_encode.1} parent=111 // pred_region
        _
      $region116: #{clip_image_encode.1} parent=111 // pred_fallthru
        _
    $region112: #{clip_image_encode.1} parent=5 // pred_fallthru
      _
    %p2677 = scmp.le.s32.totalorder 2, %s29
    // Predicated region
    $region117: #{clip_image_encode.1} parent=5 // pred_check
      %p2678 = pneg %p2677
    $region118: #{clip_image_encode.1} parent=5 // pred_check_branch
      %2680 = sbr.rel (%p2678) target = $region120
    $region119: #{clip_image_encode.1} parent=5 // pred_region
      %s2681 = ssub.s32 %s29, 2
      // Predicated region
      $region121: #{clip_image_encode.1} parent=119 // pred_check
        %p2682 = pneg %p546
      $region122: #{clip_image_encode.1} parent=119 // pred_check_branch
        %2684 = sbr.rel (%p2682) target = $region124
      $region123: #{clip_image_encode.1} parent=119 // pred_region
        %p2685 = scmp.lt.s32.totalorder %s35, 1
        %s2686 = scalar_select %p2685, %s35, 1
        %s2687 = smul.addr %s2686, 8
        %s2688 = scalar_lea.vmem %s23, %s2687
      $region124: #{clip_image_encode.1} parent=119 // pred_fallthru
        _
    $region120: #{clip_image_encode.1} parent=5 // pred_fallthru
      _
  $region6: #{clip_image_encode.1} parent=0 // loop_footer
    %s33 = sadd.s32 1, %s29
  $region7: #{clip_image_encode.1} parent=0 // loop_footer_branch
    %28 = sbr.rel target = $region3
  $region8: #{clip_image_encode.1} parent=0 // loop_exit
    _

</llo_original>
